<compile_context>
chip_gen: v7x
topology: tpu7x:2x2x1
jax: 0.10.0
libtpu: 0.0.40
codegen_flags: <defaults>
</compile_context>

<pallas_src>
import functools

import jax
import jax.numpy as jnp
from jax.experimental import pallas as pl
from jax.experimental.pallas import tpu as pltpu

BN_EPS = 1e-5
VMEM_LIMIT_BYTES = 48 * 1024 * 1024   # < 64 MiB physical VMEM on v7x
MAX_TILE_ROWS = 4096                  # target M-tile size (review: 2048-4096)

# If the fused-im2col kernel fails to lower on some generation/shape, fall
# back to the (known-good) wrapper-side im2col path for the rest of the net.
_FUSED_IM2COL_OK = [True]


# ----------------------------------------------------------------------------
# Kernel bodies
# ----------------------------------------------------------------------------
def _conv3x3_s1_stats_kernel(x_ref, w_ref, y_ref, sum_ref, sumsq_ref, *, ho, wo):
    """Fused in-VMEM im2col + conv matmul + per-tile BN partial stats.

    x_ref   : (nb, ho+2, wo+2, cin) bf16 zero-padded activation block
    w_ref   : (9*cin, cout)         bf16 resident conv weights (HWIO-flattened)
    y_ref   : (nb*ho*wo, cout)      bf16 raw conv output (pre-BN)
    sum_ref / sumsq_ref : (1, 1, cout) f32 per-grid-step partial sums
    """
    nb, _, _, cin = x_ref.shape
    # Upcast once: f32 keeps the (8,128) sublane tiling, making the 4D->2D
    # collapse below legal down to wo == 8.
    x = x_ref[...].astype(jnp.float32)
    taps = []
    for kh in range(3):
        xh = x[:, kh:kh + ho]                       # leading-dim slice (free)
        for kw in range(3):
            t = xh[:, :, kw:kw + wo, :]             # (nb, ho, wo, cin)
            t = t.reshape(nb * ho, wo, cin)         # merge leading dims (free)
            t = t.reshape(nb * ho * wo, cin)        # collapse rows into sublanes
            taps.append(t.astype(jnp.bfloat16))
    cols = jnp.concatenate(taps, axis=1)            # (nb*ho*wo, 9*cin) bf16
    y = jnp.dot(cols, w_ref[...], preferred_element_type=jnp.float32)
    sum_ref[...] = jnp.sum(y, axis=0, keepdims=True)[None]
    sumsq_ref[...] = jnp.sum(y * y, axis=0, keepdims=True)[None]
    y_ref[...] = y.astype(y_ref.dtype)


def _convcols_stats_kernel(x_ref, w_ref, y_ref, sum_ref, sumsq_ref):
    """Conv matmul on a pre-built im2col tile + per-tile BN partial stats."""
    y = jnp.dot(x_ref[...], w_ref[...], preferred_element_type=jnp.float32)
    sum_ref[...] = jnp.sum(y, axis=0, keepdims=True)[None]
    sumsq_ref[...] = jnp.sum(y * y, axis=0, keepdims=True)[None]
    y_ref[...] = y.astype(y_ref.dtype)


def _bn_relu_kernel(y_ref, scale_ref, shift_ref, o_ref):
    yn = y_ref[...].astype(jnp.float32) * scale_ref[...] + shift_ref[...]
    o_ref[...] = jnp.maximum(yn, 0.0).astype(o_ref.dtype)


def _bn_add_relu_kernel(y_ref, scale_ref, shift_ref, res_ref, o_ref):
    yn = y_ref[...].astype(jnp.float32) * scale_ref[...] + shift_ref[...]
    yn = yn + res_ref[...].astype(jnp.float32)
    o_ref[...] = jnp.maximum(yn, 0.0).astype(o_ref.dtype)


# ----------------------------------------------------------------------------
# Cached pallas_call builders (one compile per distinct layer config)
# ----------------------------------------------------------------------------
def _largest_divisor(n, cap, multiple=1):
    """Largest divisor of n that is <= cap and a multiple of `multiple`."""
    cap = max(1, min(n, cap))
    for d in range(cap, 0, -1):
        if n % d == 0 and d % multiple == 0:
            return d
    return n


@functools.lru_cache(maxsize=None)
def _fused_conv_call(N, H, W, Cin, Cout, nb):
    G = N // nb
    rows = nb * H * W
    kernel = functools.partial(_conv3x3_s1_stats_kernel, ho=H, wo=W)
    call = pl.pallas_call(
        kernel,
        out_shape=(jax.ShapeDtypeStruct((N * H * W, Cout), jnp.bfloat16),
                   jax.ShapeDtypeStruct((G, 1, Cout), jnp.float32),
                   jax.ShapeDtypeStruct((G, 1, Cout), jnp.float32)),
        grid_spec=pltpu.PrefetchScalarGridSpec(
            num_scalar_prefetch=0,
            grid=(G,),
            in_specs=[
                # padded NHWC image-group block, DMA'd exactly once
                pl.BlockSpec((nb, H + 2, W + 2, Cin), lambda g: (g, 0, 0, 0)),
                # weights resident across the grid
                pl.BlockSpec((9 * Cin, Cout), lambda g: (0, 0)),
            ],
            out_specs=(
                pl.BlockSpec((rows, Cout), lambda g: (g, 0)),
                pl.BlockSpec((1, 1, Cout), lambda g: (g, 0, 0)),
                pl.BlockSpec((1, 1, Cout), lambda g: (g, 0, 0)),
            )),
        compiler_params=pltpu.CompilerParams(
            dimension_semantics=("parallel",),
            vmem_limit_bytes=VMEM_LIMIT_BYTES),
    )
    return jax.jit(call)


@functools.lru_cache(maxsize=None)
def _cols_conv_call(M, K, Cout, tm):
    mt = M // tm
    call = pl.pallas_call(
        _convcols_stats_kernel,
        out_shape=(jax.ShapeDtypeStruct((M, Cout), jnp.bfloat16),
                   jax.ShapeDtypeStruct((mt, 1, Cout), jnp.float32),
                   jax.ShapeDtypeStruct((mt, 1, Cout), jnp.float32)),
        grid_spec=pltpu.PrefetchScalarGridSpec(
            num_scalar_prefetch=0,
            grid=(mt,),
            in_specs=[pl.BlockSpec((tm, K), lambda m: (m, 0)),
                      pl.BlockSpec((K, Cout), lambda m: (0, 0))],
            out_specs=(pl.BlockSpec((tm, Cout), lambda m: (m, 0)),
                       pl.BlockSpec((1, 1, Cout), lambda m: (m, 0, 0)),
                       pl.BlockSpec((1, 1, Cout), lambda m: (m, 0, 0)))),
        compiler_params=pltpu.CompilerParams(
            dimension_semantics=("parallel",),
            vmem_limit_bytes=VMEM_LIMIT_BYTES),
    )
    return jax.jit(call)


@functools.lru_cache(maxsize=None)
def _bn_relu_call(M, Cout, tm, has_res):
    mt = pl.cdiv(M, tm)   # non-dividing tails are masked by Pallas
    in_specs = [pl.BlockSpec((tm, Cout), lambda m: (m, 0)),
                pl.BlockSpec((1, Cout), lambda m: (0, 0)),
                pl.BlockSpec((1, Cout), lambda m: (0, 0))]
    kernel = _bn_relu_kernel
    if has_res:
        in_specs.append(pl.BlockSpec((tm, Cout), lambda m: (m, 0)))
        kernel = _bn_add_relu_kernel
    call = pl.pallas_call(
        kernel,
        out_shape=jax.ShapeDtypeStruct((M, Cout), jnp.bfloat16),
        grid_spec=pltpu.PrefetchScalarGridSpec(
            num_scalar_prefetch=0,
            grid=(mt,),
            in_specs=in_specs,
            out_specs=pl.BlockSpec((tm, Cout), lambda m: (m, 0))),
        compiler_params=pltpu.CompilerParams(
            dimension_semantics=("parallel",),
            vmem_limit_bytes=VMEM_LIMIT_BYTES),
    )
    return jax.jit(call)


# ----------------------------------------------------------------------------
# Layer wrappers
# ----------------------------------------------------------------------------
def _conv3x3_s1_fused(x, w_mat):
    """Stride-1, pad-1 3x3 conv. x: (N,H,W,Cin) bf16; w_mat: (9*Cin,Cout) bf16."""
    N, H, W, Cin = x.shape
    Cout = w_mat.shape[1]
    # Images per grid step: must divide N so BN stats never see padding rows.
    nb = _largest_divisor(N, max(1, MAX_TILE_ROWS // (H * W)))
    xp = jnp.pad(x, ((0, 0), (1, 1), (1, 1), (0, 0)))
    y, psum, psumsq = _fused_conv_call(N, H, W, Cin, Cout, nb)(xp, w_mat)
    return y, jnp.sum(psum, axis=(0, 1)), jnp.sum(psumsq, axis=(0, 1))


def _im2col_3x3(x, stride):
    """Wrapper-side im2col (used only for the stem and the two stride-2 convs)."""
    N, H, W, C = x.shape
    Ho = (H + 2 - 3) // stride + 1
    Wo = (W + 2 - 3) // stride + 1
    xp = jnp.pad(x, ((0, 0), (1, 1), (1, 1), (0, 0)))
    taps = []
    for kh in range(3):
        for kw in range(3):
            taps.append(xp[:, kh:kh + (Ho - 1) * stride + 1:stride,
                              kw:kw + (Wo - 1) * stride + 1:stride, :])
    cols = jnp.stack(taps, axis=3)                  # (N, Ho, Wo, 9, C)
    return cols.reshape(N * Ho * Wo, 9 * C), (Ho, Wo)


def _conv3x3_cols(x, w_mat, stride):
    cols, (Ho, Wo) = _im2col_3x3(x, stride)
    M, K = cols.shape
    Cout = w_mat.shape[1]
    tm = _largest_divisor(M, MAX_TILE_ROWS, multiple=8)
    y, psum, psumsq = _cols_conv_call(M, K, Cout, tm)(cols, w_mat)
    return y, jnp.sum(psum, axis=(0, 1)), jnp.sum(psumsq, axis=(0, 1)), (Ho, Wo)


def _bn_scale_shift(psum, psumsq, gamma, beta, count):
    # Train-mode (biased) batch statistics, folded into per-channel scale/shift.
    mean = psum / count
    var = jnp.maximum(psumsq / count - mean * mean, 0.0)
    inv = jax.lax.rsqrt(var + BN_EPS)
    scale = gamma * inv
    shift = beta - mean * scale
    return (scale.reshape(1, -1).astype(jnp.float32),
            shift.reshape(1, -1).astype(jnp.float32))


def _bn_relu_apply(y, scale, shift, residual=None):
    M, Cout = y.shape
    tm = min(M, MAX_TILE_ROWS)
    call = _bn_relu_call(M, Cout, tm, residual is not None)
    if residual is None:
        return call(y, scale, shift)
    return call(y, scale, shift, residual)


def conv_bn_relu_layer(x, w_hwio, gamma, beta, stride, residual=None):
    """3x3 conv (pad 1) + BN(train) + optional residual + ReLU, all in bf16."""
    N, H, W, Cin = x.shape
    Cout = w_hwio.shape[-1]
    w_mat = w_hwio.reshape(9 * Cin, Cout).astype(jnp.bfloat16)

    use_fused = (_FUSED_IM2COL_OK[0] and stride == 1
                 and Cin % 8 == 0 and H % 8 == 0 and W % 8 == 0)
    y = None
    if use_fused:
        try:
            y, psum, psumsq = _conv3x3_s1_fused(x, w_mat)
            Ho, Wo = H, W
        except Exception:  # Mosaic lowering capability fallback
            _FUSED_IM2COL_OK[0] = False
            y = None
    if y is None:
        y, psum, psumsq, (Ho, Wo) = _conv3x3_cols(x, w_mat, stride)

    scale, shift = _bn_scale_shift(psum, psumsq, gamma, beta, float(N * Ho * Wo))
    res = None
    if residual is not None:
        res = residual.reshape(N * Ho * Wo, Cout).astype(jnp.bfloat16)
    out = _bn_relu_apply(y, scale, shift, res)
    return out.reshape(N, Ho, Wo, Cout)


def basic_block(x, bp):
    stride = bp["stride"]
    planes = bp["w2"].shape[-1]
    out = conv_bn_relu_layer(x, bp["w1"], bp["g1"], bp["b1"], stride)
    # LambdaLayer shortcut (option 'A'): ::2 spatial subsample + zero channel pad.
    if stride != 1 or x.shape[-1] != planes:
        sc = x[:, ::2, ::2, :]
        pad = planes // 4
        # TODO(synk): add the unpadded (planes//2)-wide residual to the middle
        # channel slice inside the BN/ReLU kernel instead of padding zeros here.
        sc = jnp.pad(sc, ((0, 0), (0, 0), (0, 0), (pad, pad)))
    else:
        sc = x
    # conv2 -> bn2 -> (+shortcut) -> relu (shortcut fused into kernel 2)
    return conv_bn_relu_layer(out, bp["w2"], bp["g2"], bp["b2"], 1, residual=sc)


# ----------------------------------------------------------------------------
# Parameters & full network
# ----------------------------------------------------------------------------
def make_params(key, num_classes=10):
    keys = iter(jax.random.split(key, 64))

    def conv_w(cin, cout):
        # kaiming_normal_ (fan_in, gain=sqrt(2)) on a 3x3 conv
        std = (2.0 / (cin * 9)) ** 0.5
        return jax.random.normal(next(keys), (3, 3, cin, cout), jnp.float32) * std

    params = {
        "stem_w": conv_w(3, 16),
        "stem_g": jnp.ones((16,), jnp.float32),
        "stem_b": jnp.zeros((16,), jnp.float32),
        "blocks": [],
    }
    in_planes = 16
    for planes, num_blocks, stride in [(16, 5, 1), (32, 5, 2), (64, 5, 2)]:
        for s in [stride] + [1] * (num_blocks - 1):
            params["blocks"].append({
                "w1": conv_w(in_planes, planes),
                "g1": jnp.ones((planes,), jnp.float32),
                "b1": jnp.zeros((planes,), jnp.float32),
                "w2": conv_w(planes, planes),
                "g2": jnp.ones((planes,), jnp.float32),
                "b2": jnp.zeros((planes,), jnp.float32),
                "stride": s,
            })
            in_planes = planes
    params["fc_w"] = jax.random.normal(next(keys), (64, num_classes),
                                       jnp.float32) * (2.0 / 64) ** 0.5
    bound = 1.0 / (64 ** 0.5)
    params["fc_b"] = jax.random.uniform(next(keys), (num_classes,),
                                        jnp.float32, -bound, bound)
    return params


def teacher_resnet32_forward(x_nchw, params):
    # NCHW -> NHWC, bf16 activations end-to-end
    x = jnp.transpose(x_nchw, (0, 2, 3, 1)).astype(jnp.bfloat16)
    out = conv_bn_relu_layer(x, params["stem_w"], params["stem_g"],
                             params["stem_b"], stride=1)
    for bp in params["blocks"]:
        out = basic_block(out, bp)
    # Head (global average pool + fc) is tiny -> plain JAX.
    pooled = jnp.mean(out.astype(jnp.float32), axis=(1, 2))        # (N, 64)
    logits = pooled @ params["fc_w"] + params["fc_b"]
    return logits


if __name__ == "__main__":
    key = jax.random.PRNGKey(0)
    pkey, xkey = jax.random.split(key)
    params = make_params(pkey, num_classes=10)
    # CIFAR-shaped input: batch=2, 3 channels, 32x32 spatial (NCHW)
    x = jax.random.normal(xkey, (2, 3, 32, 32), jnp.float32)
    logits = teacher_resnet32_forward(x, params)
    logits = jax.block_until_ready(logits)
    assert logits.shape == (2, 10), logits.shape
    assert bool(jnp.all(jnp.isfinite(logits)))
    print("KERNEL_OK")
</pallas_src>

<mosaic_0001>
module attributes {stable_mosaic.version = 11 : i64} {
  func.func @_convcols_stats_kernel(%arg0: i32, %arg1: memref<2048x27xbf16, #tpu.memory_space<vmem>>, %arg2: memref<27x16xbf16, #tpu.memory_space<vmem>>, %arg3: memref<2048x16xbf16, #tpu.memory_space<vmem>>, %arg4: memref<1x1x16xf32, #tpu.memory_space<vmem>>, %arg5: memref<1x1x16xf32, #tpu.memory_space<vmem>>) attributes {dimension_semantics = [#tpu.dimension_semantics<parallel>], iteration_bounds = array<i64: 1>, scalar_prefetch = 0 : i64, scratch_operands = 0 : i64, tpu.core_type = #tpu.core_type<tc>, window_params = [{transform_indices = @transform_0, window_bounds = array<i64: 2048, 27>}, {pipeline_mode = #tpu.pipeline_mode<synchronous>, transform_indices = @transform_1, window_bounds = array<i64: 27, 16>}, {transform_indices = @transform_2, window_bounds = array<i64: 2048, 16>}, {transform_indices = @transform_3, window_bounds = array<i64: 1, 1, 16>}, {transform_indices = @transform_4, window_bounds = array<i64: 1, 1, 16>}]} {
    %c0 = arith.constant 0 : index
    %c0_0 = arith.constant 0 : index
    %0 = vector.load %arg1[%c0, %c0_0] : memref<2048x27xbf16, #tpu.memory_space<vmem>>, vector<2048x27xbf16>
    %c0_1 = arith.constant 0 : index
    %c0_2 = arith.constant 0 : index
    %1 = vector.load %arg2[%c0_1, %c0_2] : memref<27x16xbf16, #tpu.memory_space<vmem>>, vector<27x16xbf16>
    %cst = arith.constant dense<0.000000e+00> : vector<2048x16xf32>
    %2 = tpu.matmul %0, %1, %cst {dimension_numbers = #tpu.dot_dimension_numbers<[1], [0], [0], [1], [0, 0, 1, 1], [], []>} : vector<2048x27xbf16>, vector<27x16xbf16>, vector<2048x16xf32> -> vector<2048x16xf32>
    %cst_3 = arith.constant dense<0.000000e+00> : vector<16xf32>
    %3 = vector.multi_reduction <add>, %2, %cst_3 [0] : vector<2048x16xf32> to vector<16xf32>
    %4 = vector.shape_cast %3 : vector<16xf32> to vector<1x16xf32>
    %5 = vector.shape_cast %4 : vector<1x16xf32> to vector<1x1x16xf32>
    %c0_4 = arith.constant 0 : index
    %c0_5 = arith.constant 0 : index
    %c0_6 = arith.constant 0 : index
    %6 = vector.load %arg4[%c0_4, %c0_5, %c0_6] : memref<1x1x16xf32, #tpu.memory_space<vmem>>, vector<1x1x16xf32>
    tpu.vector_store %arg4[%c0_4, %c0_5, %c0_6], %5 {strides = array<i32>} : memref<1x1x16xf32, #tpu.memory_space<vmem>>, vector<1x1x16xf32>,
    %7 = arith.mulf %2, %2 : vector<2048x16xf32>
    %cst_7 = arith.constant dense<0.000000e+00> : vector<16xf32>
    %8 = vector.multi_reduction <add>, %7, %cst_7 [0] : vector<2048x16xf32> to vector<16xf32>
    %9 = vector.shape_cast %8 : vector<16xf32> to vector<1x16xf32>
    %10 = vector.shape_cast %9 : vector<1x16xf32> to vector<1x1x16xf32>
    %c0_8 = arith.constant 0 : index
    %c0_9 = arith.constant 0 : index
    %c0_10 = arith.constant 0 : index
    %11 = vector.load %arg5[%c0_8, %c0_9, %c0_10] : memref<1x1x16xf32, #tpu.memory_space<vmem>>, vector<1x1x16xf32>
    tpu.vector_store %arg5[%c0_8, %c0_9, %c0_10], %10 {strides = array<i32>} : memref<1x1x16xf32, #tpu.memory_space<vmem>>, vector<1x1x16xf32>,
    %12 = arith.truncf %2 : vector<2048x16xf32> to vector<2048x16xbf16>
    %c0_11 = arith.constant 0 : index
    %c0_12 = arith.constant 0 : index
    %13 = vector.load %arg3[%c0_11, %c0_12] : memref<2048x16xbf16, #tpu.memory_space<vmem>>, vector<2048x16xbf16>
    tpu.vector_store %arg3[%c0_11, %c0_12], %12 {strides = array<i32>} : memref<2048x16xbf16, #tpu.memory_space<vmem>>, vector<2048x16xbf16>,
    return
  }
  func.func @transform_0(%arg0: i32) -> (i32, i32) {
    %c0_i32 = arith.constant 0 : i32
    %c0_i32_0 = arith.constant 0 : i32
    return %arg0, %c0_i32 : i32, i32
  }
  func.func @transform_1(%arg0: i32) -> (i32, i32) {
    %c0_i32 = arith.constant 0 : i32
    %c0_i32_0 = arith.constant 0 : i32
    %c0_i32_1 = arith.constant 0 : i32
    return %c0_i32, %c0_i32_0 : i32, i32
  }
  func.func @transform_2(%arg0: i32) -> (i32, i32) {
    %c0_i32 = arith.constant 0 : i32
    %c0_i32_0 = arith.constant 0 : i32
    return %arg0, %c0_i32 : i32, i32
  }
  func.func @transform_3(%arg0: i32) -> (i32, i32, i32) {
    %c0_i32 = arith.constant 0 : i32
    %c0_i32_0 = arith.constant 0 : i32
    %c0_i32_1 = arith.constant 0 : i32
    return %arg0, %c0_i32, %c0_i32_0 : i32, i32, i32
  }
  func.func @transform_4(%arg0: i32) -> (i32, i32, i32) {
    %c0_i32 = arith.constant 0 : i32
    %c0_i32_0 = arith.constant 0 : i32
    %c0_i32_1 = arith.constant 0 : i32
    return %arg0, %c0_i32, %c0_i32_0 : i32, i32, i32
  }
}

</mosaic_0001>

<llo_original>
// kernel: tpu_custom_call.1
$region0: #{tpu_custom_call.1}
  #allocation0 [shape = 'u32[]', space=smem, size = 0x4, offset = 0x4, fixed_abs, tag = 'smem constant byte address 0x4 - core index']
  #allocation1 [shape = 'u32[144,128]{1,0:T(1,128)}', space=vmem, size = 0x12000, scoped, tag = 'internal scratch']
  %s0 = inlined_call_operand.vmem [shape: bf16[2048,27], index: 0, kind: input, shape index: {}]
  %s1 = inlined_call_operand.vmem [shape: bf16[27,16], index: 1, kind: input, shape index: {}]
  %s2 = inlined_call_operand.vmem [shape: bf16[2048,16], index: 2, kind: output, shape index: {0}]
  %s3 = inlined_call_operand.hbm [shape: f32[1,1,16], index: 3, kind: output, shape index: {1}]
  %s4 = inlined_call_operand.hbm [shape: f32[1,1,16], index: 4, kind: output, shape index: {2}]
  %5 = xla_tuple %s2, %s3, %s4
  %s6 = sld [smem:[#allocation0]]
  $region34: #{tpu_custom_call.1} parent=0
    _
  %s8 = ssub.s32 1, %s6
  %s9 = scalar_select 0, %s8, %s6
  $region1: #{tpu_custom_call.1} parent=0
    #allocation2 [shape = 'u8[512]{0}', space=vmem, size = 0x400, scoped, tag = 'output window, operand 1, single buffered']
    #allocation3 [shape = 's32[1]{0}', space=sflag, size = 0x4, scoped, tag = 'scoped memory for tpu_custom_call.1']
    #allocation4 [shape = 'u8[512]{0}', space=vmem, size = 0x400, scoped, tag = 'output window, operand 2, single buffered']
    #allocation5 [shape = 's32[1]{0}', space=sflag, size = 0x4, scoped, tag = 'scoped memory for tpu_custom_call.1']
    %10 = vsyncpa [#allocation3], 0
    %11 = vsyncpa [#allocation5], 0
    // Predicated region
    $region2: #{tpu_custom_call.1} parent=1 // pred_check
      _
    $region3: #{tpu_custom_call.1} parent=1 // pred_check_branch
      %13 = sbr.rel (0) target = $region5
    $region4: #{tpu_custom_call.1} parent=1 // pred_region
      _
    $region5: #{tpu_custom_call.1} parent=1 // pred_fallthru
      _
    // Predicated region
    $region6: #{tpu_custom_call.1} parent=1 // pred_check
      _
    $region7: #{tpu_custom_call.1} parent=1 // pred_check_branch
      %15 = sbr.rel (0) target = $region9
    $region8: #{tpu_custom_call.1} parent=1 // pred_region
      _
    $region9: #{tpu_custom_call.1} parent=1 // pred_fallthru
      _
    %v17 = vld [vmem:[%s0] sm:$0xf]
    %v18 = vld [vmem:[%s0 + $0x4] sm:$0xf]
    %v19 = vld [vmem:[%s0 + $0x8] sm:$0xf]
    %v20 = vld [vmem:[%s0 + $0xc] sm:$0xf]
    %v21 = vld [vmem:[%s0 + $0x10] sm:$0xf]
    %v22 = vld [vmem:[%s0 + $0x14] sm:$0xf]
    %v23 = vld [vmem:[%s0 + $0x18] sm:$0xf]
    %v24 = vld [vmem:[%s0 + $0x1c] sm:$0xf]
    %v25 = vld [vmem:[%s0 + $0x20] sm:$0xf]
    %v26 = vld [vmem:[%s0 + $0x24] sm:$0xf]
    %v27 = vld [vmem:[%s0 + $0x28] sm:$0xf]
    %v28 = vld [vmem:[%s0 + $0x2c] sm:$0xf]
    %v29 = vld [vmem:[%s0 + $0x30] sm:$0xf]
    %v30 = vld [vmem:[%s0 + $0x34] sm:$0xf]
    %v31 = vld [vmem:[%s0 + $0x38] sm:$0xf]
    %v32 = vld [vmem:[%s0 + $0x3c] sm:$0xf]
    %v33 = vld [vmem:[%s0 + $0x40] sm:$0xf]
    %v34 = vld [vmem:[%s0 + $0x44] sm:$0xf]
    %v35 = vld [vmem:[%s0 + $0x48] sm:$0xf]
    %v36 = vld [vmem:[%s0 + $0x4c] sm:$0xf]
    %v37 = vld [vmem:[%s0 + $0x50] sm:$0xf]
    %v38 = vld [vmem:[%s0 + $0x54] sm:$0xf]
    %v39 = vld [vmem:[%s0 + $0x58] sm:$0xf]
    %v40 = vld [vmem:[%s0 + $0x5c] sm:$0xf]
    %v41 = vld [vmem:[%s0 + $0x60] sm:$0xf]
    %v42 = vld [vmem:[%s0 + $0x64] sm:$0xf]
    %v43 = vld [vmem:[%s0 + $0x68] sm:$0xf]
    %v44 = vld [vmem:[%s0 + $0x6c] sm:$0xf]
    %v45 = vld [vmem:[%s0 + $0x70] sm:$0xf]
    %v46 = vld [vmem:[%s0 + $0x74] sm:$0xf]
    %v47 = vld [vmem:[%s0 + $0x78] sm:$0xf]
    %v48 = vld [vmem:[%s0 + $0x7c] sm:$0xf]
    %v49 = vld [vmem:[%s0 + $0x80] sm:$0xf]
    %v50 = vld [vmem:[%s0 + $0x84] sm:$0xf]
    %v51 = vld [vmem:[%s0 + $0x88] sm:$0xf]
    %v52 = vld [vmem:[%s0 + $0x8c] sm:$0xf]
    %v53 = vld [vmem:[%s0 + $0x90] sm:$0xf]
    %v54 = vld [vmem:[%s0 + $0x94] sm:$0xf]
    %v55 = vld [vmem:[%s0 + $0x98] sm:$0xf]
    %v56 = vld [vmem:[%s0 + $0x9c] sm:$0xf]
    %v57 = vld [vmem:[%s0 + $0xa0] sm:$0xf]
    %v58 = vld [vmem:[%s0 + $0xa4] sm:$0xf]
    %v59 = vld [vmem:[%s0 + $0xa8] sm:$0xf]
    %v60 = vld [vmem:[%s0 + $0xac] sm:$0xf]
    %v61 = vld [vmem:[%s0 + $0xb0] sm:$0xf]
    %v62 = vld [vmem:[%s0 + $0xb4] sm:$0xf]
    %v63 = vld [vmem:[%s0 + $0xb8] sm:$0xf]
    %v64 = vld [vmem:[%s0 + $0xbc] sm:$0xf]
    %v65 = vld [vmem:[%s0 + $0xc0] sm:$0xf]
    %v66 = vld [vmem:[%s0 + $0xc4] sm:$0xf]
    %v67 = vld [vmem:[%s0 + $0xc8] sm:$0xf]
    %v68 = vld [vmem:[%s0 + $0xcc] sm:$0xf]
    %v69 = vld [vmem:[%s0 + $0xd0] sm:$0xf]
    %v70 = vld [vmem:[%s0 + $0xd4] sm:$0xf]
    %v71 = vld [vmem:[%s0 + $0xd8] sm:$0xf]
    %v72 = vld [vmem:[%s0 + $0xdc] sm:$0xf]
    %v73 = vld [vmem:[%s0 + $0xe0] sm:$0xf]
    %v74 = vld [vmem:[%s0 + $0xe4] sm:$0xf]
    %v75 = vld [vmem:[%s0 + $0xe8] sm:$0xf]
    %v76 = vld [vmem:[%s0 + $0xec] sm:$0xf]
    %v77 = vld [vmem:[%s0 + $0xf0] sm:$0xf]
    %v78 = vld [vmem:[%s0 + $0xf4] sm:$0xf]
    %v79 = vld [vmem:[%s0 + $0xf8] sm:$0xf]
    %v80 = vld [vmem:[%s0 + $0xfc] sm:$0xf]
    %v81 = vld [vmem:[%s0 + $0x100] sm:$0xf]
    %v82 = vld [vmem:[%s0 + $0x104] sm:$0xf]
    %v83 = vld [vmem:[%s0 + $0x108] sm:$0xf]
    %v84 = vld [vmem:[%s0 + $0x10c] sm:$0xf]
    %v85 = vld [vmem:[%s0 + $0x110] sm:$0xf]
    %v86 = vld [vmem:[%s0 + $0x114] sm:$0xf]
    %v87 = vld [vmem:[%s0 + $0x118] sm:$0xf]
    %v88 = vld [vmem:[%s0 + $0x11c] sm:$0xf]
    %v89 = vld [vmem:[%s0 + $0x120] sm:$0xf]
    %v90 = vld [vmem:[%s0 + $0x124] sm:$0xf]
    %v91 = vld [vmem:[%s0 + $0x128] sm:$0xf]
    %v92 = vld [vmem:[%s0 + $0x12c] sm:$0xf]
    %v93 = vld [vmem:[%s0 + $0x130] sm:$0xf]
    %v94 = vld [vmem:[%s0 + $0x134] sm:$0xf]
    %v95 = vld [vmem:[%s0 + $0x138] sm:$0xf]
    %v96 = vld [vmem:[%s0 + $0x13c] sm:$0xf]
    %v97 = vld [vmem:[%s0 + $0x140] sm:$0xf]
    %v98 = vld [vmem:[%s0 + $0x144] sm:$0xf]
    %v99 = vld [vmem:[%s0 + $0x148] sm:$0xf]
    %v100 = vld [vmem:[%s0 + $0x14c] sm:$0xf]
    %v101 = vld [vmem:[%s0 + $0x150] sm:$0xf]
    %v102 = vld [vmem:[%s0 + $0x154] sm:$0xf]
    %v103 = vld [vmem:[%s0 + $0x158] sm:$0xf]
    %v104 = vld [vmem:[%s0 + $0x15c] sm:$0xf]
    %v105 = vld [vmem:[%s0 + $0x160] sm:$0xf]
    %v106 = vld [vmem:[%s0 + $0x164] sm:$0xf]
    %v107 = vld [vmem:[%s0 + $0x168] sm:$0xf]
    %v108 = vld [vmem:[%s0 + $0x16c] sm:$0xf]
    %v109 = vld [vmem:[%s0 + $0x170] sm:$0xf]
    %v110 = vld [vmem:[%s0 + $0x174] sm:$0xf]
    %v111 = vld [vmem:[%s0 + $0x178] sm:$0xf]
    %v112 = vld [vmem:[%s0 + $0x17c] sm:$0xf]
    %v113 = vld [vmem:[%s0 + $0x180] sm:$0xf]
    %v114 = vld [vmem:[%s0 + $0x184] sm:$0xf]
    %v115 = vld [vmem:[%s0 + $0x188] sm:$0xf]
    %v116 = vld [vmem:[%s0 + $0x18c] sm:$0xf]
    %v117 = vld [vmem:[%s0 + $0x190] sm:$0xf]
    %v118 = vld [vmem:[%s0 + $0x194] sm:$0xf]
    %v119 = vld [vmem:[%s0 + $0x198] sm:$0xf]
    %v120 = vld [vmem:[%s0 + $0x19c] sm:$0xf]
    %v121 = vld [vmem:[%s0 + $0x1a0] sm:$0xf]
    %v122 = vld [vmem:[%s0 + $0x1a4] sm:$0xf]
    %v123 = vld [vmem:[%s0 + $0x1a8] sm:$0xf]
    %v124 = vld [vmem:[%s0 + $0x1ac] sm:$0xf]
    %v125 = vld [vmem:[%s0 + $0x1b0] sm:$0xf]
    %v126 = vld [vmem:[%s0 + $0x1b4] sm:$0xf]
    %v127 = vld [vmem:[%s0 + $0x1b8] sm:$0xf]
    %v128 = vld [vmem:[%s0 + $0x1bc] sm:$0xf]
    %v129 = vld [vmem:[%s0 + $0x1c0] sm:$0xf]
    %v130 = vld [vmem:[%s0 + $0x1c4] sm:$0xf]
    %v131 = vld [vmem:[%s0 + $0x1c8] sm:$0xf]
    %v132 = vld [vmem:[%s0 + $0x1cc] sm:$0xf]
    %v133 = vld [vmem:[%s0 + $0x1d0] sm:$0xf]
    %v134 = vld [vmem:[%s0 + $0x1d4] sm:$0xf]
    %v135 = vld [vmem:[%s0 + $0x1d8] sm:$0xf]
    %v136 = vld [vmem:[%s0 + $0x1dc] sm:$0xf]
    %v137 = vld [vmem:[%s0 + $0x1e0] sm:$0xf]
    %v138 = vld [vmem:[%s0 + $0x1e4] sm:$0xf]
    %v139 = vld [vmem:[%s0 + $0x1e8] sm:$0xf]
    %v140 = vld [vmem:[%s0 + $0x1ec] sm:$0xf]
    %v141 = vld [vmem:[%s0 + $0x1f0] sm:$0xf]
    %v142 = vld [vmem:[%s0 + $0x1f4] sm:$0xf]
    %v143 = vld [vmem:[%s0 + $0x1f8] sm:$0xf]
    %v144 = vld [vmem:[%s0 + $0x1fc] sm:$0xf]
    %v145 = vld [vmem:[%s0 + $0x200] sm:$0xf]
    %v146 = vld [vmem:[%s0 + $0x204] sm:$0xf]
    %v147 = vld [vmem:[%s0 + $0x208] sm:$0xf]
    %v148 = vld [vmem:[%s0 + $0x20c] sm:$0xf]
    %v149 = vld [vmem:[%s0 + $0x210] sm:$0xf]
    %v150 = vld [vmem:[%s0 + $0x214] sm:$0xf]
    %v151 = vld [vmem:[%s0 + $0x218] sm:$0xf]
    %v152 = vld [vmem:[%s0 + $0x21c] sm:$0xf]
    %v153 = vld [vmem:[%s0 + $0x220] sm:$0xf]
    %v154 = vld [vmem:[%s0 + $0x224] sm:$0xf]
    %v155 = vld [vmem:[%s0 + $0x228] sm:$0xf]
    %v156 = vld [vmem:[%s0 + $0x22c] sm:$0xf]
    %v157 = vld [vmem:[%s0 + $0x230] sm:$0xf]
    %v158 = vld [vmem:[%s0 + $0x234] sm:$0xf]
    %v159 = vld [vmem:[%s0 + $0x238] sm:$0xf]
    %v160 = vld [vmem:[%s0 + $0x23c] sm:$0xf]
    %v161 = vld [vmem:[%s0 + $0x240] sm:$0xf]
    %v162 = vld [vmem:[%s0 + $0x244] sm:$0xf]
    %v163 = vld [vmem:[%s0 + $0x248] sm:$0xf]
    %v164 = vld [vmem:[%s0 + $0x24c] sm:$0xf]
    %v165 = vld [vmem:[%s0 + $0x250] sm:$0xf]
    %v166 = vld [vmem:[%s0 + $0x254] sm:$0xf]
    %v167 = vld [vmem:[%s0 + $0x258] sm:$0xf]
    %v168 = vld [vmem:[%s0 + $0x25c] sm:$0xf]
    %v169 = vld [vmem:[%s0 + $0x260] sm:$0xf]
    %v170 = vld [vmem:[%s0 + $0x264] sm:$0xf]
    %v171 = vld [vmem:[%s0 + $0x268] sm:$0xf]
    %v172 = vld [vmem:[%s0 + $0x26c] sm:$0xf]
    %v173 = vld [vmem:[%s0 + $0x270] sm:$0xf]
    %v174 = vld [vmem:[%s0 + $0x274] sm:$0xf]
    %v175 = vld [vmem:[%s0 + $0x278] sm:$0xf]
    %v176 = vld [vmem:[%s0 + $0x27c] sm:$0xf]
    %v177 = vld [vmem:[%s0 + $0x280] sm:$0xf]
    %v178 = vld [vmem:[%s0 + $0x284] sm:$0xf]
    %v179 = vld [vmem:[%s0 + $0x288] sm:$0xf]
    %v180 = vld [vmem:[%s0 + $0x28c] sm:$0xf]
    %v181 = vld [vmem:[%s0 + $0x290] sm:$0xf]
    %v182 = vld [vmem:[%s0 + $0x294] sm:$0xf]
    %v183 = vld [vmem:[%s0 + $0x298] sm:$0xf]
    %v184 = vld [vmem:[%s0 + $0x29c] sm:$0xf]
    %v185 = vld [vmem:[%s0 + $0x2a0] sm:$0xf]
    %v186 = vld [vmem:[%s0 + $0x2a4] sm:$0xf]
    %v187 = vld [vmem:[%s0 + $0x2a8] sm:$0xf]
    %v188 = vld [vmem:[%s0 + $0x2ac] sm:$0xf]
    %v189 = vld [vmem:[%s0 + $0x2b0] sm:$0xf]
    %v190 = vld [vmem:[%s0 + $0x2b4] sm:$0xf]
    %v191 = vld [vmem:[%s0 + $0x2b8] sm:$0xf]
    %v192 = vld [vmem:[%s0 + $0x2bc] sm:$0xf]
    %v193 = vld [vmem:[%s0 + $0x2c0] sm:$0xf]
    %v194 = vld [vmem:[%s0 + $0x2c4] sm:$0xf]
    %v195 = vld [vmem:[%s0 + $0x2c8] sm:$0xf]
    %v196 = vld [vmem:[%s0 + $0x2cc] sm:$0xf]
    %v197 = vld [vmem:[%s0 + $0x2d0] sm:$0xf]
    %v198 = vld [vmem:[%s0 + $0x2d4] sm:$0xf]
    %v199 = vld [vmem:[%s0 + $0x2d8] sm:$0xf]
    %v200 = vld [vmem:[%s0 + $0x2dc] sm:$0xf]
    %v201 = vld [vmem:[%s0 + $0x2e0] sm:$0xf]
    %v202 = vld [vmem:[%s0 + $0x2e4] sm:$0xf]
    %v203 = vld [vmem:[%s0 + $0x2e8] sm:$0xf]
    %v204 = vld [vmem:[%s0 + $0x2ec] sm:$0xf]
    %v205 = vld [vmem:[%s0 + $0x2f0] sm:$0xf]
    %v206 = vld [vmem:[%s0 + $0x2f4] sm:$0xf]
    %v207 = vld [vmem:[%s0 + $0x2f8] sm:$0xf]
    %v208 = vld [vmem:[%s0 + $0x2fc] sm:$0xf]
    %v209 = vld [vmem:[%s0 + $0x300] sm:$0xf]
    %v210 = vld [vmem:[%s0 + $0x304] sm:$0xf]
    %v211 = vld [vmem:[%s0 + $0x308] sm:$0xf]
    %v212 = vld [vmem:[%s0 + $0x30c] sm:$0xf]
    %v213 = vld [vmem:[%s0 + $0x310] sm:$0xf]
    %v214 = vld [vmem:[%s0 + $0x314] sm:$0xf]
    %v215 = vld [vmem:[%s0 + $0x318] sm:$0xf]
    %v216 = vld [vmem:[%s0 + $0x31c] sm:$0xf]
    %v217 = vld [vmem:[%s0 + $0x320] sm:$0xf]
    %v218 = vld [vmem:[%s0 + $0x324] sm:$0xf]
    %v219 = vld [vmem:[%s0 + $0x328] sm:$0xf]
    %v220 = vld [vmem:[%s0 + $0x32c] sm:$0xf]
    %v221 = vld [vmem:[%s0 + $0x330] sm:$0xf]
    %v222 = vld [vmem:[%s0 + $0x334] sm:$0xf]
    %v223 = vld [vmem:[%s0 + $0x338] sm:$0xf]
    %v224 = vld [vmem:[%s0 + $0x33c] sm:$0xf]
    %v225 = vld [vmem:[%s0 + $0x340] sm:$0xf]
    %v226 = vld [vmem:[%s0 + $0x344] sm:$0xf]
    %v227 = vld [vmem:[%s0 + $0x348] sm:$0xf]
    %v228 = vld [vmem:[%s0 + $0x34c] sm:$0xf]
    %v229 = vld [vmem:[%s0 + $0x350] sm:$0xf]
    %v230 = vld [vmem:[%s0 + $0x354] sm:$0xf]
    %v231 = vld [vmem:[%s0 + $0x358] sm:$0xf]
    %v232 = vld [vmem:[%s0 + $0x35c] sm:$0xf]
    %v233 = vld [vmem:[%s0 + $0x360] sm:$0xf]
    %v234 = vld [vmem:[%s0 + $0x364] sm:$0xf]
    %v235 = vld [vmem:[%s0 + $0x368] sm:$0xf]
    %v236 = vld [vmem:[%s0 + $0x36c] sm:$0xf]
    %v237 = vld [vmem:[%s0 + $0x370] sm:$0xf]
    %v238 = vld [vmem:[%s0 + $0x374] sm:$0xf]
    %v239 = vld [vmem:[%s0 + $0x378] sm:$0xf]
    %v240 = vld [vmem:[%s0 + $0x37c] sm:$0xf]
    %v241 = vld [vmem:[%s0 + $0x380] sm:$0xf]
    %v242 = vld [vmem:[%s0 + $0x384] sm:$0xf]
    %v243 = vld [vmem:[%s0 + $0x388] sm:$0xf]
    %v244 = vld [vmem:[%s0 + $0x38c] sm:$0xf]
    %v245 = vld [vmem:[%s0 + $0x390] sm:$0xf]
    %v246 = vld [vmem:[%s0 + $0x394] sm:$0xf]
    %v247 = vld [vmem:[%s0 + $0x398] sm:$0xf]
    %v248 = vld [vmem:[%s0 + $0x39c] sm:$0xf]
    %v249 = vld [vmem:[%s0 + $0x3a0] sm:$0xf]
    %v250 = vld [vmem:[%s0 + $0x3a4] sm:$0xf]
    %v251 = vld [vmem:[%s0 + $0x3a8] sm:$0xf]
    %v252 = vld [vmem:[%s0 + $0x3ac] sm:$0xf]
    %v253 = vld [vmem:[%s0 + $0x3b0] sm:$0xf]
    %v254 = vld [vmem:[%s0 + $0x3b4] sm:$0xf]
    %v255 = vld [vmem:[%s0 + $0x3b8] sm:$0xf]
    %v256 = vld [vmem:[%s0 + $0x3bc] sm:$0xf]
    %v257 = vld [vmem:[%s0 + $0x3c0] sm:$0xf]
    %v258 = vld [vmem:[%s0 + $0x3c4] sm:$0xf]
    %v259 = vld [vmem:[%s0 + $0x3c8] sm:$0xf]
    %v260 = vld [vmem:[%s0 + $0x3cc] sm:$0xf]
    %v261 = vld [vmem:[%s0 + $0x3d0] sm:$0xf]
    %v262 = vld [vmem:[%s0 + $0x3d4] sm:$0xf]
    %v263 = vld [vmem:[%s0 + $0x3d8] sm:$0xf]
    %v264 = vld [vmem:[%s0 + $0x3dc] sm:$0xf]
    %v265 = vld [vmem:[%s0 + $0x3e0] sm:$0xf]
    %v266 = vld [vmem:[%s0 + $0x3e4] sm:$0xf]
    %v267 = vld [vmem:[%s0 + $0x3e8] sm:$0xf]
    %v268 = vld [vmem:[%s0 + $0x3ec] sm:$0xf]
    %v269 = vld [vmem:[%s0 + $0x3f0] sm:$0xf]
    %v270 = vld [vmem:[%s0 + $0x3f4] sm:$0xf]
    %v271 = vld [vmem:[%s0 + $0x3f8] sm:$0xf]
    %v272 = vld [vmem:[%s0 + $0x3fc] sm:$0xf]
    %v273 = vld [vmem:[%s1] sm:$0xf]
    %v274 = vld [vmem:[%s1 + $0x4] sm:$0xf]
    %v275 = vld [vmem:[%s1 + $0x8] sm:$0xf]
    %v276 = vld [vmem:[%s1 + $0xc] sm:$0x3]
    %v533 = vunpack.c.l.b16 %v17
    %v534 = vunpack.c.l.b16 %v18
    %v535 = vunpack.c.l.b16 %v19
    %v536 = vunpack.c.l.b16 %v20
    %v537 = vunpack.c.l.b16 %v21
    %v538 = vunpack.c.l.b16 %v22
    %v539 = vunpack.c.l.b16 %v23
    %v540 = vunpack.c.l.b16 %v24
    %v541 = vunpack.c.l.b16 %v25
    %v542 = vunpack.c.l.b16 %v26
    %v543 = vunpack.c.l.b16 %v27
    %v544 = vunpack.c.l.b16 %v28
    %v545 = vunpack.c.l.b16 %v29
    %v546 = vunpack.c.l.b16 %v30
    %v547 = vunpack.c.l.b16 %v31
    %v548 = vunpack.c.l.b16 %v32
    %v549 = vunpack.c.l.b16 %v33
    %v550 = vunpack.c.l.b16 %v34
    %v551 = vunpack.c.l.b16 %v35
    %v552 = vunpack.c.l.b16 %v36
    %v553 = vunpack.c.l.b16 %v37
    %v554 = vunpack.c.l.b16 %v38
    %v555 = vunpack.c.l.b16 %v39
    %v556 = vunpack.c.l.b16 %v40
    %v557 = vunpack.c.l.b16 %v41
    %v558 = vunpack.c.l.b16 %v42
    %v559 = vunpack.c.l.b16 %v43
    %v560 = vunpack.c.l.b16 %v44
    %v561 = vunpack.c.l.b16 %v45
    %v562 = vunpack.c.l.b16 %v46
    %v563 = vunpack.c.l.b16 %v47
    %v564 = vunpack.c.l.b16 %v48
    %v565 = vunpack.c.l.b16 %v49
    %v566 = vunpack.c.l.b16 %v50
    %v567 = vunpack.c.l.b16 %v51
    %v568 = vunpack.c.l.b16 %v52
    %v569 = vunpack.c.l.b16 %v53
    %v570 = vunpack.c.l.b16 %v54
    %v571 = vunpack.c.l.b16 %v55
    %v572 = vunpack.c.l.b16 %v56
    %v573 = vunpack.c.l.b16 %v57
    %v574 = vunpack.c.l.b16 %v58
    %v575 = vunpack.c.l.b16 %v59
    %v576 = vunpack.c.l.b16 %v60
    %v577 = vunpack.c.l.b16 %v61
    %v578 = vunpack.c.l.b16 %v62
    %v579 = vunpack.c.l.b16 %v63
    %v580 = vunpack.c.l.b16 %v64
    %v581 = vunpack.c.l.b16 %v65
    %v582 = vunpack.c.l.b16 %v66
    %v583 = vunpack.c.l.b16 %v67
    %v584 = vunpack.c.l.b16 %v68
    %v585 = vunpack.c.l.b16 %v69
    %v586 = vunpack.c.l.b16 %v70
    %v587 = vunpack.c.l.b16 %v71
    %v588 = vunpack.c.l.b16 %v72
    %v589 = vunpack.c.l.b16 %v73
    %v590 = vunpack.c.l.b16 %v74
    %v591 = vunpack.c.l.b16 %v75
    %v592 = vunpack.c.l.b16 %v76
    %v593 = vunpack.c.l.b16 %v77
    %v594 = vunpack.c.l.b16 %v78
    %v595 = vunpack.c.l.b16 %v79
    %v596 = vunpack.c.l.b16 %v80
    %v597 = vunpack.c.l.b16 %v81
    %v598 = vunpack.c.l.b16 %v82
    %v599 = vunpack.c.l.b16 %v83
    %v600 = vunpack.c.l.b16 %v84
    %v601 = vunpack.c.l.b16 %v85
    %v602 = vunpack.c.l.b16 %v86
    %v603 = vunpack.c.l.b16 %v87
    %v604 = vunpack.c.l.b16 %v88
    %v605 = vunpack.c.l.b16 %v89
    %v606 = vunpack.c.l.b16 %v90
    %v607 = vunpack.c.l.b16 %v91
    %v608 = vunpack.c.l.b16 %v92
    %v609 = vunpack.c.l.b16 %v93
    %v610 = vunpack.c.l.b16 %v94
    %v611 = vunpack.c.l.b16 %v95
    %v612 = vunpack.c.l.b16 %v96
    %v613 = vunpack.c.l.b16 %v97
    %v614 = vunpack.c.l.b16 %v98
    %v615 = vunpack.c.l.b16 %v99
    %v616 = vunpack.c.l.b16 %v100
    %v617 = vunpack.c.l.b16 %v101
    %v618 = vunpack.c.l.b16 %v102
    %v619 = vunpack.c.l.b16 %v103
    %v620 = vunpack.c.l.b16 %v104
    %v621 = vunpack.c.l.b16 %v105
    %v622 = vunpack.c.l.b16 %v106
    %v623 = vunpack.c.l.b16 %v107
    %v624 = vunpack.c.l.b16 %v108
    %v625 = vunpack.c.l.b16 %v109
    %v626 = vunpack.c.l.b16 %v110
    %v627 = vunpack.c.l.b16 %v111
    %v628 = vunpack.c.l.b16 %v112
    %v629 = vunpack.c.l.b16 %v113
    %v630 = vunpack.c.l.b16 %v114
    %v631 = vunpack.c.l.b16 %v115
    %v632 = vunpack.c.l.b16 %v116
    %v633 = vunpack.c.l.b16 %v117
    %v634 = vunpack.c.l.b16 %v118
    %v635 = vunpack.c.l.b16 %v119
    %v636 = vunpack.c.l.b16 %v120
    %v637 = vunpack.c.l.b16 %v121
    %v638 = vunpack.c.l.b16 %v122
    %v639 = vunpack.c.l.b16 %v123
    %v640 = vunpack.c.l.b16 %v124
    %v641 = vunpack.c.l.b16 %v125
    %v642 = vunpack.c.l.b16 %v126
    %v643 = vunpack.c.l.b16 %v127
    %v644 = vunpack.c.l.b16 %v128
    %v645 = vunpack.c.l.b16 %v129
    %v646 = vunpack.c.l.b16 %v130
    %v647 = vunpack.c.l.b16 %v131
    %v648 = vunpack.c.l.b16 %v132
    %v649 = vunpack.c.l.b16 %v133
    %v650 = vunpack.c.l.b16 %v134
    %v651 = vunpack.c.l.b16 %v135
    %v652 = vunpack.c.l.b16 %v136
    %v653 = vunpack.c.l.b16 %v137
    %v654 = vunpack.c.l.b16 %v138
    %v655 = vunpack.c.l.b16 %v139
    %v656 = vunpack.c.l.b16 %v140
    %v657 = vunpack.c.l.b16 %v141
    %v658 = vunpack.c.l.b16 %v142
    %v659 = vunpack.c.l.b16 %v143
    %v660 = vunpack.c.l.b16 %v144
    %v661 = vunpack.c.l.b16 %v145
    %v662 = vunpack.c.l.b16 %v146
    %v663 = vunpack.c.l.b16 %v147
    %v664 = vunpack.c.l.b16 %v148
    %v665 = vunpack.c.l.b16 %v149
    %v666 = vunpack.c.l.b16 %v150
    %v667 = vunpack.c.l.b16 %v151
    %v668 = vunpack.c.l.b16 %v152
    %v669 = vunpack.c.l.b16 %v153
    %v670 = vunpack.c.l.b16 %v154
    %v671 = vunpack.c.l.b16 %v155
    %v672 = vunpack.c.l.b16 %v156
    %v673 = vunpack.c.l.b16 %v157
    %v674 = vunpack.c.l.b16 %v158
    %v675 = vunpack.c.l.b16 %v159
    %v676 = vunpack.c.l.b16 %v160
    %v677 = vunpack.c.l.b16 %v161
    %v678 = vunpack.c.l.b16 %v162
    %v679 = vunpack.c.l.b16 %v163
    %v680 = vunpack.c.l.b16 %v164
    %v681 = vunpack.c.l.b16 %v165
    %v682 = vunpack.c.l.b16 %v166
    %v683 = vunpack.c.l.b16 %v167
    %v684 = vunpack.c.l.b16 %v168
    %v685 = vunpack.c.l.b16 %v169
    %v686 = vunpack.c.l.b16 %v170
    %v687 = vunpack.c.l.b16 %v171
    %v688 = vunpack.c.l.b16 %v172
    %v689 = vunpack.c.l.b16 %v173
    %v690 = vunpack.c.l.b16 %v174
    %v691 = vunpack.c.l.b16 %v175
    %v692 = vunpack.c.l.b16 %v176
    %v693 = vunpack.c.l.b16 %v177
    %v694 = vunpack.c.l.b16 %v178
    %v695 = vunpack.c.l.b16 %v179
    %v696 = vunpack.c.l.b16 %v180
    %v697 = vunpack.c.l.b16 %v181
    %v698 = vunpack.c.l.b16 %v182
    %v699 = vunpack.c.l.b16 %v183
    %v700 = vunpack.c.l.b16 %v184
    %v701 = vunpack.c.l.b16 %v185
    %v702 = vunpack.c.l.b16 %v186
    %v703 = vunpack.c.l.b16 %v187
    %v704 = vunpack.c.l.b16 %v188
    %v705 = vunpack.c.l.b16 %v189
    %v706 = vunpack.c.l.b16 %v190
    %v707 = vunpack.c.l.b16 %v191
    %v708 = vunpack.c.l.b16 %v192
    %v709 = vunpack.c.l.b16 %v193
    %v710 = vunpack.c.l.b16 %v194
    %v711 = vunpack.c.l.b16 %v195
    %v712 = vunpack.c.l.b16 %v196
    %v713 = vunpack.c.l.b16 %v197
    %v714 = vunpack.c.l.b16 %v198
    %v715 = vunpack.c.l.b16 %v199
    %v716 = vunpack.c.l.b16 %v200
    %v717 = vunpack.c.l.b16 %v201
    %v718 = vunpack.c.l.b16 %v202
    %v719 = vunpack.c.l.b16 %v203
    %v720 = vunpack.c.l.b16 %v204
    %v721 = vunpack.c.l.b16 %v205
    %v722 = vunpack.c.l.b16 %v206
    %v723 = vunpack.c.l.b16 %v207
    %v724 = vunpack.c.l.b16 %v208
    %v725 = vunpack.c.l.b16 %v209
    %v726 = vunpack.c.l.b16 %v210
    %v727 = vunpack.c.l.b16 %v211
    %v728 = vunpack.c.l.b16 %v212
    %v729 = vunpack.c.l.b16 %v213
    %v730 = vunpack.c.l.b16 %v214
    %v731 = vunpack.c.l.b16 %v215
    %v732 = vunpack.c.l.b16 %v216
    %v733 = vunpack.c.l.b16 %v217
    %v734 = vunpack.c.l.b16 %v218
    %v735 = vunpack.c.l.b16 %v219
    %v736 = vunpack.c.l.b16 %v220
    %v737 = vunpack.c.l.b16 %v221
    %v738 = vunpack.c.l.b16 %v222
    %v739 = vunpack.c.l.b16 %v223
    %v740 = vunpack.c.l.b16 %v224
    %v741 = vunpack.c.l.b16 %v225
    %v742 = vunpack.c.l.b16 %v226
    %v743 = vunpack.c.l.b16 %v227
    %v744 = vunpack.c.l.b16 %v228
    %v745 = vunpack.c.l.b16 %v229
    %v746 = vunpack.c.l.b16 %v230
    %v747 = vunpack.c.l.b16 %v231
    %v748 = vunpack.c.l.b16 %v232
    %v749 = vunpack.c.l.b16 %v233
    %v750 = vunpack.c.l.b16 %v234
    %v751 = vunpack.c.l.b16 %v235
    %v752 = vunpack.c.l.b16 %v236
    %v753 = vunpack.c.l.b16 %v237
    %v754 = vunpack.c.l.b16 %v238
    %v755 = vunpack.c.l.b16 %v239
    %v756 = vunpack.c.l.b16 %v240
    %v757 = vunpack.c.l.b16 %v241
    %v758 = vunpack.c.l.b16 %v242
    %v759 = vunpack.c.l.b16 %v243
    %v760 = vunpack.c.l.b16 %v244
    %v761 = vunpack.c.l.b16 %v245
    %v762 = vunpack.c.l.b16 %v246
    %v763 = vunpack.c.l.b16 %v247
    %v764 = vunpack.c.l.b16 %v248
    %v765 = vunpack.c.l.b16 %v249
    %v766 = vunpack.c.l.b16 %v250
    %v767 = vunpack.c.l.b16 %v251
    %v768 = vunpack.c.l.b16 %v252
    %v769 = vunpack.c.l.b16 %v253
    %v770 = vunpack.c.l.b16 %v254
    %v771 = vunpack.c.l.b16 %v255
    %v772 = vunpack.c.l.b16 %v256
    %v773 = vunpack.c.l.b16 %v257
    %v774 = vunpack.c.l.b16 %v258
    %v775 = vunpack.c.l.b16 %v259
    %v776 = vunpack.c.l.b16 %v260
    %v777 = vunpack.c.l.b16 %v261
    %v778 = vunpack.c.l.b16 %v262
    %v779 = vunpack.c.l.b16 %v263
    %v780 = vunpack.c.l.b16 %v264
    %v781 = vunpack.c.l.b16 %v265
    %v782 = vunpack.c.l.b16 %v266
    %v783 = vunpack.c.l.b16 %v267
    %v784 = vunpack.c.l.b16 %v268
    %v785 = vunpack.c.l.b16 %v269
    %v786 = vunpack.c.l.b16 %v270
    %v787 = vunpack.c.l.b16 %v271
    %v788 = vunpack.c.l.b16 %v272
    %v789 = vpack.c.b16 %v534, %v533
    %v790 = vpack.c.b16 %v536, %v535
    %v791 = vpack.c.b16 %v538, %v537
    %v792 = vpack.c.b16 %v540, %v539
    %v793 = vpack.c.b16 %v542, %v541
    %v794 = vpack.c.b16 %v544, %v543
    %v795 = vpack.c.b16 %v546, %v545
    %v796 = vpack.c.b16 %v548, %v547
    %v797 = vpack.c.b16 %v550, %v549
    %v798 = vpack.c.b16 %v552, %v551
    %v799 = vpack.c.b16 %v554, %v553
    %v800 = vpack.c.b16 %v556, %v555
    %v801 = vpack.c.b16 %v558, %v557
    %v802 = vpack.c.b16 %v560, %v559
    %v803 = vpack.c.b16 %v562, %v561
    %v804 = vpack.c.b16 %v564, %v563
    %v805 = vpack.c.b16 %v566, %v565
    %v806 = vpack.c.b16 %v568, %v567
    %v807 = vpack.c.b16 %v570, %v569
    %v808 = vpack.c.b16 %v572, %v571
    %v809 = vpack.c.b16 %v574, %v573
    %v810 = vpack.c.b16 %v576, %v575
    %v811 = vpack.c.b16 %v578, %v577
    %v812 = vpack.c.b16 %v580, %v579
    %v813 = vpack.c.b16 %v582, %v581
    %v814 = vpack.c.b16 %v584, %v583
    %v815 = vpack.c.b16 %v586, %v585
    %v816 = vpack.c.b16 %v588, %v587
    %v817 = vpack.c.b16 %v590, %v589
    %v818 = vpack.c.b16 %v592, %v591
    %v819 = vpack.c.b16 %v594, %v593
    %v820 = vpack.c.b16 %v596, %v595
    %v821 = vpack.c.b16 %v598, %v597
    %v822 = vpack.c.b16 %v600, %v599
    %v823 = vpack.c.b16 %v602, %v601
    %v824 = vpack.c.b16 %v604, %v603
    %v825 = vpack.c.b16 %v606, %v605
    %v826 = vpack.c.b16 %v608, %v607
    %v827 = vpack.c.b16 %v610, %v609
    %v828 = vpack.c.b16 %v612, %v611
    %v829 = vpack.c.b16 %v614, %v613
    %v830 = vpack.c.b16 %v616, %v615
    %v831 = vpack.c.b16 %v618, %v617
    %v832 = vpack.c.b16 %v620, %v619
    %v833 = vpack.c.b16 %v622, %v621
    %v834 = vpack.c.b16 %v624, %v623
    %v835 = vpack.c.b16 %v626, %v625
    %v836 = vpack.c.b16 %v628, %v627
    %v837 = vpack.c.b16 %v630, %v629
    %v838 = vpack.c.b16 %v632, %v631
    %v839 = vpack.c.b16 %v634, %v633
    %v840 = vpack.c.b16 %v636, %v635
    %v841 = vpack.c.b16 %v638, %v637
    %v842 = vpack.c.b16 %v640, %v639
    %v843 = vpack.c.b16 %v642, %v641
    %v844 = vpack.c.b16 %v644, %v643
    %v845 = vpack.c.b16 %v646, %v645
    %v846 = vpack.c.b16 %v648, %v647
    %v847 = vpack.c.b16 %v650, %v649
    %v848 = vpack.c.b16 %v652, %v651
    %v849 = vpack.c.b16 %v654, %v653
    %v850 = vpack.c.b16 %v656, %v655
    %v851 = vpack.c.b16 %v658, %v657
    %v852 = vpack.c.b16 %v660, %v659
    %v853 = vpack.c.b16 %v662, %v661
    %v854 = vpack.c.b16 %v664, %v663
    %v855 = vpack.c.b16 %v666, %v665
    %v856 = vpack.c.b16 %v668, %v667
    %v857 = vpack.c.b16 %v670, %v669
    %v858 = vpack.c.b16 %v672, %v671
    %v859 = vpack.c.b16 %v674, %v673
    %v860 = vpack.c.b16 %v676, %v675
    %v861 = vpack.c.b16 %v678, %v677
    %v862 = vpack.c.b16 %v680, %v679
    %v863 = vpack.c.b16 %v682, %v681
    %v864 = vpack.c.b16 %v684, %v683
    %v865 = vpack.c.b16 %v686, %v685
    %v866 = vpack.c.b16 %v688, %v687
    %v867 = vpack.c.b16 %v690, %v689
    %v868 = vpack.c.b16 %v692, %v691
    %v869 = vpack.c.b16 %v694, %v693
    %v870 = vpack.c.b16 %v696, %v695
    %v871 = vpack.c.b16 %v698, %v697
    %v872 = vpack.c.b16 %v700, %v699
    %v873 = vpack.c.b16 %v702, %v701
    %v874 = vpack.c.b16 %v704, %v703
    %v875 = vpack.c.b16 %v706, %v705
    %v876 = vpack.c.b16 %v708, %v707
    %v877 = vpack.c.b16 %v710, %v709
    %v878 = vpack.c.b16 %v712, %v711
    %v879 = vpack.c.b16 %v714, %v713
    %v880 = vpack.c.b16 %v716, %v715
    %v881 = vpack.c.b16 %v718, %v717
    %v882 = vpack.c.b16 %v720, %v719
    %v883 = vpack.c.b16 %v722, %v721
    %v884 = vpack.c.b16 %v724, %v723
    %v885 = vpack.c.b16 %v726, %v725
    %v886 = vpack.c.b16 %v728, %v727
    %v887 = vpack.c.b16 %v730, %v729
    %v888 = vpack.c.b16 %v732, %v731
    %v889 = vpack.c.b16 %v734, %v733
    %v890 = vpack.c.b16 %v736, %v735
    %v891 = vpack.c.b16 %v738, %v737
    %v892 = vpack.c.b16 %v740, %v739
    %v893 = vpack.c.b16 %v742, %v741
    %v894 = vpack.c.b16 %v744, %v743
    %v895 = vpack.c.b16 %v746, %v745
    %v896 = vpack.c.b16 %v748, %v747
    %v897 = vpack.c.b16 %v750, %v749
    %v898 = vpack.c.b16 %v752, %v751
    %v899 = vpack.c.b16 %v754, %v753
    %v900 = vpack.c.b16 %v756, %v755
    %v901 = vpack.c.b16 %v758, %v757
    %v902 = vpack.c.b16 %v760, %v759
    %v903 = vpack.c.b16 %v762, %v761
    %v904 = vpack.c.b16 %v764, %v763
    %v905 = vpack.c.b16 %v766, %v765
    %v906 = vpack.c.b16 %v768, %v767
    %v907 = vpack.c.b16 %v770, %v769
    %v908 = vpack.c.b16 %v772, %v771
    %v909 = vpack.c.b16 %v774, %v773
    %v910 = vpack.c.b16 %v776, %v775
    %v911 = vpack.c.b16 %v778, %v777
    %v912 = vpack.c.b16 %v780, %v779
    %v913 = vpack.c.b16 %v782, %v781
    %v914 = vpack.c.b16 %v784, %v783
    %v915 = vpack.c.b16 %v786, %v785
    %v916 = vpack.c.b16 %v788, %v787
    %v921 = vunpack.c.l.b16 %v273
    %v922 = vunpack.c.l.b16 %v274
    %v923 = vunpack.c.l.b16 %v275
    %v924 = vunpack.c.l.b16 %v276
    %v925 = vpack.c.b16 %v922, %v921
    %v926 = vpack.c.b16 %v924, %v923
    %vm928 = vcmask 220160
    %v930 = vsel %vm928, %v789, 0
    %v933 = vsel %vm928, %v790, 0
    %v936 = vsel %vm928, %v791, 0
    %v939 = vsel %vm928, %v792, 0
    %v942 = vsel %vm928, %v793, 0
    %v945 = vsel %vm928, %v794, 0
    %v948 = vsel %vm928, %v795, 0
    %v951 = vsel %vm928, %v796, 0
    %v954 = vsel %vm928, %v797, 0
    %v957 = vsel %vm928, %v798, 0
    %v960 = vsel %vm928, %v799, 0
    %v963 = vsel %vm928, %v800, 0
    %v966 = vsel %vm928, %v801, 0
    %v969 = vsel %vm928, %v802, 0
    %v972 = vsel %vm928, %v803, 0
    %v975 = vsel %vm928, %v804, 0
    %v978 = vsel %vm928, %v805, 0
    %v981 = vsel %vm928, %v806, 0
    %v984 = vsel %vm928, %v807, 0
    %v987 = vsel %vm928, %v808, 0
    %v990 = vsel %vm928, %v809, 0
    %v993 = vsel %vm928, %v810, 0
    %v996 = vsel %vm928, %v811, 0
    %v999 = vsel %vm928, %v812, 0
    %v1002 = vsel %vm928, %v813, 0
    %v1005 = vsel %vm928, %v814, 0
    %v1008 = vsel %vm928, %v815, 0
    %v1011 = vsel %vm928, %v816, 0
    %v1014 = vsel %vm928, %v817, 0
    %v1017 = vsel %vm928, %v818, 0
    %v1020 = vsel %vm928, %v819, 0
    %v1023 = vsel %vm928, %v820, 0
    %v1026 = vsel %vm928, %v821, 0
    %v1029 = vsel %vm928, %v822, 0
    %v1032 = vsel %vm928, %v823, 0
    %v1035 = vsel %vm928, %v824, 0
    %v1038 = vsel %vm928, %v825, 0
    %v1041 = vsel %vm928, %v826, 0
    %v1044 = vsel %vm928, %v827, 0
    %v1047 = vsel %vm928, %v828, 0
    %v1050 = vsel %vm928, %v829, 0
    %v1053 = vsel %vm928, %v830, 0
    %v1056 = vsel %vm928, %v831, 0
    %v1059 = vsel %vm928, %v832, 0
    %v1062 = vsel %vm928, %v833, 0
    %v1065 = vsel %vm928, %v834, 0
    %v1068 = vsel %vm928, %v835, 0
    %v1071 = vsel %vm928, %v836, 0
    %v1074 = vsel %vm928, %v837, 0
    %v1077 = vsel %vm928, %v838, 0
    %v1080 = vsel %vm928, %v839, 0
    %v1083 = vsel %vm928, %v840, 0
    %v1086 = vsel %vm928, %v841, 0
    %v1089 = vsel %vm928, %v842, 0
    %v1092 = vsel %vm928, %v843, 0
    %v1095 = vsel %vm928, %v844, 0
    %v1098 = vsel %vm928, %v845, 0
    %v1101 = vsel %vm928, %v846, 0
    %v1104 = vsel %vm928, %v847, 0
    %v1107 = vsel %vm928, %v848, 0
    %v1110 = vsel %vm928, %v849, 0
    %v1113 = vsel %vm928, %v850, 0
    %v1116 = vsel %vm928, %v851, 0
    %v1119 = vsel %vm928, %v852, 0
    %v1122 = vsel %vm928, %v853, 0
    %v1125 = vsel %vm928, %v854, 0
    %v1128 = vsel %vm928, %v855, 0
    %v1131 = vsel %vm928, %v856, 0
    %v1134 = vsel %vm928, %v857, 0
    %v1137 = vsel %vm928, %v858, 0
    %v1140 = vsel %vm928, %v859, 0
    %v1143 = vsel %vm928, %v860, 0
    %v1146 = vsel %vm928, %v861, 0
    %v1149 = vsel %vm928, %v862, 0
    %v1152 = vsel %vm928, %v863, 0
    %v1155 = vsel %vm928, %v864, 0
    %v1158 = vsel %vm928, %v865, 0
    %v1161 = vsel %vm928, %v866, 0
    %v1164 = vsel %vm928, %v867, 0
    %v1167 = vsel %vm928, %v868, 0
    %v1170 = vsel %vm928, %v869, 0
    %v1173 = vsel %vm928, %v870, 0
    %v1176 = vsel %vm928, %v871, 0
    %v1179 = vsel %vm928, %v872, 0
    %v1182 = vsel %vm928, %v873, 0
    %v1185 = vsel %vm928, %v874, 0
    %v1188 = vsel %vm928, %v875, 0
    %v1191 = vsel %vm928, %v876, 0
    %v1194 = vsel %vm928, %v877, 0
    %v1197 = vsel %vm928, %v878, 0
    %v1200 = vsel %vm928, %v879, 0
    %v1203 = vsel %vm928, %v880, 0
    %v1206 = vsel %vm928, %v881, 0
    %v1209 = vsel %vm928, %v882, 0
    %v1212 = vsel %vm928, %v883, 0
    %v1215 = vsel %vm928, %v884, 0
    %v1218 = vsel %vm928, %v885, 0
    %v1221 = vsel %vm928, %v886, 0
    %v1224 = vsel %vm928, %v887, 0
    %v1227 = vsel %vm928, %v888, 0
    %v1230 = vsel %vm928, %v889, 0
    %v1233 = vsel %vm928, %v890, 0
    %v1236 = vsel %vm928, %v891, 0
    %v1239 = vsel %vm928, %v892, 0
    %v1242 = vsel %vm928, %v893, 0
    %v1245 = vsel %vm928, %v894, 0
    %v1248 = vsel %vm928, %v895, 0
    %v1251 = vsel %vm928, %v896, 0
    %v1254 = vsel %vm928, %v897, 0
    %v1257 = vsel %vm928, %v898, 0
    %v1260 = vsel %vm928, %v899, 0
    %v1263 = vsel %vm928, %v900, 0
    %v1266 = vsel %vm928, %v901, 0
    %v1269 = vsel %vm928, %v902, 0
    %v1272 = vsel %vm928, %v903, 0
    %v1275 = vsel %vm928, %v904, 0
    %v1278 = vsel %vm928, %v905, 0
    %v1281 = vsel %vm928, %v906, 0
    %v1284 = vsel %vm928, %v907, 0
    %v1287 = vsel %vm928, %v908, 0
    %v1290 = vsel %vm928, %v909, 0
    %v1293 = vsel %vm928, %v910, 0
    %v1296 = vsel %vm928, %v911, 0
    %v1299 = vsel %vm928, %v912, 0
    %v1302 = vsel %vm928, %v913, 0
    %v1305 = vsel %vm928, %v914, 0
    %v1308 = vsel %vm928, %v915, 0
    %v1311 = vsel %vm928, %v916, 0
    %vm1313 = vcmask 1044480
    %vm1314 = vcmask 1045504
    %v1315 = vsel %vm1313, 4294967295, 65535
    %v1316 = vsel %vm1314, %v1315, 0
    %v1318 = vand.u32 %v926, %v1316
    %1320 = vmatprep.subr.bf16.mxu0 0
    %1321 = vmatpush1.bf16.msra.mxu0 %v925
    %1322 = vmatprep.subr.bf16.mxu0 0
    %1323 = vmatpush1.bf16.msra.mxu0 %v1318
    %1324 = vmatprep.subr.bf16.mxu0 0
    %1325 = vmatpush1.bf16.msra.mxu0 0
    %1326 = vmatprep.subr.bf16.mxu0 0
    %1327 = vmatpush1.bf16.msra.mxu0 0
    %1328 = vmatprep.subr.bf16.mxu0 0
    %1329 = vmatpush1.bf16.msra.mxu0 0
    %1330 = vmatprep.subr.bf16.mxu0 0
    %1331 = vmatpush1.bf16.msra.mxu0 0
    %1332 = vmatprep.subr.bf16.mxu0 0
    %1333 = vmatpush1.bf16.msra.mxu0 0
    %1334 = vmatprep.subr.bf16.mxu0 0
    %1335 = vmatpush1.bf16.msra.mxu0 0
    %1336 = vmatprep.subr.bf16.mxu0 0
    %1337 = vmatpush1.bf16.msra.mxu0 0
    %1338 = vmatprep.subr.bf16.mxu0 0
    %1339 = vmatpush1.bf16.msra.mxu0 0
    %1340 = vmatprep.subr.bf16.mxu0 0
    %1341 = vmatpush1.bf16.msra.mxu0 0
    %1342 = vmatprep.subr.bf16.mxu0 0
    %1343 = vmatpush1.bf16.msra.mxu0 0
    %1344 = vmatprep.subr.bf16.mxu0 0
    %1345 = vmatpush1.bf16.msra.mxu0 0
    %1346 = vmatprep.subr.bf16.mxu0 0
    %1347 = vmatpush1.bf16.msra.mxu0 0
    %1348 = vmatprep.subr.bf16.mxu0 0
    %1349 = vmatpush1.bf16.msra.mxu0 0
    %1350 = vmatprep.subr.bf16.mxu0 0
    %1351 = vmatpush1.bf16.msra.mxu0 0
    %1352 = vmatprep.mubr.bf16.mxu0 0
    %1353 = vmatmul.mubr.bf16.gmra.mrb[0].mxu0 %v930
    %v1354 = vpop.f32.mrb[0].mxu0
    %v1355 = vadd.f32 0.0, %v1354
    %v1356 = vpop.f32.mrb[0].mxu0
    %v1357 = vpop.f32.mrb[0].mxu0
    %v1358 = vadd.f32 0.0, %v1357
    %v1359 = vpop.f32.mrb[0].mxu0
    %1360 = vmatprep.mubr.bf16.mxu0 0
    %1361 = vmatmul.mubr.bf16.gmra.mrb[0].mxu0 %v933
    %v1362 = vpop.f32.mrb[0].mxu0
    %v1363 = vadd.f32 0.0, %v1362
    %v1364 = vpop.f32.mrb[0].mxu0
    %v1365 = vpop.f32.mrb[0].mxu0
    %v1366 = vadd.f32 0.0, %v1365
    %v1367 = vpop.f32.mrb[0].mxu0
    %1368 = vmatprep.mubr.bf16.mxu0 0
    %1369 = vmatmul.mubr.bf16.gmra.mrb[0].mxu0 %v936
    %v1370 = vpop.f32.mrb[0].mxu0
    %v1371 = vadd.f32 0.0, %v1370
    %v1372 = vpop.f32.mrb[0].mxu0
    %v1373 = vpop.f32.mrb[0].mxu0
    %v1374 = vadd.f32 0.0, %v1373
    %v1375 = vpop.f32.mrb[0].mxu0
    %1376 = vmatprep.mubr.bf16.mxu0 0
    %1377 = vmatmul.mubr.bf16.gmra.mrb[0].mxu0 %v939
    %v1378 = vpop.f32.mrb[0].mxu0
    %v1379 = vadd.f32 0.0, %v1378
    %v1380 = vpop.f32.mrb[0].mxu0
    %v1381 = vpop.f32.mrb[0].mxu0
    %v1382 = vadd.f32 0.0, %v1381
    %v1383 = vpop.f32.mrb[0].mxu0
    %1384 = vmatprep.mubr.bf16.mxu0 0
    %1385 = vmatmul.mubr.bf16.gmra.mrb[0].mxu0 %v942
    %v1386 = vpop.f32.mrb[0].mxu0
    %v1387 = vadd.f32 0.0, %v1386
    %v1388 = vpop.f32.mrb[0].mxu0
    %v1389 = vpop.f32.mrb[0].mxu0
    %v1390 = vadd.f32 0.0, %v1389
    %v1391 = vpop.f32.mrb[0].mxu0
    %1392 = vmatprep.mubr.bf16.mxu0 0
    %1393 = vmatmul.mubr.bf16.gmra.mrb[0].mxu0 %v945
    %v1394 = vpop.f32.mrb[0].mxu0
    %v1395 = vadd.f32 0.0, %v1394
    %v1396 = vpop.f32.mrb[0].mxu0
    %v1397 = vpop.f32.mrb[0].mxu0
    %v1398 = vadd.f32 0.0, %v1397
    %v1399 = vpop.f32.mrb[0].mxu0
    %1400 = vmatprep.mubr.bf16.mxu0 0
    %1401 = vmatmul.mubr.bf16.gmra.mrb[0].mxu0 %v948
    %v1402 = vpop.f32.mrb[0].mxu0
    %v1403 = vadd.f32 0.0, %v1402
    %v1404 = vpop.f32.mrb[0].mxu0
    %v1405 = vpop.f32.mrb[0].mxu0
    %v1406 = vadd.f32 0.0, %v1405
    %v1407 = vpop.f32.mrb[0].mxu0
    %1408 = vmatprep.mubr.bf16.mxu0 0
    %1409 = vmatmul.mubr.bf16.gmra.mrb[0].mxu0 %v951
    %v1410 = vpop.f32.mrb[0].mxu0
    %v1411 = vadd.f32 0.0, %v1410
    %v1412 = vpop.f32.mrb[0].mxu0
    %v1413 = vpop.f32.mrb[0].mxu0
    %v1414 = vadd.f32 0.0, %v1413
    %v1415 = vpop.f32.mrb[0].mxu0
    %1416 = vmatprep.mubr.bf16.mxu0 0
    %1417 = vmatmul.mubr.bf16.gmra.mrb[0].mxu0 %v954
    %v1418 = vpop.f32.mrb[0].mxu0
    %v1419 = vadd.f32 0.0, %v1418
    %v1420 = vpop.f32.mrb[0].mxu0
    %v1421 = vpop.f32.mrb[0].mxu0
    %v1422 = vadd.f32 0.0, %v1421
    %v1423 = vpop.f32.mrb[0].mxu0
    %1424 = vmatprep.mubr.bf16.mxu0 0
    %1425 = vmatmul.mubr.bf16.gmra.mrb[0].mxu0 %v957
    %v1426 = vpop.f32.mrb[0].mxu0
    %v1427 = vadd.f32 0.0, %v1426
    %v1428 = vpop.f32.mrb[0].mxu0
    %v1429 = vpop.f32.mrb[0].mxu0
    %v1430 = vadd.f32 0.0, %v1429
    %v1431 = vpop.f32.mrb[0].mxu0
    %1432 = vmatprep.mubr.bf16.mxu0 0
    %1433 = vmatmul.mubr.bf16.gmra.mrb[0].mxu0 %v960
    %v1434 = vpop.f32.mrb[0].mxu0
    %v1435 = vadd.f32 0.0, %v1434
    %v1436 = vpop.f32.mrb[0].mxu0
    %v1437 = vpop.f32.mrb[0].mxu0
    %v1438 = vadd.f32 0.0, %v1437
    %v1439 = vpop.f32.mrb[0].mxu0
    %1440 = vmatprep.mubr.bf16.mxu0 0
    %1441 = vmatmul.mubr.bf16.gmra.mrb[0].mxu0 %v963
    %v1442 = vpop.f32.mrb[0].mxu0
    %v1443 = vadd.f32 0.0, %v1442
    %v1444 = vpop.f32.mrb[0].mxu0
    %v1445 = vpop.f32.mrb[0].mxu0
    %v1446 = vadd.f32 0.0, %v1445
    %v1447 = vpop.f32.mrb[0].mxu0
    %1448 = vmatprep.mubr.bf16.mxu0 0
    %1449 = vmatmul.mubr.bf16.gmra.mrb[0].mxu0 %v966
    %v1450 = vpop.f32.mrb[0].mxu0
    %v1451 = vadd.f32 0.0, %v1450
    %v1452 = vpop.f32.mrb[0].mxu0
    %v1453 = vpop.f32.mrb[0].mxu0
    %v1454 = vadd.f32 0.0, %v1453
    %v1455 = vpop.f32.mrb[0].mxu0
    %1456 = vmatprep.mubr.bf16.mxu0 0
    %1457 = vmatmul.mubr.bf16.gmra.mrb[0].mxu0 %v969
    %v1458 = vpop.f32.mrb[0].mxu0
    %v1459 = vadd.f32 0.0, %v1458
    %v1460 = vpop.f32.mrb[0].mxu0
    %v1461 = vpop.f32.mrb[0].mxu0
    %v1462 = vadd.f32 0.0, %v1461
    %v1463 = vpop.f32.mrb[0].mxu0
    %1464 = vmatprep.mubr.bf16.mxu0 0
    %1465 = vmatmul.mubr.bf16.gmra.mrb[0].mxu0 %v972
    %v1466 = vpop.f32.mrb[0].mxu0
    %v1467 = vadd.f32 0.0, %v1466
    %v1468 = vpop.f32.mrb[0].mxu0
    %v1469 = vpop.f32.mrb[0].mxu0
    %v1470 = vadd.f32 0.0, %v1469
    %v1471 = vpop.f32.mrb[0].mxu0
    %1472 = vmatprep.mubr.bf16.mxu0 0
    %1473 = vmatmul.mubr.bf16.gmra.mrb[0].mxu0 %v975
    %v1474 = vpop.f32.mrb[0].mxu0
    %v1475 = vadd.f32 0.0, %v1474
    %v1476 = vpop.f32.mrb[0].mxu0
    %v1477 = vpop.f32.mrb[0].mxu0
    %v1478 = vadd.f32 0.0, %v1477
    %v1479 = vpop.f32.mrb[0].mxu0
    %1480 = vmatprep.mubr.bf16.mxu0 0
    %1481 = vmatmul.mubr.bf16.gmra.mrb[0].mxu0 %v978
    %v1482 = vpop.f32.mrb[0].mxu0
    %v1483 = vadd.f32 0.0, %v1482
    %v1484 = vpop.f32.mrb[0].mxu0
    %v1485 = vpop.f32.mrb[0].mxu0
    %v1486 = vadd.f32 0.0, %v1485
    %v1487 = vpop.f32.mrb[0].mxu0
    %1488 = vmatprep.mubr.bf16.mxu0 0
    %1489 = vmatmul.mubr.bf16.gmra.mrb[0].mxu0 %v981
    %v1490 = vpop.f32.mrb[0].mxu0
    %v1491 = vadd.f32 0.0, %v1490
    %v1492 = vpop.f32.mrb[0].mxu0
    %v1493 = vpop.f32.mrb[0].mxu0
    %v1494 = vadd.f32 0.0, %v1493
    %v1495 = vpop.f32.mrb[0].mxu0
    %1496 = vmatprep.mubr.bf16.mxu0 0
    %1497 = vmatmul.mubr.bf16.gmra.mrb[0].mxu0 %v984
    %v1498 = vpop.f32.mrb[0].mxu0
    %v1499 = vadd.f32 0.0, %v1498
    %v1500 = vpop.f32.mrb[0].mxu0
    %v1501 = vpop.f32.mrb[0].mxu0
    %v1502 = vadd.f32 0.0, %v1501
    %v1503 = vpop.f32.mrb[0].mxu0
    %1504 = vmatprep.mubr.bf16.mxu0 0
    %1505 = vmatmul.mubr.bf16.gmra.mrb[0].mxu0 %v987
    %v1506 = vpop.f32.mrb[0].mxu0
    %v1507 = vadd.f32 0.0, %v1506
    %v1508 = vpop.f32.mrb[0].mxu0
    %v1509 = vpop.f32.mrb[0].mxu0
    %v1510 = vadd.f32 0.0, %v1509
    %v1511 = vpop.f32.mrb[0].mxu0
    %1512 = vmatprep.mubr.bf16.mxu0 0
    %1513 = vmatmul.mubr.bf16.gmra.mrb[0].mxu0 %v990
    %v1514 = vpop.f32.mrb[0].mxu0
    %v1515 = vadd.f32 0.0, %v1514
    %v1516 = vpop.f32.mrb[0].mxu0
    %v1517 = vpop.f32.mrb[0].mxu0
    %v1518 = vadd.f32 0.0, %v1517
    %v1519 = vpop.f32.mrb[0].mxu0
    %1520 = vmatprep.mubr.bf16.mxu0 0
    %1521 = vmatmul.mubr.bf16.gmra.mrb[0].mxu0 %v993
    %v1522 = vpop.f32.mrb[0].mxu0
    %v1523 = vadd.f32 0.0, %v1522
    %v1524 = vpop.f32.mrb[0].mxu0
    %v1525 = vpop.f32.mrb[0].mxu0
    %v1526 = vadd.f32 0.0, %v1525
    %v1527 = vpop.f32.mrb[0].mxu0
    %1528 = vmatprep.mubr.bf16.mxu0 0
    %1529 = vmatmul.mubr.bf16.gmra.mrb[0].mxu0 %v996
    %v1530 = vpop.f32.mrb[0].mxu0
    %v1531 = vadd.f32 0.0, %v1530
    %v1532 = vpop.f32.mrb[0].mxu0
    %v1533 = vpop.f32.mrb[0].mxu0
    %v1534 = vadd.f32 0.0, %v1533
    %v1535 = vpop.f32.mrb[0].mxu0
    %1536 = vmatprep.mubr.bf16.mxu0 0
    %1537 = vmatmul.mubr.bf16.gmra.mrb[0].mxu0 %v999
    %v1538 = vpop.f32.mrb[0].mxu0
    %v1539 = vadd.f32 0.0, %v1538
    %v1540 = vpop.f32.mrb[0].mxu0
    %v1541 = vpop.f32.mrb[0].mxu0
    %v1542 = vadd.f32 0.0, %v1541
    %v1543 = vpop.f32.mrb[0].mxu0
    %1544 = vmatprep.mubr.bf16.mxu0 0
    %1545 = vmatmul.mubr.bf16.gmra.mrb[0].mxu0 %v1002
    %v1546 = vpop.f32.mrb[0].mxu0
    %v1547 = vadd.f32 0.0, %v1546
    %v1548 = vpop.f32.mrb[0].mxu0
    %v1549 = vpop.f32.mrb[0].mxu0
    %v1550 = vadd.f32 0.0, %v1549
    %v1551 = vpop.f32.mrb[0].mxu0
    %1552 = vmatprep.mubr.bf16.mxu0 0
    %1553 = vmatmul.mubr.bf16.gmra.mrb[0].mxu0 %v1005
    %v1554 = vpop.f32.mrb[0].mxu0
    %v1555 = vadd.f32 0.0, %v1554
    %v1556 = vpop.f32.mrb[0].mxu0
    %v1557 = vpop.f32.mrb[0].mxu0
    %v1558 = vadd.f32 0.0, %v1557
    %v1559 = vpop.f32.mrb[0].mxu0
    %1560 = vmatprep.mubr.bf16.mxu0 0
    %1561 = vmatmul.mubr.bf16.gmra.mrb[0].mxu0 %v1008
    %v1562 = vpop.f32.mrb[0].mxu0
    %v1563 = vadd.f32 0.0, %v1562
    %v1564 = vpop.f32.mrb[0].mxu0
    %v1565 = vpop.f32.mrb[0].mxu0
    %v1566 = vadd.f32 0.0, %v1565
    %v1567 = vpop.f32.mrb[0].mxu0
    %1568 = vmatprep.mubr.bf16.mxu0 0
    %1569 = vmatmul.mubr.bf16.gmra.mrb[0].mxu0 %v1011
    %v1570 = vpop.f32.mrb[0].mxu0
    %v1571 = vadd.f32 0.0, %v1570
    %v1572 = vpop.f32.mrb[0].mxu0
    %v1573 = vpop.f32.mrb[0].mxu0
    %v1574 = vadd.f32 0.0, %v1573
    %v1575 = vpop.f32.mrb[0].mxu0
    %1576 = vmatprep.mubr.bf16.mxu0 0
    %1577 = vmatmul.mubr.bf16.gmra.mrb[0].mxu0 %v1014
    %v1578 = vpop.f32.mrb[0].mxu0
    %v1579 = vadd.f32 0.0, %v1578
    %v1580 = vpop.f32.mrb[0].mxu0
    %v1581 = vpop.f32.mrb[0].mxu0
    %v1582 = vadd.f32 0.0, %v1581
    %v1583 = vpop.f32.mrb[0].mxu0
    %1584 = vmatprep.mubr.bf16.mxu0 0
    %1585 = vmatmul.mubr.bf16.gmra.mrb[0].mxu0 %v1017
    %v1586 = vpop.f32.mrb[0].mxu0
    %v1587 = vadd.f32 0.0, %v1586
    %v1588 = vpop.f32.mrb[0].mxu0
    %v1589 = vpop.f32.mrb[0].mxu0
    %v1590 = vadd.f32 0.0, %v1589
    %v1591 = vpop.f32.mrb[0].mxu0
    %1592 = vmatprep.mubr.bf16.mxu0 0
    %1593 = vmatmul.mubr.bf16.gmra.mrb[0].mxu0 %v1020
    %v1594 = vpop.f32.mrb[0].mxu0
    %v1595 = vadd.f32 0.0, %v1594
    %v1596 = vpop.f32.mrb[0].mxu0
    %v1597 = vpop.f32.mrb[0].mxu0
    %v1598 = vadd.f32 0.0, %v1597
    %v1599 = vpop.f32.mrb[0].mxu0
    %1600 = vmatprep.mubr.bf16.mxu0 0
    %1601 = vmatmul.mubr.bf16.gmra.mrb[0].mxu0 %v1023
    %v1602 = vpop.f32.mrb[0].mxu0
    %v1603 = vadd.f32 0.0, %v1602
    %v1604 = vpop.f32.mrb[0].mxu0
    %v1605 = vpop.f32.mrb[0].mxu0
    %v1606 = vadd.f32 0.0, %v1605
    %v1607 = vpop.f32.mrb[0].mxu0
    %1608 = vmatprep.mubr.bf16.mxu0 0
    %1609 = vmatmul.mubr.bf16.gmra.mrb[0].mxu0 %v1026
    %v1610 = vpop.f32.mrb[0].mxu0
    %v1611 = vadd.f32 0.0, %v1610
    %v1612 = vpop.f32.mrb[0].mxu0
    %v1613 = vpop.f32.mrb[0].mxu0
    %v1614 = vadd.f32 0.0, %v1613
    %v1615 = vpop.f32.mrb[0].mxu0
    %1616 = vmatprep.mubr.bf16.mxu0 0
    %1617 = vmatmul.mubr.bf16.gmra.mrb[0].mxu0 %v1029
    %v1618 = vpop.f32.mrb[0].mxu0
    %v1619 = vadd.f32 0.0, %v1618
    %v1620 = vpop.f32.mrb[0].mxu0
    %v1621 = vpop.f32.mrb[0].mxu0
    %v1622 = vadd.f32 0.0, %v1621
    %v1623 = vpop.f32.mrb[0].mxu0
    %1624 = vmatprep.mubr.bf16.mxu0 0
    %1625 = vmatmul.mubr.bf16.gmra.mrb[0].mxu0 %v1032
    %v1626 = vpop.f32.mrb[0].mxu0
    %v1627 = vadd.f32 0.0, %v1626
    %v1628 = vpop.f32.mrb[0].mxu0
    %v1629 = vpop.f32.mrb[0].mxu0
    %v1630 = vadd.f32 0.0, %v1629
    %v1631 = vpop.f32.mrb[0].mxu0
    %1632 = vmatprep.mubr.bf16.mxu0 0
    %1633 = vmatmul.mubr.bf16.gmra.mrb[0].mxu0 %v1035
    %v1634 = vpop.f32.mrb[0].mxu0
    %v1635 = vadd.f32 0.0, %v1634
    %v1636 = vpop.f32.mrb[0].mxu0
    %v1637 = vpop.f32.mrb[0].mxu0
    %v1638 = vadd.f32 0.0, %v1637
    %v1639 = vpop.f32.mrb[0].mxu0
    %1640 = vmatprep.mubr.bf16.mxu0 0
    %1641 = vmatmul.mubr.bf16.gmra.mrb[0].mxu0 %v1038
    %v1642 = vpop.f32.mrb[0].mxu0
    %v1643 = vadd.f32 0.0, %v1642
    %v1644 = vpop.f32.mrb[0].mxu0
    %v1645 = vpop.f32.mrb[0].mxu0
    %v1646 = vadd.f32 0.0, %v1645
    %v1647 = vpop.f32.mrb[0].mxu0
    %1648 = vmatprep.mubr.bf16.mxu0 0
    %1649 = vmatmul.mubr.bf16.gmra.mrb[0].mxu0 %v1041
    %v1650 = vpop.f32.mrb[0].mxu0
    %v1651 = vadd.f32 0.0, %v1650
    %v1652 = vpop.f32.mrb[0].mxu0
    %v1653 = vpop.f32.mrb[0].mxu0
    %v1654 = vadd.f32 0.0, %v1653
    %v1655 = vpop.f32.mrb[0].mxu0
    %1656 = vmatprep.mubr.bf16.mxu0 0
    %1657 = vmatmul.mubr.bf16.gmra.mrb[0].mxu0 %v1044
    %v1658 = vpop.f32.mrb[0].mxu0
    %v1659 = vadd.f32 0.0, %v1658
    %v1660 = vpop.f32.mrb[0].mxu0
    %v1661 = vpop.f32.mrb[0].mxu0
    %v1662 = vadd.f32 0.0, %v1661
    %v1663 = vpop.f32.mrb[0].mxu0
    %1664 = vmatprep.mubr.bf16.mxu0 0
    %1665 = vmatmul.mubr.bf16.gmra.mrb[0].mxu0 %v1047
    %v1666 = vpop.f32.mrb[0].mxu0
    %v1667 = vadd.f32 0.0, %v1666
    %v1668 = vpop.f32.mrb[0].mxu0
    %v1669 = vpop.f32.mrb[0].mxu0
    %v1670 = vadd.f32 0.0, %v1669
    %v1671 = vpop.f32.mrb[0].mxu0
    %1672 = vmatprep.mubr.bf16.mxu0 0
    %1673 = vmatmul.mubr.bf16.gmra.mrb[0].mxu0 %v1050
    %v1674 = vpop.f32.mrb[0].mxu0
    %v1675 = vadd.f32 0.0, %v1674
    %v1676 = vpop.f32.mrb[0].mxu0
    %v1677 = vpop.f32.mrb[0].mxu0
    %v1678 = vadd.f32 0.0, %v1677
    %v1679 = vpop.f32.mrb[0].mxu0
    %1680 = vmatprep.mubr.bf16.mxu0 0
    %1681 = vmatmul.mubr.bf16.gmra.mrb[0].mxu0 %v1053
    %v1682 = vpop.f32.mrb[0].mxu0
    %v1683 = vadd.f32 0.0, %v1682
    %v1684 = vpop.f32.mrb[0].mxu0
    %v1685 = vpop.f32.mrb[0].mxu0
    %v1686 = vadd.f32 0.0, %v1685
    %v1687 = vpop.f32.mrb[0].mxu0
    %1688 = vmatprep.mubr.bf16.mxu0 0
    %1689 = vmatmul.mubr.bf16.gmra.mrb[0].mxu0 %v1056
    %v1690 = vpop.f32.mrb[0].mxu0
    %v1691 = vadd.f32 0.0, %v1690
    %v1692 = vpop.f32.mrb[0].mxu0
    %v1693 = vpop.f32.mrb[0].mxu0
    %v1694 = vadd.f32 0.0, %v1693
    %v1695 = vpop.f32.mrb[0].mxu0
    %1696 = vmatprep.mubr.bf16.mxu0 0
    %1697 = vmatmul.mubr.bf16.gmra.mrb[0].mxu0 %v1059
    %v1698 = vpop.f32.mrb[0].mxu0
    %v1699 = vadd.f32 0.0, %v1698
    %v1700 = vpop.f32.mrb[0].mxu0
    %v1701 = vpop.f32.mrb[0].mxu0
    %v1702 = vadd.f32 0.0, %v1701
    %v1703 = vpop.f32.mrb[0].mxu0
    %1704 = vmatprep.mubr.bf16.mxu0 0
    %1705 = vmatmul.mubr.bf16.gmra.mrb[0].mxu0 %v1062
    %v1706 = vpop.f32.mrb[0].mxu0
    %v1707 = vadd.f32 0.0, %v1706
    %v1708 = vpop.f32.mrb[0].mxu0
    %v1709 = vpop.f32.mrb[0].mxu0
    %v1710 = vadd.f32 0.0, %v1709
    %v1711 = vpop.f32.mrb[0].mxu0
    %1712 = vmatprep.mubr.bf16.mxu0 0
    %1713 = vmatmul.mubr.bf16.gmra.mrb[0].mxu0 %v1065
    %v1714 = vpop.f32.mrb[0].mxu0
    %v1715 = vadd.f32 0.0, %v1714
    %v1716 = vpop.f32.mrb[0].mxu0
    %v1717 = vpop.f32.mrb[0].mxu0
    %v1718 = vadd.f32 0.0, %v1717
    %v1719 = vpop.f32.mrb[0].mxu0
    %1720 = vmatprep.mubr.bf16.mxu0 0
    %1721 = vmatmul.mubr.bf16.gmra.mrb[0].mxu0 %v1068
    %v1722 = vpop.f32.mrb[0].mxu0
    %v1723 = vadd.f32 0.0, %v1722
    %v1724 = vpop.f32.mrb[0].mxu0
    %v1725 = vpop.f32.mrb[0].mxu0
    %v1726 = vadd.f32 0.0, %v1725
    %v1727 = vpop.f32.mrb[0].mxu0
    %1728 = vmatprep.mubr.bf16.mxu0 0
    %1729 = vmatmul.mubr.bf16.gmra.mrb[0].mxu0 %v1071
    %v1730 = vpop.f32.mrb[0].mxu0
    %v1731 = vadd.f32 0.0, %v1730
    %v1732 = vpop.f32.mrb[0].mxu0
    %v1733 = vpop.f32.mrb[0].mxu0
    %v1734 = vadd.f32 0.0, %v1733
    %v1735 = vpop.f32.mrb[0].mxu0
    %1736 = vmatprep.mubr.bf16.mxu0 0
    %1737 = vmatmul.mubr.bf16.gmra.mrb[0].mxu0 %v1074
    %v1738 = vpop.f32.mrb[0].mxu0
    %v1739 = vadd.f32 0.0, %v1738
    %v1740 = vpop.f32.mrb[0].mxu0
    %v1741 = vpop.f32.mrb[0].mxu0
    %v1742 = vadd.f32 0.0, %v1741
    %v1743 = vpop.f32.mrb[0].mxu0
    %1744 = vmatprep.mubr.bf16.mxu0 0
    %1745 = vmatmul.mubr.bf16.gmra.mrb[0].mxu0 %v1077
    %v1746 = vpop.f32.mrb[0].mxu0
    %v1747 = vadd.f32 0.0, %v1746
    %v1748 = vpop.f32.mrb[0].mxu0
    %v1749 = vpop.f32.mrb[0].mxu0
    %v1750 = vadd.f32 0.0, %v1749
    %v1751 = vpop.f32.mrb[0].mxu0
    %1752 = vmatprep.mubr.bf16.mxu0 0
    %1753 = vmatmul.mubr.bf16.gmra.mrb[0].mxu0 %v1080
    %v1754 = vpop.f32.mrb[0].mxu0
    %v1755 = vadd.f32 0.0, %v1754
    %v1756 = vpop.f32.mrb[0].mxu0
    %v1757 = vpop.f32.mrb[0].mxu0
    %v1758 = vadd.f32 0.0, %v1757
    %v1759 = vpop.f32.mrb[0].mxu0
    %1760 = vmatprep.mubr.bf16.mxu0 0
    %1761 = vmatmul.mubr.bf16.gmra.mrb[0].mxu0 %v1083
    %v1762 = vpop.f32.mrb[0].mxu0
    %v1763 = vadd.f32 0.0, %v1762
    %v1764 = vpop.f32.mrb[0].mxu0
    %v1765 = vpop.f32.mrb[0].mxu0
    %v1766 = vadd.f32 0.0, %v1765
    %v1767 = vpop.f32.mrb[0].mxu0
    %1768 = vmatprep.mubr.bf16.mxu0 0
    %1769 = vmatmul.mubr.bf16.gmra.mrb[0].mxu0 %v1086
    %v1770 = vpop.f32.mrb[0].mxu0
    %v1771 = vadd.f32 0.0, %v1770
    %v1772 = vpop.f32.mrb[0].mxu0
    %v1773 = vpop.f32.mrb[0].mxu0
    %v1774 = vadd.f32 0.0, %v1773
    %v1775 = vpop.f32.mrb[0].mxu0
    %1776 = vmatprep.mubr.bf16.mxu0 0
    %1777 = vmatmul.mubr.bf16.gmra.mrb[0].mxu0 %v1089
    %v1778 = vpop.f32.mrb[0].mxu0
    %v1779 = vadd.f32 0.0, %v1778
    %v1780 = vpop.f32.mrb[0].mxu0
    %v1781 = vpop.f32.mrb[0].mxu0
    %v1782 = vadd.f32 0.0, %v1781
    %v1783 = vpop.f32.mrb[0].mxu0
    %1784 = vmatprep.mubr.bf16.mxu0 0
    %1785 = vmatmul.mubr.bf16.gmra.mrb[0].mxu0 %v1092
    %v1786 = vpop.f32.mrb[0].mxu0
    %v1787 = vadd.f32 0.0, %v1786
    %v1788 = vpop.f32.mrb[0].mxu0
    %v1789 = vpop.f32.mrb[0].mxu0
    %v1790 = vadd.f32 0.0, %v1789
    %v1791 = vpop.f32.mrb[0].mxu0
    %1792 = vmatprep.mubr.bf16.mxu0 0
    %1793 = vmatmul.mubr.bf16.gmra.mrb[0].mxu0 %v1095
    %v1794 = vpop.f32.mrb[0].mxu0
    %v1795 = vadd.f32 0.0, %v1794
    %v1796 = vpop.f32.mrb[0].mxu0
    %v1797 = vpop.f32.mrb[0].mxu0
    %v1798 = vadd.f32 0.0, %v1797
    %v1799 = vpop.f32.mrb[0].mxu0
    %1800 = vmatprep.mubr.bf16.mxu0 0
    %1801 = vmatmul.mubr.bf16.gmra.mrb[0].mxu0 %v1098
    %v1802 = vpop.f32.mrb[0].mxu0
    %v1803 = vadd.f32 0.0, %v1802
    %v1804 = vpop.f32.mrb[0].mxu0
    %v1805 = vpop.f32.mrb[0].mxu0
    %v1806 = vadd.f32 0.0, %v1805
    %v1807 = vpop.f32.mrb[0].mxu0
    %1808 = vmatprep.mubr.bf16.mxu0 0
    %1809 = vmatmul.mubr.bf16.gmra.mrb[0].mxu0 %v1101
    %v1810 = vpop.f32.mrb[0].mxu0
    %v1811 = vadd.f32 0.0, %v1810
    %v1812 = vpop.f32.mrb[0].mxu0
    %v1813 = vpop.f32.mrb[0].mxu0
    %v1814 = vadd.f32 0.0, %v1813
    %v1815 = vpop.f32.mrb[0].mxu0
    %1816 = vmatprep.mubr.bf16.mxu0 0
    %1817 = vmatmul.mubr.bf16.gmra.mrb[0].mxu0 %v1104
    %v1818 = vpop.f32.mrb[0].mxu0
    %v1819 = vadd.f32 0.0, %v1818
    %v1820 = vpop.f32.mrb[0].mxu0
    %v1821 = vpop.f32.mrb[0].mxu0
    %v1822 = vadd.f32 0.0, %v1821
    %v1823 = vpop.f32.mrb[0].mxu0
    %1824 = vmatprep.mubr.bf16.mxu0 0
    %1825 = vmatmul.mubr.bf16.gmra.mrb[0].mxu0 %v1107
    %v1826 = vpop.f32.mrb[0].mxu0
    %v1827 = vadd.f32 0.0, %v1826
    %v1828 = vpop.f32.mrb[0].mxu0
    %v1829 = vpop.f32.mrb[0].mxu0
    %v1830 = vadd.f32 0.0, %v1829
    %v1831 = vpop.f32.mrb[0].mxu0
    %1832 = vmatprep.mubr.bf16.mxu0 0
    %1833 = vmatmul.mubr.bf16.gmra.mrb[0].mxu0 %v1110
    %v1834 = vpop.f32.mrb[0].mxu0
    %v1835 = vadd.f32 0.0, %v1834
    %v1836 = vpop.f32.mrb[0].mxu0
    %v1837 = vpop.f32.mrb[0].mxu0
    %v1838 = vadd.f32 0.0, %v1837
    %v1839 = vpop.f32.mrb[0].mxu0
    %1840 = vmatprep.mubr.bf16.mxu0 0
    %1841 = vmatmul.mubr.bf16.gmra.mrb[0].mxu0 %v1113
    %v1842 = vpop.f32.mrb[0].mxu0
    %v1843 = vadd.f32 0.0, %v1842
    %v1844 = vpop.f32.mrb[0].mxu0
    %v1845 = vpop.f32.mrb[0].mxu0
    %v1846 = vadd.f32 0.0, %v1845
    %v1847 = vpop.f32.mrb[0].mxu0
    %1848 = vmatprep.mubr.bf16.mxu0 0
    %1849 = vmatmul.mubr.bf16.gmra.mrb[0].mxu0 %v1116
    %v1850 = vpop.f32.mrb[0].mxu0
    %v1851 = vadd.f32 0.0, %v1850
    %v1852 = vpop.f32.mrb[0].mxu0
    %v1853 = vpop.f32.mrb[0].mxu0
    %v1854 = vadd.f32 0.0, %v1853
    %v1855 = vpop.f32.mrb[0].mxu0
    %1856 = vmatprep.mubr.bf16.mxu0 0
    %1857 = vmatmul.mubr.bf16.gmra.mrb[0].mxu0 %v1119
    %v1858 = vpop.f32.mrb[0].mxu0
    %v1859 = vadd.f32 0.0, %v1858
    %v1860 = vpop.f32.mrb[0].mxu0
    %v1861 = vpop.f32.mrb[0].mxu0
    %v1862 = vadd.f32 0.0, %v1861
    %v1863 = vpop.f32.mrb[0].mxu0
    %1864 = vmatprep.mubr.bf16.mxu0 0
    %1865 = vmatmul.mubr.bf16.gmra.mrb[0].mxu0 %v1122
    %v1866 = vpop.f32.mrb[0].mxu0
    %v1867 = vadd.f32 0.0, %v1866
    %v1868 = vpop.f32.mrb[0].mxu0
    %v1869 = vpop.f32.mrb[0].mxu0
    %v1870 = vadd.f32 0.0, %v1869
    %v1871 = vpop.f32.mrb[0].mxu0
    %1872 = vmatprep.mubr.bf16.mxu0 0
    %1873 = vmatmul.mubr.bf16.gmra.mrb[0].mxu0 %v1125
    %v1874 = vpop.f32.mrb[0].mxu0
    %v1875 = vadd.f32 0.0, %v1874
    %v1876 = vpop.f32.mrb[0].mxu0
    %v1877 = vpop.f32.mrb[0].mxu0
    %v1878 = vadd.f32 0.0, %v1877
    %v1879 = vpop.f32.mrb[0].mxu0
    %1880 = vmatprep.mubr.bf16.mxu0 0
    %1881 = vmatmul.mubr.bf16.gmra.mrb[0].mxu0 %v1128
    %v1882 = vpop.f32.mrb[0].mxu0
    %v1883 = vadd.f32 0.0, %v1882
    %v1884 = vpop.f32.mrb[0].mxu0
    %v1885 = vpop.f32.mrb[0].mxu0
    %v1886 = vadd.f32 0.0, %v1885
    %v1887 = vpop.f32.mrb[0].mxu0
    %1888 = vmatprep.mubr.bf16.mxu0 0
    %1889 = vmatmul.mubr.bf16.gmra.mrb[0].mxu0 %v1131
    %v1890 = vpop.f32.mrb[0].mxu0
    %v1891 = vadd.f32 0.0, %v1890
    %v1892 = vpop.f32.mrb[0].mxu0
    %v1893 = vpop.f32.mrb[0].mxu0
    %v1894 = vadd.f32 0.0, %v1893
    %v1895 = vpop.f32.mrb[0].mxu0
    %1896 = vmatprep.mubr.bf16.mxu0 0
    %1897 = vmatmul.mubr.bf16.gmra.mrb[0].mxu0 %v1134
    %v1898 = vpop.f32.mrb[0].mxu0
    %v1899 = vadd.f32 0.0, %v1898
    %v1900 = vpop.f32.mrb[0].mxu0
    %v1901 = vpop.f32.mrb[0].mxu0
    %v1902 = vadd.f32 0.0, %v1901
    %v1903 = vpop.f32.mrb[0].mxu0
    %1904 = vmatprep.mubr.bf16.mxu0 0
    %1905 = vmatmul.mubr.bf16.gmra.mrb[0].mxu0 %v1137
    %v1906 = vpop.f32.mrb[0].mxu0
    %v1907 = vadd.f32 0.0, %v1906
    %v1908 = vpop.f32.mrb[0].mxu0
    %v1909 = vpop.f32.mrb[0].mxu0
    %v1910 = vadd.f32 0.0, %v1909
    %v1911 = vpop.f32.mrb[0].mxu0
    %1912 = vmatprep.mubr.bf16.mxu0 0
    %1913 = vmatmul.mubr.bf16.gmra.mrb[0].mxu0 %v1140
    %v1914 = vpop.f32.mrb[0].mxu0
    %v1915 = vadd.f32 0.0, %v1914
    %v1916 = vpop.f32.mrb[0].mxu0
    %v1917 = vpop.f32.mrb[0].mxu0
    %v1918 = vadd.f32 0.0, %v1917
    %v1919 = vpop.f32.mrb[0].mxu0
    %1920 = vmatprep.mubr.bf16.mxu0 0
    %1921 = vmatmul.mubr.bf16.gmra.mrb[0].mxu0 %v1143
    %v1922 = vpop.f32.mrb[0].mxu0
    %v1923 = vadd.f32 0.0, %v1922
    %v1924 = vpop.f32.mrb[0].mxu0
    %v1925 = vpop.f32.mrb[0].mxu0
    %v1926 = vadd.f32 0.0, %v1925
    %v1927 = vpop.f32.mrb[0].mxu0
    %1928 = vmatprep.mubr.bf16.mxu0 0
    %1929 = vmatmul.mubr.bf16.gmra.mrb[0].mxu0 %v1146
    %v1930 = vpop.f32.mrb[0].mxu0
    %v1931 = vadd.f32 0.0, %v1930
    %v1932 = vpop.f32.mrb[0].mxu0
    %v1933 = vpop.f32.mrb[0].mxu0
    %v1934 = vadd.f32 0.0, %v1933
    %v1935 = vpop.f32.mrb[0].mxu0
    %1936 = vmatprep.mubr.bf16.mxu0 0
    %1937 = vmatmul.mubr.bf16.gmra.mrb[0].mxu0 %v1149
    %v1938 = vpop.f32.mrb[0].mxu0
    %v1939 = vadd.f32 0.0, %v1938
    %v1940 = vpop.f32.mrb[0].mxu0
    %v1941 = vpop.f32.mrb[0].mxu0
    %v1942 = vadd.f32 0.0, %v1941
    %v1943 = vpop.f32.mrb[0].mxu0
    %1944 = vmatprep.mubr.bf16.mxu0 0
    %1945 = vmatmul.mubr.bf16.gmra.mrb[0].mxu0 %v1152
    %v1946 = vpop.f32.mrb[0].mxu0
    %v1947 = vadd.f32 0.0, %v1946
    %v1948 = vpop.f32.mrb[0].mxu0
    %v1949 = vpop.f32.mrb[0].mxu0
    %v1950 = vadd.f32 0.0, %v1949
    %v1951 = vpop.f32.mrb[0].mxu0
    %1952 = vmatprep.mubr.bf16.mxu0 0
    %1953 = vmatmul.mubr.bf16.gmra.mrb[0].mxu0 %v1155
    %v1954 = vpop.f32.mrb[0].mxu0
    %v1955 = vadd.f32 0.0, %v1954
    %v1956 = vpop.f32.mrb[0].mxu0
    %v1957 = vpop.f32.mrb[0].mxu0
    %v1958 = vadd.f32 0.0, %v1957
    %v1959 = vpop.f32.mrb[0].mxu0
    %1960 = vmatprep.mubr.bf16.mxu0 0
    %1961 = vmatmul.mubr.bf16.gmra.mrb[0].mxu0 %v1158
    %v1962 = vpop.f32.mrb[0].mxu0
    %v1963 = vadd.f32 0.0, %v1962
    %v1964 = vpop.f32.mrb[0].mxu0
    %v1965 = vpop.f32.mrb[0].mxu0
    %v1966 = vadd.f32 0.0, %v1965
    %v1967 = vpop.f32.mrb[0].mxu0
    %1968 = vmatprep.mubr.bf16.mxu0 0
    %1969 = vmatmul.mubr.bf16.gmra.mrb[0].mxu0 %v1161
    %v1970 = vpop.f32.mrb[0].mxu0
    %v1971 = vadd.f32 0.0, %v1970
    %v1972 = vpop.f32.mrb[0].mxu0
    %v1973 = vpop.f32.mrb[0].mxu0
    %v1974 = vadd.f32 0.0, %v1973
    %v1975 = vpop.f32.mrb[0].mxu0
    %1976 = vmatprep.mubr.bf16.mxu0 0
    %1977 = vmatmul.mubr.bf16.gmra.mrb[0].mxu0 %v1164
    %v1978 = vpop.f32.mrb[0].mxu0
    %v1979 = vadd.f32 0.0, %v1978
    %v1980 = vpop.f32.mrb[0].mxu0
    %v1981 = vpop.f32.mrb[0].mxu0
    %v1982 = vadd.f32 0.0, %v1981
    %v1983 = vpop.f32.mrb[0].mxu0
    %1984 = vmatprep.mubr.bf16.mxu0 0
    %1985 = vmatmul.mubr.bf16.gmra.mrb[0].mxu0 %v1167
    %v1986 = vpop.f32.mrb[0].mxu0
    %v1987 = vadd.f32 0.0, %v1986
    %v1988 = vpop.f32.mrb[0].mxu0
    %v1989 = vpop.f32.mrb[0].mxu0
    %v1990 = vadd.f32 0.0, %v1989
    %v1991 = vpop.f32.mrb[0].mxu0
    %1992 = vmatprep.mubr.bf16.mxu0 0
    %1993 = vmatmul.mubr.bf16.gmra.mrb[0].mxu0 %v1170
    %v1994 = vpop.f32.mrb[0].mxu0
    %v1995 = vadd.f32 0.0, %v1994
    %v1996 = vpop.f32.mrb[0].mxu0
    %v1997 = vpop.f32.mrb[0].mxu0
    %v1998 = vadd.f32 0.0, %v1997
    %v1999 = vpop.f32.mrb[0].mxu0
    %2000 = vmatprep.mubr.bf16.mxu0 0
    %2001 = vmatmul.mubr.bf16.gmra.mrb[0].mxu0 %v1173
    %v2002 = vpop.f32.mrb[0].mxu0
    %v2003 = vadd.f32 0.0, %v2002
    %v2004 = vpop.f32.mrb[0].mxu0
    %v2005 = vpop.f32.mrb[0].mxu0
    %v2006 = vadd.f32 0.0, %v2005
    %v2007 = vpop.f32.mrb[0].mxu0
    %2008 = vmatprep.mubr.bf16.mxu0 0
    %2009 = vmatmul.mubr.bf16.gmra.mrb[0].mxu0 %v1176
    %v2010 = vpop.f32.mrb[0].mxu0
    %v2011 = vadd.f32 0.0, %v2010
    %v2012 = vpop.f32.mrb[0].mxu0
    %v2013 = vpop.f32.mrb[0].mxu0
    %v2014 = vadd.f32 0.0, %v2013
    %v2015 = vpop.f32.mrb[0].mxu0
    %2016 = vmatprep.mubr.bf16.mxu0 0
    %2017 = vmatmul.mubr.bf16.gmra.mrb[0].mxu0 %v1179
    %v2018 = vpop.f32.mrb[0].mxu0
    %v2019 = vadd.f32 0.0, %v2018
    %v2020 = vpop.f32.mrb[0].mxu0
    %v2021 = vpop.f32.mrb[0].mxu0
    %v2022 = vadd.f32 0.0, %v2021
    %v2023 = vpop.f32.mrb[0].mxu0
    %2024 = vmatprep.mubr.bf16.mxu0 0
    %2025 = vmatmul.mubr.bf16.gmra.mrb[0].mxu0 %v1182
    %v2026 = vpop.f32.mrb[0].mxu0
    %v2027 = vadd.f32 0.0, %v2026
    %v2028 = vpop.f32.mrb[0].mxu0
    %v2029 = vpop.f32.mrb[0].mxu0
    %v2030 = vadd.f32 0.0, %v2029
    %v2031 = vpop.f32.mrb[0].mxu0
    %2032 = vmatprep.mubr.bf16.mxu0 0
    %2033 = vmatmul.mubr.bf16.gmra.mrb[0].mxu0 %v1185
    %v2034 = vpop.f32.mrb[0].mxu0
    %v2035 = vadd.f32 0.0, %v2034
    %v2036 = vpop.f32.mrb[0].mxu0
    %v2037 = vpop.f32.mrb[0].mxu0
    %v2038 = vadd.f32 0.0, %v2037
    %v2039 = vpop.f32.mrb[0].mxu0
    %2040 = vmatprep.mubr.bf16.mxu0 0
    %2041 = vmatmul.mubr.bf16.gmra.mrb[0].mxu0 %v1188
    %v2042 = vpop.f32.mrb[0].mxu0
    %v2043 = vadd.f32 0.0, %v2042
    %v2044 = vpop.f32.mrb[0].mxu0
    %v2045 = vpop.f32.mrb[0].mxu0
    %v2046 = vadd.f32 0.0, %v2045
    %v2047 = vpop.f32.mrb[0].mxu0
    %2048 = vmatprep.mubr.bf16.mxu0 0
    %2049 = vmatmul.mubr.bf16.gmra.mrb[0].mxu0 %v1191
    %v2050 = vpop.f32.mrb[0].mxu0
    %v2051 = vadd.f32 0.0, %v2050
    %v2052 = vpop.f32.mrb[0].mxu0
    %v2053 = vpop.f32.mrb[0].mxu0
    %v2054 = vadd.f32 0.0, %v2053
    %v2055 = vpop.f32.mrb[0].mxu0
    %2056 = vmatprep.mubr.bf16.mxu0 0
    %2057 = vmatmul.mubr.bf16.gmra.mrb[0].mxu0 %v1194
    %v2058 = vpop.f32.mrb[0].mxu0
    %v2059 = vadd.f32 0.0, %v2058
    %v2060 = vpop.f32.mrb[0].mxu0
    %v2061 = vpop.f32.mrb[0].mxu0
    %v2062 = vadd.f32 0.0, %v2061
    %v2063 = vpop.f32.mrb[0].mxu0
    %2064 = vmatprep.mubr.bf16.mxu0 0
    %2065 = vmatmul.mubr.bf16.gmra.mrb[0].mxu0 %v1197
    %v2066 = vpop.f32.mrb[0].mxu0
    %v2067 = vadd.f32 0.0, %v2066
    %v2068 = vpop.f32.mrb[0].mxu0
    %v2069 = vpop.f32.mrb[0].mxu0
    %v2070 = vadd.f32 0.0, %v2069
    %v2071 = vpop.f32.mrb[0].mxu0
    %2072 = vmatprep.mubr.bf16.mxu0 0
    %2073 = vmatmul.mubr.bf16.gmra.mrb[0].mxu0 %v1200
    %v2074 = vpop.f32.mrb[0].mxu0
    %v2075 = vadd.f32 0.0, %v2074
    %v2076 = vpop.f32.mrb[0].mxu0
    %v2077 = vpop.f32.mrb[0].mxu0
    %v2078 = vadd.f32 0.0, %v2077
    %v2079 = vpop.f32.mrb[0].mxu0
    %2080 = vmatprep.mubr.bf16.mxu0 0
    %2081 = vmatmul.mubr.bf16.gmra.mrb[0].mxu0 %v1203
    %v2082 = vpop.f32.mrb[0].mxu0
    %v2083 = vadd.f32 0.0, %v2082
    %v2084 = vpop.f32.mrb[0].mxu0
    %v2085 = vpop.f32.mrb[0].mxu0
    %v2086 = vadd.f32 0.0, %v2085
    %v2087 = vpop.f32.mrb[0].mxu0
    %2088 = vmatprep.mubr.bf16.mxu0 0
    %2089 = vmatmul.mubr.bf16.gmra.mrb[0].mxu0 %v1206
    %v2090 = vpop.f32.mrb[0].mxu0
    %v2091 = vadd.f32 0.0, %v2090
    %v2092 = vpop.f32.mrb[0].mxu0
    %v2093 = vpop.f32.mrb[0].mxu0
    %v2094 = vadd.f32 0.0, %v2093
    %v2095 = vpop.f32.mrb[0].mxu0
    %2096 = vmatprep.mubr.bf16.mxu0 0
    %2097 = vmatmul.mubr.bf16.gmra.mrb[0].mxu0 %v1209
    %v2098 = vpop.f32.mrb[0].mxu0
    %v2099 = vadd.f32 0.0, %v2098
    %v2100 = vpop.f32.mrb[0].mxu0
    %v2101 = vpop.f32.mrb[0].mxu0
    %v2102 = vadd.f32 0.0, %v2101
    %v2103 = vpop.f32.mrb[0].mxu0
    %2104 = vmatprep.mubr.bf16.mxu0 0
    %2105 = vmatmul.mubr.bf16.gmra.mrb[0].mxu0 %v1212
    %v2106 = vpop.f32.mrb[0].mxu0
    %v2107 = vadd.f32 0.0, %v2106
    %v2108 = vpop.f32.mrb[0].mxu0
    %v2109 = vpop.f32.mrb[0].mxu0
    %v2110 = vadd.f32 0.0, %v2109
    %v2111 = vpop.f32.mrb[0].mxu0
    %2112 = vmatprep.mubr.bf16.mxu0 0
    %2113 = vmatmul.mubr.bf16.gmra.mrb[0].mxu0 %v1215
    %v2114 = vpop.f32.mrb[0].mxu0
    %v2115 = vadd.f32 0.0, %v2114
    %v2116 = vpop.f32.mrb[0].mxu0
    %v2117 = vpop.f32.mrb[0].mxu0
    %v2118 = vadd.f32 0.0, %v2117
    %v2119 = vpop.f32.mrb[0].mxu0
    %2120 = vmatprep.mubr.bf16.mxu0 0
    %2121 = vmatmul.mubr.bf16.gmra.mrb[0].mxu0 %v1218
    %v2122 = vpop.f32.mrb[0].mxu0
    %v2123 = vadd.f32 0.0, %v2122
    %v2124 = vpop.f32.mrb[0].mxu0
    %v2125 = vpop.f32.mrb[0].mxu0
    %v2126 = vadd.f32 0.0, %v2125
    %v2127 = vpop.f32.mrb[0].mxu0
    %2128 = vmatprep.mubr.bf16.mxu0 0
    %2129 = vmatmul.mubr.bf16.gmra.mrb[0].mxu0 %v1221
    %v2130 = vpop.f32.mrb[0].mxu0
    %v2131 = vadd.f32 0.0, %v2130
    %v2132 = vpop.f32.mrb[0].mxu0
    %v2133 = vpop.f32.mrb[0].mxu0
    %v2134 = vadd.f32 0.0, %v2133
    %v2135 = vpop.f32.mrb[0].mxu0
    %2136 = vmatprep.mubr.bf16.mxu0 0
    %2137 = vmatmul.mubr.bf16.gmra.mrb[0].mxu0 %v1224
    %v2138 = vpop.f32.mrb[0].mxu0
    %v2139 = vadd.f32 0.0, %v2138
    %v2140 = vpop.f32.mrb[0].mxu0
    %v2141 = vpop.f32.mrb[0].mxu0
    %v2142 = vadd.f32 0.0, %v2141
    %v2143 = vpop.f32.mrb[0].mxu0
    %2144 = vmatprep.mubr.bf16.mxu0 0
    %2145 = vmatmul.mubr.bf16.gmra.mrb[0].mxu0 %v1227
    %v2146 = vpop.f32.mrb[0].mxu0
    %v2147 = vadd.f32 0.0, %v2146
    %v2148 = vpop.f32.mrb[0].mxu0
    %v2149 = vpop.f32.mrb[0].mxu0
    %v2150 = vadd.f32 0.0, %v2149
    %v2151 = vpop.f32.mrb[0].mxu0
    %2152 = vmatprep.mubr.bf16.mxu0 0
    %2153 = vmatmul.mubr.bf16.gmra.mrb[0].mxu0 %v1230
    %v2154 = vpop.f32.mrb[0].mxu0
    %v2155 = vadd.f32 0.0, %v2154
    %v2156 = vpop.f32.mrb[0].mxu0
    %v2157 = vpop.f32.mrb[0].mxu0
    %v2158 = vadd.f32 0.0, %v2157
    %v2159 = vpop.f32.mrb[0].mxu0
    %2160 = vmatprep.mubr.bf16.mxu0 0
    %2161 = vmatmul.mubr.bf16.gmra.mrb[0].mxu0 %v1233
    %v2162 = vpop.f32.mrb[0].mxu0
    %v2163 = vadd.f32 0.0, %v2162
    %v2164 = vpop.f32.mrb[0].mxu0
    %v2165 = vpop.f32.mrb[0].mxu0
    %v2166 = vadd.f32 0.0, %v2165
    %v2167 = vpop.f32.mrb[0].mxu0
    %2168 = vmatprep.mubr.bf16.mxu0 0
    %2169 = vmatmul.mubr.bf16.gmra.mrb[0].mxu0 %v1236
    %v2170 = vpop.f32.mrb[0].mxu0
    %v2171 = vadd.f32 0.0, %v2170
    %v2172 = vpop.f32.mrb[0].mxu0
    %v2173 = vpop.f32.mrb[0].mxu0
    %v2174 = vadd.f32 0.0, %v2173
    %v2175 = vpop.f32.mrb[0].mxu0
    %2176 = vmatprep.mubr.bf16.mxu0 0
    %2177 = vmatmul.mubr.bf16.gmra.mrb[0].mxu0 %v1239
    %v2178 = vpop.f32.mrb[0].mxu0
    %v2179 = vadd.f32 0.0, %v2178
    %v2180 = vpop.f32.mrb[0].mxu0
    %v2181 = vpop.f32.mrb[0].mxu0
    %v2182 = vadd.f32 0.0, %v2181
    %v2183 = vpop.f32.mrb[0].mxu0
    %2184 = vmatprep.mubr.bf16.mxu0 0
    %2185 = vmatmul.mubr.bf16.gmra.mrb[0].mxu0 %v1242
    %v2186 = vpop.f32.mrb[0].mxu0
    %v2187 = vadd.f32 0.0, %v2186
    %v2188 = vpop.f32.mrb[0].mxu0
    %v2189 = vpop.f32.mrb[0].mxu0
    %v2190 = vadd.f32 0.0, %v2189
    %v2191 = vpop.f32.mrb[0].mxu0
    %2192 = vmatprep.mubr.bf16.mxu0 0
    %2193 = vmatmul.mubr.bf16.gmra.mrb[0].mxu0 %v1245
    %v2194 = vpop.f32.mrb[0].mxu0
    %v2195 = vadd.f32 0.0, %v2194
    %v2196 = vpop.f32.mrb[0].mxu0
    %v2197 = vpop.f32.mrb[0].mxu0
    %v2198 = vadd.f32 0.0, %v2197
    %v2199 = vpop.f32.mrb[0].mxu0
    %2200 = vmatprep.mubr.bf16.mxu0 0
    %2201 = vmatmul.mubr.bf16.gmra.mrb[0].mxu0 %v1248
    %v2202 = vpop.f32.mrb[0].mxu0
    %v2203 = vadd.f32 0.0, %v2202
    %v2204 = vpop.f32.mrb[0].mxu0
    %v2205 = vpop.f32.mrb[0].mxu0
    %v2206 = vadd.f32 0.0, %v2205
    %v2207 = vpop.f32.mrb[0].mxu0
    %2208 = vmatprep.mubr.bf16.mxu0 0
    %2209 = vmatmul.mubr.bf16.gmra.mrb[0].mxu0 %v1251
    %v2210 = vpop.f32.mrb[0].mxu0
    %v2211 = vadd.f32 0.0, %v2210
    %v2212 = vpop.f32.mrb[0].mxu0
    %v2213 = vpop.f32.mrb[0].mxu0
    %v2214 = vadd.f32 0.0, %v2213
    %v2215 = vpop.f32.mrb[0].mxu0
    %2216 = vmatprep.mubr.bf16.mxu0 0
    %2217 = vmatmul.mubr.bf16.gmra.mrb[0].mxu0 %v1254
    %v2218 = vpop.f32.mrb[0].mxu0
    %v2219 = vadd.f32 0.0, %v2218
    %v2220 = vpop.f32.mrb[0].mxu0
    %v2221 = vpop.f32.mrb[0].mxu0
    %v2222 = vadd.f32 0.0, %v2221
    %v2223 = vpop.f32.mrb[0].mxu0
    %2224 = vmatprep.mubr.bf16.mxu0 0
    %2225 = vmatmul.mubr.bf16.gmra.mrb[0].mxu0 %v1257
    %v2226 = vpop.f32.mrb[0].mxu0
    %v2227 = vadd.f32 0.0, %v2226
    %v2228 = vpop.f32.mrb[0].mxu0
    %v2229 = vpop.f32.mrb[0].mxu0
    %v2230 = vadd.f32 0.0, %v2229
    %v2231 = vpop.f32.mrb[0].mxu0
    %2232 = vmatprep.mubr.bf16.mxu0 0
    %2233 = vmatmul.mubr.bf16.gmra.mrb[0].mxu0 %v1260
    %v2234 = vpop.f32.mrb[0].mxu0
    %v2235 = vadd.f32 0.0, %v2234
    %v2236 = vpop.f32.mrb[0].mxu0
    %v2237 = vpop.f32.mrb[0].mxu0
    %v2238 = vadd.f32 0.0, %v2237
    %v2239 = vpop.f32.mrb[0].mxu0
    %2240 = vmatprep.mubr.bf16.mxu0 0
    %2241 = vmatmul.mubr.bf16.gmra.mrb[0].mxu0 %v1263
    %v2242 = vpop.f32.mrb[0].mxu0
    %v2243 = vadd.f32 0.0, %v2242
    %v2244 = vpop.f32.mrb[0].mxu0
    %v2245 = vpop.f32.mrb[0].mxu0
    %v2246 = vadd.f32 0.0, %v2245
    %v2247 = vpop.f32.mrb[0].mxu0
    %2248 = vmatprep.mubr.bf16.mxu0 0
    %2249 = vmatmul.mubr.bf16.gmra.mrb[0].mxu0 %v1266
    %v2250 = vpop.f32.mrb[0].mxu0
    %v2251 = vadd.f32 0.0, %v2250
    %v2252 = vpop.f32.mrb[0].mxu0
    %v2253 = vpop.f32.mrb[0].mxu0
    %v2254 = vadd.f32 0.0, %v2253
    %v2255 = vpop.f32.mrb[0].mxu0
    %2256 = vmatprep.mubr.bf16.mxu0 0
    %2257 = vmatmul.mubr.bf16.gmra.mrb[0].mxu0 %v1269
    %v2258 = vpop.f32.mrb[0].mxu0
    %v2259 = vadd.f32 0.0, %v2258
    %v2260 = vpop.f32.mrb[0].mxu0
    %v2261 = vpop.f32.mrb[0].mxu0
    %v2262 = vadd.f32 0.0, %v2261
    %v2263 = vpop.f32.mrb[0].mxu0
    %2264 = vmatprep.mubr.bf16.mxu0 0
    %2265 = vmatmul.mubr.bf16.gmra.mrb[0].mxu0 %v1272
    %v2266 = vpop.f32.mrb[0].mxu0
    %v2267 = vadd.f32 0.0, %v2266
    %v2268 = vpop.f32.mrb[0].mxu0
    %v2269 = vpop.f32.mrb[0].mxu0
    %v2270 = vadd.f32 0.0, %v2269
    %v2271 = vpop.f32.mrb[0].mxu0
    %2272 = vmatprep.mubr.bf16.mxu0 0
    %2273 = vmatmul.mubr.bf16.gmra.mrb[0].mxu0 %v1275
    %v2274 = vpop.f32.mrb[0].mxu0
    %v2275 = vadd.f32 0.0, %v2274
    %v2276 = vpop.f32.mrb[0].mxu0
    %v2277 = vpop.f32.mrb[0].mxu0
    %v2278 = vadd.f32 0.0, %v2277
    %v2279 = vpop.f32.mrb[0].mxu0
    %2280 = vmatprep.mubr.bf16.mxu0 0
    %2281 = vmatmul.mubr.bf16.gmra.mrb[0].mxu0 %v1278
    %v2282 = vpop.f32.mrb[0].mxu0
    %v2283 = vadd.f32 0.0, %v2282
    %v2284 = vpop.f32.mrb[0].mxu0
    %v2285 = vpop.f32.mrb[0].mxu0
    %v2286 = vadd.f32 0.0, %v2285
    %v2287 = vpop.f32.mrb[0].mxu0
    %2288 = vmatprep.mubr.bf16.mxu0 0
    %2289 = vmatmul.mubr.bf16.gmra.mrb[0].mxu0 %v1281
    %v2290 = vpop.f32.mrb[0].mxu0
    %v2291 = vadd.f32 0.0, %v2290
    %v2292 = vpop.f32.mrb[0].mxu0
    %v2293 = vpop.f32.mrb[0].mxu0
    %v2294 = vadd.f32 0.0, %v2293
    %v2295 = vpop.f32.mrb[0].mxu0
    %2296 = vmatprep.mubr.bf16.mxu0 0
    %2297 = vmatmul.mubr.bf16.gmra.mrb[0].mxu0 %v1284
    %v2298 = vpop.f32.mrb[0].mxu0
    %v2299 = vadd.f32 0.0, %v2298
    %v2300 = vpop.f32.mrb[0].mxu0
    %v2301 = vpop.f32.mrb[0].mxu0
    %v2302 = vadd.f32 0.0, %v2301
    %v2303 = vpop.f32.mrb[0].mxu0
    %2304 = vmatprep.mubr.bf16.mxu0 0
    %2305 = vmatmul.mubr.bf16.gmra.mrb[0].mxu0 %v1287
    %v2306 = vpop.f32.mrb[0].mxu0
    %v2307 = vadd.f32 0.0, %v2306
    %v2308 = vpop.f32.mrb[0].mxu0
    %v2309 = vpop.f32.mrb[0].mxu0
    %v2310 = vadd.f32 0.0, %v2309
    %v2311 = vpop.f32.mrb[0].mxu0
    %2312 = vmatprep.mubr.bf16.mxu0 0
    %2313 = vmatmul.mubr.bf16.gmra.mrb[0].mxu0 %v1290
    %v2314 = vpop.f32.mrb[0].mxu0
    %v2315 = vadd.f32 0.0, %v2314
    %v2316 = vpop.f32.mrb[0].mxu0
    %v2317 = vpop.f32.mrb[0].mxu0
    %v2318 = vadd.f32 0.0, %v2317
    %v2319 = vpop.f32.mrb[0].mxu0
    %2320 = vmatprep.mubr.bf16.mxu0 0
    %2321 = vmatmul.mubr.bf16.gmra.mrb[0].mxu0 %v1293
    %v2322 = vpop.f32.mrb[0].mxu0
    %v2323 = vadd.f32 0.0, %v2322
    %v2324 = vpop.f32.mrb[0].mxu0
    %v2325 = vpop.f32.mrb[0].mxu0
    %v2326 = vadd.f32 0.0, %v2325
    %v2327 = vpop.f32.mrb[0].mxu0
    %2328 = vmatprep.mubr.bf16.mxu0 0
    %2329 = vmatmul.mubr.bf16.gmra.mrb[0].mxu0 %v1296
    %v2330 = vpop.f32.mrb[0].mxu0
    %v2331 = vadd.f32 0.0, %v2330
    %v2332 = vpop.f32.mrb[0].mxu0
    %v2333 = vpop.f32.mrb[0].mxu0
    %v2334 = vadd.f32 0.0, %v2333
    %v2335 = vpop.f32.mrb[0].mxu0
    %2336 = vmatprep.mubr.bf16.mxu0 0
    %2337 = vmatmul.mubr.bf16.gmra.mrb[0].mxu0 %v1299
    %v2338 = vpop.f32.mrb[0].mxu0
    %v2339 = vadd.f32 0.0, %v2338
    %v2340 = vpop.f32.mrb[0].mxu0
    %v2341 = vpop.f32.mrb[0].mxu0
    %v2342 = vadd.f32 0.0, %v2341
    %v2343 = vpop.f32.mrb[0].mxu0
    %2344 = vmatprep.mubr.bf16.mxu0 0
    %2345 = vmatmul.mubr.bf16.gmra.mrb[0].mxu0 %v1302
    %v2346 = vpop.f32.mrb[0].mxu0
    %v2347 = vadd.f32 0.0, %v2346
    %v2348 = vpop.f32.mrb[0].mxu0
    %v2349 = vpop.f32.mrb[0].mxu0
    %v2350 = vadd.f32 0.0, %v2349
    %v2351 = vpop.f32.mrb[0].mxu0
    %2352 = vmatprep.mubr.bf16.mxu0 0
    %2353 = vmatmul.mubr.bf16.gmra.mrb[0].mxu0 %v1305
    %v2354 = vpop.f32.mrb[0].mxu0
    %v2355 = vadd.f32 0.0, %v2354
    %v2356 = vpop.f32.mrb[0].mxu0
    %v2357 = vpop.f32.mrb[0].mxu0
    %v2358 = vadd.f32 0.0, %v2357
    %v2359 = vpop.f32.mrb[0].mxu0
    %2360 = vmatprep.mubr.bf16.mxu0 0
    %2361 = vmatmul.mubr.bf16.gmra.mrb[0].mxu0 %v1308
    %v2362 = vpop.f32.mrb[0].mxu0
    %v2363 = vadd.f32 0.0, %v2362
    %v2364 = vpop.f32.mrb[0].mxu0
    %v2365 = vpop.f32.mrb[0].mxu0
    %v2366 = vadd.f32 0.0, %v2365
    %v2367 = vpop.f32.mrb[0].mxu0
    %2368 = vmatprep.mubr.bf16.mxu0 0
    %2369 = vmatmul.mubr.bf16.gmra.mrb[0].mxu0 %v1311
    %v2370 = vpop.f32.mrb[0].mxu0
    %v2371 = vadd.f32 0.0, %v2370
    %v2372 = vpop.f32.mrb[0].mxu0
    %v2373 = vpop.f32.mrb[0].mxu0
    %v2374 = vadd.f32 0.0, %v2373
    %v2375 = vpop.f32.mrb[0].mxu0
    %2376 = vdwg.mxu0
    %vm2377 = vcmask 130048
    %v2378 = vsel %vm2377, %v1355, 0.0
    %v2379 = vsel %vm2377, %v1358, 0.0
    %v2380 = vadd.f32 %v2378, %v2379
    %v2381 = vsel %vm2377, %v1363, 0.0
    %v2382 = vadd.f32 %v2380, %v2381
    %v2383 = vsel %vm2377, %v1366, 0.0
    %v2384 = vadd.f32 %v2382, %v2383
    %v2385 = vsel %vm2377, %v1371, 0.0
    %v2386 = vadd.f32 %v2384, %v2385
    %v2387 = vsel %vm2377, %v1374, 0.0
    %v2388 = vadd.f32 %v2386, %v2387
    %v2389 = vsel %vm2377, %v1379, 0.0
    %v2390 = vadd.f32 %v2388, %v2389
    %v2391 = vsel %vm2377, %v1382, 0.0
    %v2392 = vadd.f32 %v2390, %v2391
    %v2393 = vsel %vm2377, %v1387, 0.0
    %v2394 = vadd.f32 %v2392, %v2393
    %v2395 = vsel %vm2377, %v1390, 0.0
    %v2396 = vadd.f32 %v2394, %v2395
    %v2397 = vsel %vm2377, %v1395, 0.0
    %v2398 = vadd.f32 %v2396, %v2397
    %v2399 = vsel %vm2377, %v1398, 0.0
    %v2400 = vadd.f32 %v2398, %v2399
    %v2401 = vsel %vm2377, %v1403, 0.0
    %v2402 = vadd.f32 %v2400, %v2401
    %v2403 = vsel %vm2377, %v1406, 0.0
    %v2404 = vadd.f32 %v2402, %v2403
    %v2405 = vsel %vm2377, %v1411, 0.0
    %v2406 = vadd.f32 %v2404, %v2405
    %v2407 = vsel %vm2377, %v1414, 0.0
    %v2408 = vadd.f32 %v2406, %v2407
    %v2409 = vsel %vm2377, %v1419, 0.0
    %v2410 = vadd.f32 %v2408, %v2409
    %v2411 = vsel %vm2377, %v1422, 0.0
    %v2412 = vadd.f32 %v2410, %v2411
    %v2413 = vsel %vm2377, %v1427, 0.0
    %v2414 = vadd.f32 %v2412, %v2413
    %v2415 = vsel %vm2377, %v1430, 0.0
    %v2416 = vadd.f32 %v2414, %v2415
    %v2417 = vsel %vm2377, %v1435, 0.0
    %v2418 = vadd.f32 %v2416, %v2417
    %v2419 = vsel %vm2377, %v1438, 0.0
    %v2420 = vadd.f32 %v2418, %v2419
    %v2421 = vsel %vm2377, %v1443, 0.0
    %v2422 = vadd.f32 %v2420, %v2421
    %v2423 = vsel %vm2377, %v1446, 0.0
    %v2424 = vadd.f32 %v2422, %v2423
    %v2425 = vsel %vm2377, %v1451, 0.0
    %v2426 = vadd.f32 %v2424, %v2425
    %v2427 = vsel %vm2377, %v1454, 0.0
    %v2428 = vadd.f32 %v2426, %v2427
    %v2429 = vsel %vm2377, %v1459, 0.0
    %v2430 = vadd.f32 %v2428, %v2429
    %v2431 = vsel %vm2377, %v1462, 0.0
    %v2432 = vadd.f32 %v2430, %v2431
    %v2433 = vsel %vm2377, %v1467, 0.0
    %v2434 = vadd.f32 %v2432, %v2433
    %v2435 = vsel %vm2377, %v1470, 0.0
    %v2436 = vadd.f32 %v2434, %v2435
    %v2437 = vsel %vm2377, %v1475, 0.0
    %v2438 = vadd.f32 %v2436, %v2437
    %v2439 = vsel %vm2377, %v1478, 0.0
    %v2440 = vadd.f32 %v2438, %v2439
    %v2441 = vsel %vm2377, %v1483, 0.0
    %v2442 = vadd.f32 %v2440, %v2441
    %v2443 = vsel %vm2377, %v1486, 0.0
    %v2444 = vadd.f32 %v2442, %v2443
    %v2445 = vsel %vm2377, %v1491, 0.0
    %v2446 = vadd.f32 %v2444, %v2445
    %v2447 = vsel %vm2377, %v1494, 0.0
    %v2448 = vadd.f32 %v2446, %v2447
    %v2449 = vsel %vm2377, %v1499, 0.0
    %v2450 = vadd.f32 %v2448, %v2449
    %v2451 = vsel %vm2377, %v1502, 0.0
    %v2452 = vadd.f32 %v2450, %v2451
    %v2453 = vsel %vm2377, %v1507, 0.0
    %v2454 = vadd.f32 %v2452, %v2453
    %v2455 = vsel %vm2377, %v1510, 0.0
    %v2456 = vadd.f32 %v2454, %v2455
    %v2457 = vsel %vm2377, %v1515, 0.0
    %v2458 = vadd.f32 %v2456, %v2457
    %v2459 = vsel %vm2377, %v1518, 0.0
    %v2460 = vadd.f32 %v2458, %v2459
    %v2461 = vsel %vm2377, %v1523, 0.0
    %v2462 = vadd.f32 %v2460, %v2461
    %v2463 = vsel %vm2377, %v1526, 0.0
    %v2464 = vadd.f32 %v2462, %v2463
    %v2465 = vsel %vm2377, %v1531, 0.0
    %v2466 = vadd.f32 %v2464, %v2465
    %v2467 = vsel %vm2377, %v1534, 0.0
    %v2468 = vadd.f32 %v2466, %v2467
    %v2469 = vsel %vm2377, %v1539, 0.0
    %v2470 = vadd.f32 %v2468, %v2469
    %v2471 = vsel %vm2377, %v1542, 0.0
    %v2472 = vadd.f32 %v2470, %v2471
    %v2473 = vsel %vm2377, %v1547, 0.0
    %v2474 = vadd.f32 %v2472, %v2473
    %v2475 = vsel %vm2377, %v1550, 0.0
    %v2476 = vadd.f32 %v2474, %v2475
    %v2477 = vsel %vm2377, %v1555, 0.0
    %v2478 = vadd.f32 %v2476, %v2477
    %v2479 = vsel %vm2377, %v1558, 0.0
    %v2480 = vadd.f32 %v2478, %v2479
    %v2481 = vsel %vm2377, %v1563, 0.0
    %v2482 = vadd.f32 %v2480, %v2481
    %v2483 = vsel %vm2377, %v1566, 0.0
    %v2484 = vadd.f32 %v2482, %v2483
    %v2485 = vsel %vm2377, %v1571, 0.0
    %v2486 = vadd.f32 %v2484, %v2485
    %v2487 = vsel %vm2377, %v1574, 0.0
    %v2488 = vadd.f32 %v2486, %v2487
    %v2489 = vsel %vm2377, %v1579, 0.0
    %v2490 = vadd.f32 %v2488, %v2489
    %v2491 = vsel %vm2377, %v1582, 0.0
    %v2492 = vadd.f32 %v2490, %v2491
    %v2493 = vsel %vm2377, %v1587, 0.0
    %v2494 = vadd.f32 %v2492, %v2493
    %v2495 = vsel %vm2377, %v1590, 0.0
    %v2496 = vadd.f32 %v2494, %v2495
    %v2497 = vsel %vm2377, %v1595, 0.0
    %v2498 = vadd.f32 %v2496, %v2497
    %v2499 = vsel %vm2377, %v1598, 0.0
    %v2500 = vadd.f32 %v2498, %v2499
    %v2501 = vsel %vm2377, %v1603, 0.0
    %v2502 = vadd.f32 %v2500, %v2501
    %v2503 = vsel %vm2377, %v1606, 0.0
    %v2504 = vadd.f32 %v2502, %v2503
    %v2505 = vsel %vm2377, %v1611, 0.0
    %v2506 = vadd.f32 %v2504, %v2505
    %v2507 = vsel %vm2377, %v1614, 0.0
    %v2508 = vadd.f32 %v2506, %v2507
    %v2509 = vsel %vm2377, %v1619, 0.0
    %v2510 = vadd.f32 %v2508, %v2509
    %v2511 = vsel %vm2377, %v1622, 0.0
    %v2512 = vadd.f32 %v2510, %v2511
    %v2513 = vsel %vm2377, %v1627, 0.0
    %v2514 = vadd.f32 %v2512, %v2513
    %v2515 = vsel %vm2377, %v1630, 0.0
    %v2516 = vadd.f32 %v2514, %v2515
    %v2517 = vsel %vm2377, %v1635, 0.0
    %v2518 = vadd.f32 %v2516, %v2517
    %v2519 = vsel %vm2377, %v1638, 0.0
    %v2520 = vadd.f32 %v2518, %v2519
    %v2521 = vsel %vm2377, %v1643, 0.0
    %v2522 = vadd.f32 %v2520, %v2521
    %v2523 = vsel %vm2377, %v1646, 0.0
    %v2524 = vadd.f32 %v2522, %v2523
    %v2525 = vsel %vm2377, %v1651, 0.0
    %v2526 = vadd.f32 %v2524, %v2525
    %v2527 = vsel %vm2377, %v1654, 0.0
    %v2528 = vadd.f32 %v2526, %v2527
    %v2529 = vsel %vm2377, %v1659, 0.0
    %v2530 = vadd.f32 %v2528, %v2529
    %v2531 = vsel %vm2377, %v1662, 0.0
    %v2532 = vadd.f32 %v2530, %v2531
    %v2533 = vsel %vm2377, %v1667, 0.0
    %v2534 = vadd.f32 %v2532, %v2533
    %v2535 = vsel %vm2377, %v1670, 0.0
    %v2536 = vadd.f32 %v2534, %v2535
    %v2537 = vsel %vm2377, %v1675, 0.0
    %v2538 = vadd.f32 %v2536, %v2537
    %v2539 = vsel %vm2377, %v1678, 0.0
    %v2540 = vadd.f32 %v2538, %v2539
    %v2541 = vsel %vm2377, %v1683, 0.0
    %v2542 = vadd.f32 %v2540, %v2541
    %v2543 = vsel %vm2377, %v1686, 0.0
    %v2544 = vadd.f32 %v2542, %v2543
    %v2545 = vsel %vm2377, %v1691, 0.0
    %v2546 = vadd.f32 %v2544, %v2545
    %v2547 = vsel %vm2377, %v1694, 0.0
    %v2548 = vadd.f32 %v2546, %v2547
    %v2549 = vsel %vm2377, %v1699, 0.0
    %v2550 = vadd.f32 %v2548, %v2549
    %v2551 = vsel %vm2377, %v1702, 0.0
    %v2552 = vadd.f32 %v2550, %v2551
    %v2553 = vsel %vm2377, %v1707, 0.0
    %v2554 = vadd.f32 %v2552, %v2553
    %v2555 = vsel %vm2377, %v1710, 0.0
    %v2556 = vadd.f32 %v2554, %v2555
    %v2557 = vsel %vm2377, %v1715, 0.0
    %v2558 = vadd.f32 %v2556, %v2557
    %v2559 = vsel %vm2377, %v1718, 0.0
    %v2560 = vadd.f32 %v2558, %v2559
    %v2561 = vsel %vm2377, %v1723, 0.0
    %v2562 = vadd.f32 %v2560, %v2561
    %v2563 = vsel %vm2377, %v1726, 0.0
    %v2564 = vadd.f32 %v2562, %v2563
    %v2565 = vsel %vm2377, %v1731, 0.0
    %v2566 = vadd.f32 %v2564, %v2565
    %v2567 = vsel %vm2377, %v1734, 0.0
    %v2568 = vadd.f32 %v2566, %v2567
    %v2569 = vsel %vm2377, %v1739, 0.0
    %v2570 = vadd.f32 %v2568, %v2569
    %v2571 = vsel %vm2377, %v1742, 0.0
    %v2572 = vadd.f32 %v2570, %v2571
    %v2573 = vsel %vm2377, %v1747, 0.0
    %v2574 = vadd.f32 %v2572, %v2573
    %v2575 = vsel %vm2377, %v1750, 0.0
    %v2576 = vadd.f32 %v2574, %v2575
    %v2577 = vsel %vm2377, %v1755, 0.0
    %v2578 = vadd.f32 %v2576, %v2577
    %v2579 = vsel %vm2377, %v1758, 0.0
    %v2580 = vadd.f32 %v2578, %v2579
    %v2581 = vsel %vm2377, %v1763, 0.0
    %v2582 = vadd.f32 %v2580, %v2581
    %v2583 = vsel %vm2377, %v1766, 0.0
    %v2584 = vadd.f32 %v2582, %v2583
    %v2585 = vsel %vm2377, %v1771, 0.0
    %v2586 = vadd.f32 %v2584, %v2585
    %v2587 = vsel %vm2377, %v1774, 0.0
    %v2588 = vadd.f32 %v2586, %v2587
    %v2589 = vsel %vm2377, %v1779, 0.0
    %v2590 = vadd.f32 %v2588, %v2589
    %v2591 = vsel %vm2377, %v1782, 0.0
    %v2592 = vadd.f32 %v2590, %v2591
    %v2593 = vsel %vm2377, %v1787, 0.0
    %v2594 = vadd.f32 %v2592, %v2593
    %v2595 = vsel %vm2377, %v1790, 0.0
    %v2596 = vadd.f32 %v2594, %v2595
    %v2597 = vsel %vm2377, %v1795, 0.0
    %v2598 = vadd.f32 %v2596, %v2597
    %v2599 = vsel %vm2377, %v1798, 0.0
    %v2600 = vadd.f32 %v2598, %v2599
    %v2601 = vsel %vm2377, %v1803, 0.0
    %v2602 = vadd.f32 %v2600, %v2601
    %v2603 = vsel %vm2377, %v1806, 0.0
    %v2604 = vadd.f32 %v2602, %v2603
    %v2605 = vsel %vm2377, %v1811, 0.0
    %v2606 = vadd.f32 %v2604, %v2605
    %v2607 = vsel %vm2377, %v1814, 0.0
    %v2608 = vadd.f32 %v2606, %v2607
    %v2609 = vsel %vm2377, %v1819, 0.0
    %v2610 = vadd.f32 %v2608, %v2609
    %v2611 = vsel %vm2377, %v1822, 0.0
    %v2612 = vadd.f32 %v2610, %v2611
    %v2613 = vsel %vm2377, %v1827, 0.0
    %v2614 = vadd.f32 %v2612, %v2613
    %v2615 = vsel %vm2377, %v1830, 0.0
    %v2616 = vadd.f32 %v2614, %v2615
    %v2617 = vsel %vm2377, %v1835, 0.0
    %v2618 = vadd.f32 %v2616, %v2617
    %v2619 = vsel %vm2377, %v1838, 0.0
    %v2620 = vadd.f32 %v2618, %v2619
    %v2621 = vsel %vm2377, %v1843, 0.0
    %v2622 = vadd.f32 %v2620, %v2621
    %v2623 = vsel %vm2377, %v1846, 0.0
    %v2624 = vadd.f32 %v2622, %v2623
    %v2625 = vsel %vm2377, %v1851, 0.0
    %v2626 = vadd.f32 %v2624, %v2625
    %v2627 = vsel %vm2377, %v1854, 0.0
    %v2628 = vadd.f32 %v2626, %v2627
    %v2629 = vsel %vm2377, %v1859, 0.0
    %v2630 = vadd.f32 %v2628, %v2629
    %v2631 = vsel %vm2377, %v1862, 0.0
    %v2632 = vadd.f32 %v2630, %v2631
    %v2633 = vsel %vm2377, %v1867, 0.0
    %v2634 = vadd.f32 %v2632, %v2633
    %v2635 = vsel %vm2377, %v1870, 0.0
    %v2636 = vadd.f32 %v2634, %v2635
    %v2637 = vsel %vm2377, %v1875, 0.0
    %v2638 = vadd.f32 %v2636, %v2637
    %v2639 = vsel %vm2377, %v1878, 0.0
    %v2640 = vadd.f32 %v2638, %v2639
    %v2641 = vsel %vm2377, %v1883, 0.0
    %v2642 = vadd.f32 %v2640, %v2641
    %v2643 = vsel %vm2377, %v1886, 0.0
    %v2644 = vadd.f32 %v2642, %v2643
    %v2645 = vsel %vm2377, %v1891, 0.0
    %v2646 = vadd.f32 %v2644, %v2645
    %v2647 = vsel %vm2377, %v1894, 0.0
    %v2648 = vadd.f32 %v2646, %v2647
    %v2649 = vsel %vm2377, %v1899, 0.0
    %v2650 = vadd.f32 %v2648, %v2649
    %v2651 = vsel %vm2377, %v1902, 0.0
    %v2652 = vadd.f32 %v2650, %v2651
    %v2653 = vsel %vm2377, %v1907, 0.0
    %v2654 = vadd.f32 %v2652, %v2653
    %v2655 = vsel %vm2377, %v1910, 0.0
    %v2656 = vadd.f32 %v2654, %v2655
    %v2657 = vsel %vm2377, %v1915, 0.0
    %v2658 = vadd.f32 %v2656, %v2657
    %v2659 = vsel %vm2377, %v1918, 0.0
    %v2660 = vadd.f32 %v2658, %v2659
    %v2661 = vsel %vm2377, %v1923, 0.0
    %v2662 = vadd.f32 %v2660, %v2661
    %v2663 = vsel %vm2377, %v1926, 0.0
    %v2664 = vadd.f32 %v2662, %v2663
    %v2665 = vsel %vm2377, %v1931, 0.0
    %v2666 = vadd.f32 %v2664, %v2665
    %v2667 = vsel %vm2377, %v1934, 0.0
    %v2668 = vadd.f32 %v2666, %v2667
    %v2669 = vsel %vm2377, %v1939, 0.0
    %v2670 = vadd.f32 %v2668, %v2669
    %v2671 = vsel %vm2377, %v1942, 0.0
    %v2672 = vadd.f32 %v2670, %v2671
    %v2673 = vsel %vm2377, %v1947, 0.0
    %v2674 = vadd.f32 %v2672, %v2673
    %v2675 = vsel %vm2377, %v1950, 0.0
    %v2676 = vadd.f32 %v2674, %v2675
    %v2677 = vsel %vm2377, %v1955, 0.0
    %v2678 = vadd.f32 %v2676, %v2677
    %v2679 = vsel %vm2377, %v1958, 0.0
    %v2680 = vadd.f32 %v2678, %v2679
    %v2681 = vsel %vm2377, %v1963, 0.0
    %v2682 = vadd.f32 %v2680, %v2681
    %v2683 = vsel %vm2377, %v1966, 0.0
    %v2684 = vadd.f32 %v2682, %v2683
    %v2685 = vsel %vm2377, %v1971, 0.0
    %v2686 = vadd.f32 %v2684, %v2685
    %v2687 = vsel %vm2377, %v1974, 0.0
    %v2688 = vadd.f32 %v2686, %v2687
    %v2689 = vsel %vm2377, %v1979, 0.0
    %v2690 = vadd.f32 %v2688, %v2689
    %v2691 = vsel %vm2377, %v1982, 0.0
    %v2692 = vadd.f32 %v2690, %v2691
    %v2693 = vsel %vm2377, %v1987, 0.0
    %v2694 = vadd.f32 %v2692, %v2693
    %v2695 = vsel %vm2377, %v1990, 0.0
    %v2696 = vadd.f32 %v2694, %v2695
    %v2697 = vsel %vm2377, %v1995, 0.0
    %v2698 = vadd.f32 %v2696, %v2697
    %v2699 = vsel %vm2377, %v1998, 0.0
    %v2700 = vadd.f32 %v2698, %v2699
    %v2701 = vsel %vm2377, %v2003, 0.0
    %v2702 = vadd.f32 %v2700, %v2701
    %v2703 = vsel %vm2377, %v2006, 0.0
    %v2704 = vadd.f32 %v2702, %v2703
    %v2705 = vsel %vm2377, %v2011, 0.0
    %v2706 = vadd.f32 %v2704, %v2705
    %v2707 = vsel %vm2377, %v2014, 0.0
    %v2708 = vadd.f32 %v2706, %v2707
    %v2709 = vsel %vm2377, %v2019, 0.0
    %v2710 = vadd.f32 %v2708, %v2709
    %v2711 = vsel %vm2377, %v2022, 0.0
    %v2712 = vadd.f32 %v2710, %v2711
    %v2713 = vsel %vm2377, %v2027, 0.0
    %v2714 = vadd.f32 %v2712, %v2713
    %v2715 = vsel %vm2377, %v2030, 0.0
    %v2716 = vadd.f32 %v2714, %v2715
    %v2717 = vsel %vm2377, %v2035, 0.0
    %v2718 = vadd.f32 %v2716, %v2717
    %v2719 = vsel %vm2377, %v2038, 0.0
    %v2720 = vadd.f32 %v2718, %v2719
    %v2721 = vsel %vm2377, %v2043, 0.0
    %v2722 = vadd.f32 %v2720, %v2721
    %v2723 = vsel %vm2377, %v2046, 0.0
    %v2724 = vadd.f32 %v2722, %v2723
    %v2725 = vsel %vm2377, %v2051, 0.0
    %v2726 = vadd.f32 %v2724, %v2725
    %v2727 = vsel %vm2377, %v2054, 0.0
    %v2728 = vadd.f32 %v2726, %v2727
    %v2729 = vsel %vm2377, %v2059, 0.0
    %v2730 = vadd.f32 %v2728, %v2729
    %v2731 = vsel %vm2377, %v2062, 0.0
    %v2732 = vadd.f32 %v2730, %v2731
    %v2733 = vsel %vm2377, %v2067, 0.0
    %v2734 = vadd.f32 %v2732, %v2733
    %v2735 = vsel %vm2377, %v2070, 0.0
    %v2736 = vadd.f32 %v2734, %v2735
    %v2737 = vsel %vm2377, %v2075, 0.0
    %v2738 = vadd.f32 %v2736, %v2737
    %v2739 = vsel %vm2377, %v2078, 0.0
    %v2740 = vadd.f32 %v2738, %v2739
    %v2741 = vsel %vm2377, %v2083, 0.0
    %v2742 = vadd.f32 %v2740, %v2741
    %v2743 = vsel %vm2377, %v2086, 0.0
    %v2744 = vadd.f32 %v2742, %v2743
    %v2745 = vsel %vm2377, %v2091, 0.0
    %v2746 = vadd.f32 %v2744, %v2745
    %v2747 = vsel %vm2377, %v2094, 0.0
    %v2748 = vadd.f32 %v2746, %v2747
    %v2749 = vsel %vm2377, %v2099, 0.0
    %v2750 = vadd.f32 %v2748, %v2749
    %v2751 = vsel %vm2377, %v2102, 0.0
    %v2752 = vadd.f32 %v2750, %v2751
    %v2753 = vsel %vm2377, %v2107, 0.0
    %v2754 = vadd.f32 %v2752, %v2753
    %v2755 = vsel %vm2377, %v2110, 0.0
    %v2756 = vadd.f32 %v2754, %v2755
    %v2757 = vsel %vm2377, %v2115, 0.0
    %v2758 = vadd.f32 %v2756, %v2757
    %v2759 = vsel %vm2377, %v2118, 0.0
    %v2760 = vadd.f32 %v2758, %v2759
    %v2761 = vsel %vm2377, %v2123, 0.0
    %v2762 = vadd.f32 %v2760, %v2761
    %v2763 = vsel %vm2377, %v2126, 0.0
    %v2764 = vadd.f32 %v2762, %v2763
    %v2765 = vsel %vm2377, %v2131, 0.0
    %v2766 = vadd.f32 %v2764, %v2765
    %v2767 = vsel %vm2377, %v2134, 0.0
    %v2768 = vadd.f32 %v2766, %v2767
    %v2769 = vsel %vm2377, %v2139, 0.0
    %v2770 = vadd.f32 %v2768, %v2769
    %v2771 = vsel %vm2377, %v2142, 0.0
    %v2772 = vadd.f32 %v2770, %v2771
    %v2773 = vsel %vm2377, %v2147, 0.0
    %v2774 = vadd.f32 %v2772, %v2773
    %v2775 = vsel %vm2377, %v2150, 0.0
    %v2776 = vadd.f32 %v2774, %v2775
    %v2777 = vsel %vm2377, %v2155, 0.0
    %v2778 = vadd.f32 %v2776, %v2777
    %v2779 = vsel %vm2377, %v2158, 0.0
    %v2780 = vadd.f32 %v2778, %v2779
    %v2781 = vsel %vm2377, %v2163, 0.0
    %v2782 = vadd.f32 %v2780, %v2781
    %v2783 = vsel %vm2377, %v2166, 0.0
    %v2784 = vadd.f32 %v2782, %v2783
    %v2785 = vsel %vm2377, %v2171, 0.0
    %v2786 = vadd.f32 %v2784, %v2785
    %v2787 = vsel %vm2377, %v2174, 0.0
    %v2788 = vadd.f32 %v2786, %v2787
    %v2789 = vsel %vm2377, %v2179, 0.0
    %v2790 = vadd.f32 %v2788, %v2789
    %v2791 = vsel %vm2377, %v2182, 0.0
    %v2792 = vadd.f32 %v2790, %v2791
    %v2793 = vsel %vm2377, %v2187, 0.0
    %v2794 = vadd.f32 %v2792, %v2793
    %v2795 = vsel %vm2377, %v2190, 0.0
    %v2796 = vadd.f32 %v2794, %v2795
    %v2797 = vsel %vm2377, %v2195, 0.0
    %v2798 = vadd.f32 %v2796, %v2797
    %v2799 = vsel %vm2377, %v2198, 0.0
    %v2800 = vadd.f32 %v2798, %v2799
    %v2801 = vsel %vm2377, %v2203, 0.0
    %v2802 = vadd.f32 %v2800, %v2801
    %v2803 = vsel %vm2377, %v2206, 0.0
    %v2804 = vadd.f32 %v2802, %v2803
    %v2805 = vsel %vm2377, %v2211, 0.0
    %v2806 = vadd.f32 %v2804, %v2805
    %v2807 = vsel %vm2377, %v2214, 0.0
    %v2808 = vadd.f32 %v2806, %v2807
    %v2809 = vsel %vm2377, %v2219, 0.0
    %v2810 = vadd.f32 %v2808, %v2809
    %v2811 = vsel %vm2377, %v2222, 0.0
    %v2812 = vadd.f32 %v2810, %v2811
    %v2813 = vsel %vm2377, %v2227, 0.0
    %v2814 = vadd.f32 %v2812, %v2813
    %v2815 = vsel %vm2377, %v2230, 0.0
    %v2816 = vadd.f32 %v2814, %v2815
    %v2817 = vsel %vm2377, %v2235, 0.0
    %v2818 = vadd.f32 %v2816, %v2817
    %v2819 = vsel %vm2377, %v2238, 0.0
    %v2820 = vadd.f32 %v2818, %v2819
    %v2821 = vsel %vm2377, %v2243, 0.0
    %v2822 = vadd.f32 %v2820, %v2821
    %v2823 = vsel %vm2377, %v2246, 0.0
    %v2824 = vadd.f32 %v2822, %v2823
    %v2825 = vsel %vm2377, %v2251, 0.0
    %v2826 = vadd.f32 %v2824, %v2825
    %v2827 = vsel %vm2377, %v2254, 0.0
    %v2828 = vadd.f32 %v2826, %v2827
    %v2829 = vsel %vm2377, %v2259, 0.0
    %v2830 = vadd.f32 %v2828, %v2829
    %v2831 = vsel %vm2377, %v2262, 0.0
    %v2832 = vadd.f32 %v2830, %v2831
    %v2833 = vsel %vm2377, %v2267, 0.0
    %v2834 = vadd.f32 %v2832, %v2833
    %v2835 = vsel %vm2377, %v2270, 0.0
    %v2836 = vadd.f32 %v2834, %v2835
    %v2837 = vsel %vm2377, %v2275, 0.0
    %v2838 = vadd.f32 %v2836, %v2837
    %v2839 = vsel %vm2377, %v2278, 0.0
    %v2840 = vadd.f32 %v2838, %v2839
    %v2841 = vsel %vm2377, %v2283, 0.0
    %v2842 = vadd.f32 %v2840, %v2841
    %v2843 = vsel %vm2377, %v2286, 0.0
    %v2844 = vadd.f32 %v2842, %v2843
    %v2845 = vsel %vm2377, %v2291, 0.0
    %v2846 = vadd.f32 %v2844, %v2845
    %v2847 = vsel %vm2377, %v2294, 0.0
    %v2848 = vadd.f32 %v2846, %v2847
    %v2849 = vsel %vm2377, %v2299, 0.0
    %v2850 = vadd.f32 %v2848, %v2849
    %v2851 = vsel %vm2377, %v2302, 0.0
    %v2852 = vadd.f32 %v2850, %v2851
    %v2853 = vsel %vm2377, %v2307, 0.0
    %v2854 = vadd.f32 %v2852, %v2853
    %v2855 = vsel %vm2377, %v2310, 0.0
    %v2856 = vadd.f32 %v2854, %v2855
    %v2857 = vsel %vm2377, %v2315, 0.0
    %v2858 = vadd.f32 %v2856, %v2857
    %v2859 = vsel %vm2377, %v2318, 0.0
    %v2860 = vadd.f32 %v2858, %v2859
    %v2861 = vsel %vm2377, %v2323, 0.0
    %v2862 = vadd.f32 %v2860, %v2861
    %v2863 = vsel %vm2377, %v2326, 0.0
    %v2864 = vadd.f32 %v2862, %v2863
    %v2865 = vsel %vm2377, %v2331, 0.0
    %v2866 = vadd.f32 %v2864, %v2865
    %v2867 = vsel %vm2377, %v2334, 0.0
    %v2868 = vadd.f32 %v2866, %v2867
    %v2869 = vsel %vm2377, %v2339, 0.0
    %v2870 = vadd.f32 %v2868, %v2869
    %v2871 = vsel %vm2377, %v2342, 0.0
    %v2872 = vadd.f32 %v2870, %v2871
    %v2873 = vsel %vm2377, %v2347, 0.0
    %v2874 = vadd.f32 %v2872, %v2873
    %v2875 = vsel %vm2377, %v2350, 0.0
    %v2876 = vadd.f32 %v2874, %v2875
    %v2877 = vsel %vm2377, %v2355, 0.0
    %v2878 = vadd.f32 %v2876, %v2877
    %v2879 = vsel %vm2377, %v2358, 0.0
    %v2880 = vadd.f32 %v2878, %v2879
    %v2881 = vsel %vm2377, %v2363, 0.0
    %v2882 = vadd.f32 %v2880, %v2881
    %v2883 = vsel %vm2377, %v2366, 0.0
    %v2884 = vadd.f32 %v2882, %v2883
    %v2885 = vsel %vm2377, %v2371, 0.0
    %v2886 = vadd.f32 %v2884, %v2885
    %v2887 = vsel %vm2377, %v2374, 0.0
    %v2888 = vadd.f32 %v2886, %v2887
    %v2889 = vrot.slane %v2888, 4
    %v2890 = vadd.f32 %v2888, %v2889
    %v2891 = vrot.slane %v2890, 2
    %v2892 = vadd.f32 %v2890, %v2891
    %v2893 = vrot.slane %v2892, 1
    %v2894 = vadd.f32 %v2892, %v2893
    %vm2895 = vcmask 122880
    %2896 = vst.msk [vmem:[#allocation2] sm:$0x1] %vm2895, %v2894
    %v2897 = vmul.f32 %v1355, %v1355
    %v2898 = vmul.f32 %v1358, %v1358
    %v2899 = vmul.f32 %v1363, %v1363
    %v2900 = vmul.f32 %v1366, %v1366
    %v2901 = vmul.f32 %v1371, %v1371
    %v2902 = vmul.f32 %v1374, %v1374
    %v2903 = vmul.f32 %v1379, %v1379
    %v2904 = vmul.f32 %v1382, %v1382
    %v2905 = vmul.f32 %v1387, %v1387
    %v2906 = vmul.f32 %v1390, %v1390
    %v2907 = vmul.f32 %v1395, %v1395
    %v2908 = vmul.f32 %v1398, %v1398
    %v2909 = vmul.f32 %v1403, %v1403
    %v2910 = vmul.f32 %v1406, %v1406
    %v2911 = vmul.f32 %v1411, %v1411
    %v2912 = vmul.f32 %v1414, %v1414
    %v2913 = vmul.f32 %v1419, %v1419
    %v2914 = vmul.f32 %v1422, %v1422
    %v2915 = vmul.f32 %v1427, %v1427
    %v2916 = vmul.f32 %v1430, %v1430
    %v2917 = vmul.f32 %v1435, %v1435
    %v2918 = vmul.f32 %v1438, %v1438
    %v2919 = vmul.f32 %v1443, %v1443
    %v2920 = vmul.f32 %v1446, %v1446
    %v2921 = vmul.f32 %v1451, %v1451
    %v2922 = vmul.f32 %v1454, %v1454
    %v2923 = vmul.f32 %v1459, %v1459
    %v2924 = vmul.f32 %v1462, %v1462
    %v2925 = vmul.f32 %v1467, %v1467
    %v2926 = vmul.f32 %v1470, %v1470
    %v2927 = vmul.f32 %v1475, %v1475
    %v2928 = vmul.f32 %v1478, %v1478
    %v2929 = vmul.f32 %v1483, %v1483
    %v2930 = vmul.f32 %v1486, %v1486
    %v2931 = vmul.f32 %v1491, %v1491
    %v2932 = vmul.f32 %v1494, %v1494
    %v2933 = vmul.f32 %v1499, %v1499
    %v2934 = vmul.f32 %v1502, %v1502
    %v2935 = vmul.f32 %v1507, %v1507
    %v2936 = vmul.f32 %v1510, %v1510
    %v2937 = vmul.f32 %v1515, %v1515
    %v2938 = vmul.f32 %v1518, %v1518
    %v2939 = vmul.f32 %v1523, %v1523
    %v2940 = vmul.f32 %v1526, %v1526
    %v2941 = vmul.f32 %v1531, %v1531
    %v2942 = vmul.f32 %v1534, %v1534
    %v2943 = vmul.f32 %v1539, %v1539
    %v2944 = vmul.f32 %v1542, %v1542
    %v2945 = vmul.f32 %v1547, %v1547
    %v2946 = vmul.f32 %v1550, %v1550
    %v2947 = vmul.f32 %v1555, %v1555
    %v2948 = vmul.f32 %v1558, %v1558
    %v2949 = vmul.f32 %v1563, %v1563
    %v2950 = vmul.f32 %v1566, %v1566
    %v2951 = vmul.f32 %v1571, %v1571
    %v2952 = vmul.f32 %v1574, %v1574
    %v2953 = vmul.f32 %v1579, %v1579
    %v2954 = vmul.f32 %v1582, %v1582
    %v2955 = vmul.f32 %v1587, %v1587
    %v2956 = vmul.f32 %v1590, %v1590
    %v2957 = vmul.f32 %v1595, %v1595
    %v2958 = vmul.f32 %v1598, %v1598
    %v2959 = vmul.f32 %v1603, %v1603
    %v2960 = vmul.f32 %v1606, %v1606
    %v2961 = vmul.f32 %v1611, %v1611
    %v2962 = vmul.f32 %v1614, %v1614
    %v2963 = vmul.f32 %v1619, %v1619
    %v2964 = vmul.f32 %v1622, %v1622
    %v2965 = vmul.f32 %v1627, %v1627
    %v2966 = vmul.f32 %v1630, %v1630
    %v2967 = vmul.f32 %v1635, %v1635
    %v2968 = vmul.f32 %v1638, %v1638
    %v2969 = vmul.f32 %v1643, %v1643
    %v2970 = vmul.f32 %v1646, %v1646
    %v2971 = vmul.f32 %v1651, %v1651
    %v2972 = vmul.f32 %v1654, %v1654
    %v2973 = vmul.f32 %v1659, %v1659
    %v2974 = vmul.f32 %v1662, %v1662
    %v2975 = vmul.f32 %v1667, %v1667
    %v2976 = vmul.f32 %v1670, %v1670
    %v2977 = vmul.f32 %v1675, %v1675
    %v2978 = vmul.f32 %v1678, %v1678
    %v2979 = vmul.f32 %v1683, %v1683
    %v2980 = vmul.f32 %v1686, %v1686
    %v2981 = vmul.f32 %v1691, %v1691
    %v2982 = vmul.f32 %v1694, %v1694
    %v2983 = vmul.f32 %v1699, %v1699
    %v2984 = vmul.f32 %v1702, %v1702
    %v2985 = vmul.f32 %v1707, %v1707
    %v2986 = vmul.f32 %v1710, %v1710
    %v2987 = vmul.f32 %v1715, %v1715
    %v2988 = vmul.f32 %v1718, %v1718
    %v2989 = vmul.f32 %v1723, %v1723
    %v2990 = vmul.f32 %v1726, %v1726
    %v2991 = vmul.f32 %v1731, %v1731
    %v2992 = vmul.f32 %v1734, %v1734
    %v2993 = vmul.f32 %v1739, %v1739
    %v2994 = vmul.f32 %v1742, %v1742
    %v2995 = vmul.f32 %v1747, %v1747
    %v2996 = vmul.f32 %v1750, %v1750
    %v2997 = vmul.f32 %v1755, %v1755
    %v2998 = vmul.f32 %v1758, %v1758
    %v2999 = vmul.f32 %v1763, %v1763
    %v3000 = vmul.f32 %v1766, %v1766
    %v3001 = vmul.f32 %v1771, %v1771
    %v3002 = vmul.f32 %v1774, %v1774
    %v3003 = vmul.f32 %v1779, %v1779
    %v3004 = vmul.f32 %v1782, %v1782
    %v3005 = vmul.f32 %v1787, %v1787
    %v3006 = vmul.f32 %v1790, %v1790
    %v3007 = vmul.f32 %v1795, %v1795
    %v3008 = vmul.f32 %v1798, %v1798
    %v3009 = vmul.f32 %v1803, %v1803
    %v3010 = vmul.f32 %v1806, %v1806
    %v3011 = vmul.f32 %v1811, %v1811
    %v3012 = vmul.f32 %v1814, %v1814
    %v3013 = vmul.f32 %v1819, %v1819
    %v3014 = vmul.f32 %v1822, %v1822
    %v3015 = vmul.f32 %v1827, %v1827
    %v3016 = vmul.f32 %v1830, %v1830
    %v3017 = vmul.f32 %v1835, %v1835
    %v3018 = vmul.f32 %v1838, %v1838
    %v3019 = vmul.f32 %v1843, %v1843
    %v3020 = vmul.f32 %v1846, %v1846
    %v3021 = vmul.f32 %v1851, %v1851
    %v3022 = vmul.f32 %v1854, %v1854
    %v3023 = vmul.f32 %v1859, %v1859
    %v3024 = vmul.f32 %v1862, %v1862
    %v3025 = vmul.f32 %v1867, %v1867
    %v3026 = vmul.f32 %v1870, %v1870
    %v3027 = vmul.f32 %v1875, %v1875
    %v3028 = vmul.f32 %v1878, %v1878
    %v3029 = vmul.f32 %v1883, %v1883
    %v3030 = vmul.f32 %v1886, %v1886
    %v3031 = vmul.f32 %v1891, %v1891
    %v3032 = vmul.f32 %v1894, %v1894
    %v3033 = vmul.f32 %v1899, %v1899
    %v3034 = vmul.f32 %v1902, %v1902
    %v3035 = vmul.f32 %v1907, %v1907
    %v3036 = vmul.f32 %v1910, %v1910
    %v3037 = vmul.f32 %v1915, %v1915
    %v3038 = vmul.f32 %v1918, %v1918
    %v3039 = vmul.f32 %v1923, %v1923
    %v3040 = vmul.f32 %v1926, %v1926
    %v3041 = vmul.f32 %v1931, %v1931
    %v3042 = vmul.f32 %v1934, %v1934
    %v3043 = vmul.f32 %v1939, %v1939
    %v3044 = vmul.f32 %v1942, %v1942
    %v3045 = vmul.f32 %v1947, %v1947
    %v3046 = vmul.f32 %v1950, %v1950
    %v3047 = vmul.f32 %v1955, %v1955
    %v3048 = vmul.f32 %v1958, %v1958
    %v3049 = vmul.f32 %v1963, %v1963
    %v3050 = vmul.f32 %v1966, %v1966
    %v3051 = vmul.f32 %v1971, %v1971
    %v3052 = vmul.f32 %v1974, %v1974
    %v3053 = vmul.f32 %v1979, %v1979
    %v3054 = vmul.f32 %v1982, %v1982
    %v3055 = vmul.f32 %v1987, %v1987
    %v3056 = vmul.f32 %v1990, %v1990
    %v3057 = vmul.f32 %v1995, %v1995
    %v3058 = vmul.f32 %v1998, %v1998
    %v3059 = vmul.f32 %v2003, %v2003
    %v3060 = vmul.f32 %v2006, %v2006
    %v3061 = vmul.f32 %v2011, %v2011
    %v3062 = vmul.f32 %v2014, %v2014
    %v3063 = vmul.f32 %v2019, %v2019
    %v3064 = vmul.f32 %v2022, %v2022
    %v3065 = vmul.f32 %v2027, %v2027
    %v3066 = vmul.f32 %v2030, %v2030
    %v3067 = vmul.f32 %v2035, %v2035
    %v3068 = vmul.f32 %v2038, %v2038
    %v3069 = vmul.f32 %v2043, %v2043
    %v3070 = vmul.f32 %v2046, %v2046
    %v3071 = vmul.f32 %v2051, %v2051
    %v3072 = vmul.f32 %v2054, %v2054
    %v3073 = vmul.f32 %v2059, %v2059
    %v3074 = vmul.f32 %v2062, %v2062
    %v3075 = vmul.f32 %v2067, %v2067
    %v3076 = vmul.f32 %v2070, %v2070
    %v3077 = vmul.f32 %v2075, %v2075
    %v3078 = vmul.f32 %v2078, %v2078
    %v3079 = vmul.f32 %v2083, %v2083
    %v3080 = vmul.f32 %v2086, %v2086
    %v3081 = vmul.f32 %v2091, %v2091
    %v3082 = vmul.f32 %v2094, %v2094
    %v3083 = vmul.f32 %v2099, %v2099
    %v3084 = vmul.f32 %v2102, %v2102
    %v3085 = vmul.f32 %v2107, %v2107
    %v3086 = vmul.f32 %v2110, %v2110
    %v3087 = vmul.f32 %v2115, %v2115
    %v3088 = vmul.f32 %v2118, %v2118
    %v3089 = vmul.f32 %v2123, %v2123
    %v3090 = vmul.f32 %v2126, %v2126
    %v3091 = vmul.f32 %v2131, %v2131
    %v3092 = vmul.f32 %v2134, %v2134
    %v3093 = vmul.f32 %v2139, %v2139
    %v3094 = vmul.f32 %v2142, %v2142
    %v3095 = vmul.f32 %v2147, %v2147
    %v3096 = vmul.f32 %v2150, %v2150
    %v3097 = vmul.f32 %v2155, %v2155
    %v3098 = vmul.f32 %v2158, %v2158
    %v3099 = vmul.f32 %v2163, %v2163
    %v3100 = vmul.f32 %v2166, %v2166
    %v3101 = vmul.f32 %v2171, %v2171
    %v3102 = vmul.f32 %v2174, %v2174
    %v3103 = vmul.f32 %v2179, %v2179
    %v3104 = vmul.f32 %v2182, %v2182
    %v3105 = vmul.f32 %v2187, %v2187
    %v3106 = vmul.f32 %v2190, %v2190
    %v3107 = vmul.f32 %v2195, %v2195
    %v3108 = vmul.f32 %v2198, %v2198
    %v3109 = vmul.f32 %v2203, %v2203
    %v3110 = vmul.f32 %v2206, %v2206
    %v3111 = vmul.f32 %v2211, %v2211
    %v3112 = vmul.f32 %v2214, %v2214
    %v3113 = vmul.f32 %v2219, %v2219
    %v3114 = vmul.f32 %v2222, %v2222
    %v3115 = vmul.f32 %v2227, %v2227
    %v3116 = vmul.f32 %v2230, %v2230
    %v3117 = vmul.f32 %v2235, %v2235
    %v3118 = vmul.f32 %v2238, %v2238
    %v3119 = vmul.f32 %v2243, %v2243
    %v3120 = vmul.f32 %v2246, %v2246
    %v3121 = vmul.f32 %v2251, %v2251
    %v3122 = vmul.f32 %v2254, %v2254
    %v3123 = vmul.f32 %v2259, %v2259
    %v3124 = vmul.f32 %v2262, %v2262
    %v3125 = vmul.f32 %v2267, %v2267
    %v3126 = vmul.f32 %v2270, %v2270
    %v3127 = vmul.f32 %v2275, %v2275
    %v3128 = vmul.f32 %v2278, %v2278
    %v3129 = vmul.f32 %v2283, %v2283
    %v3130 = vmul.f32 %v2286, %v2286
    %v3131 = vmul.f32 %v2291, %v2291
    %v3132 = vmul.f32 %v2294, %v2294
    %v3133 = vmul.f32 %v2299, %v2299
    %v3134 = vmul.f32 %v2302, %v2302
    %v3135 = vmul.f32 %v2307, %v2307
    %v3136 = vmul.f32 %v2310, %v2310
    %v3137 = vmul.f32 %v2315, %v2315
    %v3138 = vmul.f32 %v2318, %v2318
    %v3139 = vmul.f32 %v2323, %v2323
    %v3140 = vmul.f32 %v2326, %v2326
    %v3141 = vmul.f32 %v2331, %v2331
    %v3142 = vmul.f32 %v2334, %v2334
    %v3143 = vmul.f32 %v2339, %v2339
    %v3144 = vmul.f32 %v2342, %v2342
    %v3145 = vmul.f32 %v2347, %v2347
    %v3146 = vmul.f32 %v2350, %v2350
    %v3147 = vmul.f32 %v2355, %v2355
    %v3148 = vmul.f32 %v2358, %v2358
    %v3149 = vmul.f32 %v2363, %v2363
    %v3150 = vmul.f32 %v2366, %v2366
    %v3151 = vmul.f32 %v2371, %v2371
    %v3152 = vmul.f32 %v2374, %v2374
    %v3153 = vsel %vm2377, %v2897, 0.0
    %v3154 = vsel %vm2377, %v2898, 0.0
    %v3155 = vadd.f32 %v3153, %v3154
    %v3156 = vsel %vm2377, %v2899, 0.0
    %v3157 = vadd.f32 %v3155, %v3156
    %v3158 = vsel %vm2377, %v2900, 0.0
    %v3159 = vadd.f32 %v3157, %v3158
    %v3160 = vsel %vm2377, %v2901, 0.0
    %v3161 = vadd.f32 %v3159, %v3160
    %v3162 = vsel %vm2377, %v2902, 0.0
    %v3163 = vadd.f32 %v3161, %v3162
    %v3164 = vsel %vm2377, %v2903, 0.0
    %v3165 = vadd.f32 %v3163, %v3164
    %v3166 = vsel %vm2377, %v2904, 0.0
    %v3167 = vadd.f32 %v3165, %v3166
    %v3168 = vsel %vm2377, %v2905, 0.0
    %v3169 = vadd.f32 %v3167, %v3168
    %v3170 = vsel %vm2377, %v2906, 0.0
    %v3171 = vadd.f32 %v3169, %v3170
    %v3172 = vsel %vm2377, %v2907, 0.0
    %v3173 = vadd.f32 %v3171, %v3172
    %v3174 = vsel %vm2377, %v2908, 0.0
    %v3175 = vadd.f32 %v3173, %v3174
    %v3176 = vsel %vm2377, %v2909, 0.0
    %v3177 = vadd.f32 %v3175, %v3176
    %v3178 = vsel %vm2377, %v2910, 0.0
    %v3179 = vadd.f32 %v3177, %v3178
    %v3180 = vsel %vm2377, %v2911, 0.0
    %v3181 = vadd.f32 %v3179, %v3180
    %v3182 = vsel %vm2377, %v2912, 0.0
    %v3183 = vadd.f32 %v3181, %v3182
    %v3184 = vsel %vm2377, %v2913, 0.0
    %v3185 = vadd.f32 %v3183, %v3184
    %v3186 = vsel %vm2377, %v2914, 0.0
    %v3187 = vadd.f32 %v3185, %v3186
    %v3188 = vsel %vm2377, %v2915, 0.0
    %v3189 = vadd.f32 %v3187, %v3188
    %v3190 = vsel %vm2377, %v2916, 0.0
    %v3191 = vadd.f32 %v3189, %v3190
    %v3192 = vsel %vm2377, %v2917, 0.0
    %v3193 = vadd.f32 %v3191, %v3192
    %v3194 = vsel %vm2377, %v2918, 0.0
    %v3195 = vadd.f32 %v3193, %v3194
    %v3196 = vsel %vm2377, %v2919, 0.0
    %v3197 = vadd.f32 %v3195, %v3196
    %v3198 = vsel %vm2377, %v2920, 0.0
    %v3199 = vadd.f32 %v3197, %v3198
    %v3200 = vsel %vm2377, %v2921, 0.0
    %v3201 = vadd.f32 %v3199, %v3200
    %v3202 = vsel %vm2377, %v2922, 0.0
    %v3203 = vadd.f32 %v3201, %v3202
    %v3204 = vsel %vm2377, %v2923, 0.0
    %v3205 = vadd.f32 %v3203, %v3204
    %v3206 = vsel %vm2377, %v2924, 0.0
    %v3207 = vadd.f32 %v3205, %v3206
    %v3208 = vsel %vm2377, %v2925, 0.0
    %v3209 = vadd.f32 %v3207, %v3208
    %v3210 = vsel %vm2377, %v2926, 0.0
    %v3211 = vadd.f32 %v3209, %v3210
    %v3212 = vsel %vm2377, %v2927, 0.0
    %v3213 = vadd.f32 %v3211, %v3212
    %v3214 = vsel %vm2377, %v2928, 0.0
    %v3215 = vadd.f32 %v3213, %v3214
    %v3216 = vsel %vm2377, %v2929, 0.0
    %v3217 = vadd.f32 %v3215, %v3216
    %v3218 = vsel %vm2377, %v2930, 0.0
    %v3219 = vadd.f32 %v3217, %v3218
    %v3220 = vsel %vm2377, %v2931, 0.0
    %v3221 = vadd.f32 %v3219, %v3220
    %v3222 = vsel %vm2377, %v2932, 0.0
    %v3223 = vadd.f32 %v3221, %v3222
    %v3224 = vsel %vm2377, %v2933, 0.0
    %v3225 = vadd.f32 %v3223, %v3224
    %v3226 = vsel %vm2377, %v2934, 0.0
    %v3227 = vadd.f32 %v3225, %v3226
    %v3228 = vsel %vm2377, %v2935, 0.0
    %v3229 = vadd.f32 %v3227, %v3228
    %v3230 = vsel %vm2377, %v2936, 0.0
    %v3231 = vadd.f32 %v3229, %v3230
    %v3232 = vsel %vm2377, %v2937, 0.0
    %v3233 = vadd.f32 %v3231, %v3232
    %v3234 = vsel %vm2377, %v2938, 0.0
    %v3235 = vadd.f32 %v3233, %v3234
    %v3236 = vsel %vm2377, %v2939, 0.0
    %v3237 = vadd.f32 %v3235, %v3236
    %v3238 = vsel %vm2377, %v2940, 0.0
    %v3239 = vadd.f32 %v3237, %v3238
    %v3240 = vsel %vm2377, %v2941, 0.0
    %v3241 = vadd.f32 %v3239, %v3240
    %v3242 = vsel %vm2377, %v2942, 0.0
    %v3243 = vadd.f32 %v3241, %v3242
    %v3244 = vsel %vm2377, %v2943, 0.0
    %v3245 = vadd.f32 %v3243, %v3244
    %v3246 = vsel %vm2377, %v2944, 0.0
    %v3247 = vadd.f32 %v3245, %v3246
    %v3248 = vsel %vm2377, %v2945, 0.0
    %v3249 = vadd.f32 %v3247, %v3248
    %v3250 = vsel %vm2377, %v2946, 0.0
    %v3251 = vadd.f32 %v3249, %v3250
    %v3252 = vsel %vm2377, %v2947, 0.0
    %v3253 = vadd.f32 %v3251, %v3252
    %v3254 = vsel %vm2377, %v2948, 0.0
    %v3255 = vadd.f32 %v3253, %v3254
    %v3256 = vsel %vm2377, %v2949, 0.0
    %v3257 = vadd.f32 %v3255, %v3256
    %v3258 = vsel %vm2377, %v2950, 0.0
    %v3259 = vadd.f32 %v3257, %v3258
    %v3260 = vsel %vm2377, %v2951, 0.0
    %v3261 = vadd.f32 %v3259, %v3260
    %v3262 = vsel %vm2377, %v2952, 0.0
    %v3263 = vadd.f32 %v3261, %v3262
    %v3264 = vsel %vm2377, %v2953, 0.0
    %v3265 = vadd.f32 %v3263, %v3264
    %v3266 = vsel %vm2377, %v2954, 0.0
    %v3267 = vadd.f32 %v3265, %v3266
    %v3268 = vsel %vm2377, %v2955, 0.0
    %v3269 = vadd.f32 %v3267, %v3268
    %v3270 = vsel %vm2377, %v2956, 0.0
    %v3271 = vadd.f32 %v3269, %v3270
    %v3272 = vsel %vm2377, %v2957, 0.0
    %v3273 = vadd.f32 %v3271, %v3272
    %v3274 = vsel %vm2377, %v2958, 0.0
    %v3275 = vadd.f32 %v3273, %v3274
    %v3276 = vsel %vm2377, %v2959, 0.0
    %v3277 = vadd.f32 %v3275, %v3276
    %v3278 = vsel %vm2377, %v2960, 0.0
    %v3279 = vadd.f32 %v3277, %v3278
    %v3280 = vsel %vm2377, %v2961, 0.0
    %v3281 = vadd.f32 %v3279, %v3280
    %v3282 = vsel %vm2377, %v2962, 0.0
    %v3283 = vadd.f32 %v3281, %v3282
    %v3284 = vsel %vm2377, %v2963, 0.0
    %v3285 = vadd.f32 %v3283, %v3284
    %v3286 = vsel %vm2377, %v2964, 0.0
    %v3287 = vadd.f32 %v3285, %v3286
    %v3288 = vsel %vm2377, %v2965, 0.0
    %v3289 = vadd.f32 %v3287, %v3288
    %v3290 = vsel %vm2377, %v2966, 0.0
    %v3291 = vadd.f32 %v3289, %v3290
    %v3292 = vsel %vm2377, %v2967, 0.0
    %v3293 = vadd.f32 %v3291, %v3292
    %v3294 = vsel %vm2377, %v2968, 0.0
    %v3295 = vadd.f32 %v3293, %v3294
    %v3296 = vsel %vm2377, %v2969, 0.0
    %v3297 = vadd.f32 %v3295, %v3296
    %v3298 = vsel %vm2377, %v2970, 0.0
    %v3299 = vadd.f32 %v3297, %v3298
    %v3300 = vsel %vm2377, %v2971, 0.0
    %v3301 = vadd.f32 %v3299, %v3300
    %v3302 = vsel %vm2377, %v2972, 0.0
    %v3303 = vadd.f32 %v3301, %v3302
    %v3304 = vsel %vm2377, %v2973, 0.0
    %v3305 = vadd.f32 %v3303, %v3304
    %v3306 = vsel %vm2377, %v2974, 0.0
    %v3307 = vadd.f32 %v3305, %v3306
    %v3308 = vsel %vm2377, %v2975, 0.0
    %v3309 = vadd.f32 %v3307, %v3308
    %v3310 = vsel %vm2377, %v2976, 0.0
    %v3311 = vadd.f32 %v3309, %v3310
    %v3312 = vsel %vm2377, %v2977, 0.0
    %v3313 = vadd.f32 %v3311, %v3312
    %v3314 = vsel %vm2377, %v2978, 0.0
    %v3315 = vadd.f32 %v3313, %v3314
    %v3316 = vsel %vm2377, %v2979, 0.0
    %v3317 = vadd.f32 %v3315, %v3316
    %v3318 = vsel %vm2377, %v2980, 0.0
    %v3319 = vadd.f32 %v3317, %v3318
    %v3320 = vsel %vm2377, %v2981, 0.0
    %v3321 = vadd.f32 %v3319, %v3320
    %v3322 = vsel %vm2377, %v2982, 0.0
    %v3323 = vadd.f32 %v3321, %v3322
    %v3324 = vsel %vm2377, %v2983, 0.0
    %v3325 = vadd.f32 %v3323, %v3324
    %v3326 = vsel %vm2377, %v2984, 0.0
    %v3327 = vadd.f32 %v3325, %v3326
    %v3328 = vsel %vm2377, %v2985, 0.0
    %v3329 = vadd.f32 %v3327, %v3328
    %v3330 = vsel %vm2377, %v2986, 0.0
    %v3331 = vadd.f32 %v3329, %v3330
    %v3332 = vsel %vm2377, %v2987, 0.0
    %v3333 = vadd.f32 %v3331, %v3332
    %v3334 = vsel %vm2377, %v2988, 0.0
    %v3335 = vadd.f32 %v3333, %v3334
    %v3336 = vsel %vm2377, %v2989, 0.0
    %v3337 = vadd.f32 %v3335, %v3336
    %v3338 = vsel %vm2377, %v2990, 0.0
    %v3339 = vadd.f32 %v3337, %v3338
    %v3340 = vsel %vm2377, %v2991, 0.0
    %v3341 = vadd.f32 %v3339, %v3340
    %v3342 = vsel %vm2377, %v2992, 0.0
    %v3343 = vadd.f32 %v3341, %v3342
    %v3344 = vsel %vm2377, %v2993, 0.0
    %v3345 = vadd.f32 %v3343, %v3344
    %v3346 = vsel %vm2377, %v2994, 0.0
    %v3347 = vadd.f32 %v3345, %v3346
    %v3348 = vsel %vm2377, %v2995, 0.0
    %v3349 = vadd.f32 %v3347, %v3348
    %v3350 = vsel %vm2377, %v2996, 0.0
    %v3351 = vadd.f32 %v3349, %v3350
    %v3352 = vsel %vm2377, %v2997, 0.0
    %v3353 = vadd.f32 %v3351, %v3352
    %v3354 = vsel %vm2377, %v2998, 0.0
    %v3355 = vadd.f32 %v3353, %v3354
    %v3356 = vsel %vm2377, %v2999, 0.0
    %v3357 = vadd.f32 %v3355, %v3356
    %v3358 = vsel %vm2377, %v3000, 0.0
    %v3359 = vadd.f32 %v3357, %v3358
    %v3360 = vsel %vm2377, %v3001, 0.0
    %v3361 = vadd.f32 %v3359, %v3360
    %v3362 = vsel %vm2377, %v3002, 0.0
    %v3363 = vadd.f32 %v3361, %v3362
    %v3364 = vsel %vm2377, %v3003, 0.0
    %v3365 = vadd.f32 %v3363, %v3364
    %v3366 = vsel %vm2377, %v3004, 0.0
    %v3367 = vadd.f32 %v3365, %v3366
    %v3368 = vsel %vm2377, %v3005, 0.0
    %v3369 = vadd.f32 %v3367, %v3368
    %v3370 = vsel %vm2377, %v3006, 0.0
    %v3371 = vadd.f32 %v3369, %v3370
    %v3372 = vsel %vm2377, %v3007, 0.0
    %v3373 = vadd.f32 %v3371, %v3372
    %v3374 = vsel %vm2377, %v3008, 0.0
    %v3375 = vadd.f32 %v3373, %v3374
    %v3376 = vsel %vm2377, %v3009, 0.0
    %v3377 = vadd.f32 %v3375, %v3376
    %v3378 = vsel %vm2377, %v3010, 0.0
    %v3379 = vadd.f32 %v3377, %v3378
    %v3380 = vsel %vm2377, %v3011, 0.0
    %v3381 = vadd.f32 %v3379, %v3380
    %v3382 = vsel %vm2377, %v3012, 0.0
    %v3383 = vadd.f32 %v3381, %v3382
    %v3384 = vsel %vm2377, %v3013, 0.0
    %v3385 = vadd.f32 %v3383, %v3384
    %v3386 = vsel %vm2377, %v3014, 0.0
    %v3387 = vadd.f32 %v3385, %v3386
    %v3388 = vsel %vm2377, %v3015, 0.0
    %v3389 = vadd.f32 %v3387, %v3388
    %v3390 = vsel %vm2377, %v3016, 0.0
    %v3391 = vadd.f32 %v3389, %v3390
    %v3392 = vsel %vm2377, %v3017, 0.0
    %v3393 = vadd.f32 %v3391, %v3392
    %v3394 = vsel %vm2377, %v3018, 0.0
    %v3395 = vadd.f32 %v3393, %v3394
    %v3396 = vsel %vm2377, %v3019, 0.0
    %v3397 = vadd.f32 %v3395, %v3396
    %v3398 = vsel %vm2377, %v3020, 0.0
    %v3399 = vadd.f32 %v3397, %v3398
    %v3400 = vsel %vm2377, %v3021, 0.0
    %v3401 = vadd.f32 %v3399, %v3400
    %v3402 = vsel %vm2377, %v3022, 0.0
    %v3403 = vadd.f32 %v3401, %v3402
    %v3404 = vsel %vm2377, %v3023, 0.0
    %v3405 = vadd.f32 %v3403, %v3404
    %v3406 = vsel %vm2377, %v3024, 0.0
    %v3407 = vadd.f32 %v3405, %v3406
    %v3408 = vsel %vm2377, %v3025, 0.0
    %v3409 = vadd.f32 %v3407, %v3408
    %v3410 = vsel %vm2377, %v3026, 0.0
    %v3411 = vadd.f32 %v3409, %v3410
    %v3412 = vsel %vm2377, %v3027, 0.0
    %v3413 = vadd.f32 %v3411, %v3412
    %v3414 = vsel %vm2377, %v3028, 0.0
    %v3415 = vadd.f32 %v3413, %v3414
    %v3416 = vsel %vm2377, %v3029, 0.0
    %v3417 = vadd.f32 %v3415, %v3416
    %v3418 = vsel %vm2377, %v3030, 0.0
    %v3419 = vadd.f32 %v3417, %v3418
    %v3420 = vsel %vm2377, %v3031, 0.0
    %v3421 = vadd.f32 %v3419, %v3420
    %v3422 = vsel %vm2377, %v3032, 0.0
    %v3423 = vadd.f32 %v3421, %v3422
    %v3424 = vsel %vm2377, %v3033, 0.0
    %v3425 = vadd.f32 %v3423, %v3424
    %v3426 = vsel %vm2377, %v3034, 0.0
    %v3427 = vadd.f32 %v3425, %v3426
    %v3428 = vsel %vm2377, %v3035, 0.0
    %v3429 = vadd.f32 %v3427, %v3428
    %v3430 = vsel %vm2377, %v3036, 0.0
    %v3431 = vadd.f32 %v3429, %v3430
    %v3432 = vsel %vm2377, %v3037, 0.0
    %v3433 = vadd.f32 %v3431, %v3432
    %v3434 = vsel %vm2377, %v3038, 0.0
    %v3435 = vadd.f32 %v3433, %v3434
    %v3436 = vsel %vm2377, %v3039, 0.0
    %v3437 = vadd.f32 %v3435, %v3436
    %v3438 = vsel %vm2377, %v3040, 0.0
    %v3439 = vadd.f32 %v3437, %v3438
    %v3440 = vsel %vm2377, %v3041, 0.0
    %v3441 = vadd.f32 %v3439, %v3440
    %v3442 = vsel %vm2377, %v3042, 0.0
    %v3443 = vadd.f32 %v3441, %v3442
    %v3444 = vsel %vm2377, %v3043, 0.0
    %v3445 = vadd.f32 %v3443, %v3444
    %v3446 = vsel %vm2377, %v3044, 0.0
    %v3447 = vadd.f32 %v3445, %v3446
    %v3448 = vsel %vm2377, %v3045, 0.0
    %v3449 = vadd.f32 %v3447, %v3448
    %v3450 = vsel %vm2377, %v3046, 0.0
    %v3451 = vadd.f32 %v3449, %v3450
    %v3452 = vsel %vm2377, %v3047, 0.0
    %v3453 = vadd.f32 %v3451, %v3452
    %v3454 = vsel %vm2377, %v3048, 0.0
    %v3455 = vadd.f32 %v3453, %v3454
    %v3456 = vsel %vm2377, %v3049, 0.0
    %v3457 = vadd.f32 %v3455, %v3456
    %v3458 = vsel %vm2377, %v3050, 0.0
    %v3459 = vadd.f32 %v3457, %v3458
    %v3460 = vsel %vm2377, %v3051, 0.0
    %v3461 = vadd.f32 %v3459, %v3460
    %v3462 = vsel %vm2377, %v3052, 0.0
    %v3463 = vadd.f32 %v3461, %v3462
    %v3464 = vsel %vm2377, %v3053, 0.0
    %v3465 = vadd.f32 %v3463, %v3464
    %v3466 = vsel %vm2377, %v3054, 0.0
    %v3467 = vadd.f32 %v3465, %v3466
    %v3468 = vsel %vm2377, %v3055, 0.0
    %v3469 = vadd.f32 %v3467, %v3468
    %v3470 = vsel %vm2377, %v3056, 0.0
    %v3471 = vadd.f32 %v3469, %v3470
    %v3472 = vsel %vm2377, %v3057, 0.0
    %v3473 = vadd.f32 %v3471, %v3472
    %v3474 = vsel %vm2377, %v3058, 0.0
    %v3475 = vadd.f32 %v3473, %v3474
    %v3476 = vsel %vm2377, %v3059, 0.0
    %v3477 = vadd.f32 %v3475, %v3476
    %v3478 = vsel %vm2377, %v3060, 0.0
    %v3479 = vadd.f32 %v3477, %v3478
    %v3480 = vsel %vm2377, %v3061, 0.0
    %v3481 = vadd.f32 %v3479, %v3480
    %v3482 = vsel %vm2377, %v3062, 0.0
    %v3483 = vadd.f32 %v3481, %v3482
    %v3484 = vsel %vm2377, %v3063, 0.0
    %v3485 = vadd.f32 %v3483, %v3484
    %v3486 = vsel %vm2377, %v3064, 0.0
    %v3487 = vadd.f32 %v3485, %v3486
    %v3488 = vsel %vm2377, %v3065, 0.0
    %v3489 = vadd.f32 %v3487, %v3488
    %v3490 = vsel %vm2377, %v3066, 0.0
    %v3491 = vadd.f32 %v3489, %v3490
    %v3492 = vsel %vm2377, %v3067, 0.0
    %v3493 = vadd.f32 %v3491, %v3492
    %v3494 = vsel %vm2377, %v3068, 0.0
    %v3495 = vadd.f32 %v3493, %v3494
    %v3496 = vsel %vm2377, %v3069, 0.0
    %v3497 = vadd.f32 %v3495, %v3496
    %v3498 = vsel %vm2377, %v3070, 0.0
    %v3499 = vadd.f32 %v3497, %v3498
    %v3500 = vsel %vm2377, %v3071, 0.0
    %v3501 = vadd.f32 %v3499, %v3500
    %v3502 = vsel %vm2377, %v3072, 0.0
    %v3503 = vadd.f32 %v3501, %v3502
    %v3504 = vsel %vm2377, %v3073, 0.0
    %v3505 = vadd.f32 %v3503, %v3504
    %v3506 = vsel %vm2377, %v3074, 0.0
    %v3507 = vadd.f32 %v3505, %v3506
    %v3508 = vsel %vm2377, %v3075, 0.0
    %v3509 = vadd.f32 %v3507, %v3508
    %v3510 = vsel %vm2377, %v3076, 0.0
    %v3511 = vadd.f32 %v3509, %v3510
    %v3512 = vsel %vm2377, %v3077, 0.0
    %v3513 = vadd.f32 %v3511, %v3512
    %v3514 = vsel %vm2377, %v3078, 0.0
    %v3515 = vadd.f32 %v3513, %v3514
    %v3516 = vsel %vm2377, %v3079, 0.0
    %v3517 = vadd.f32 %v3515, %v3516
    %v3518 = vsel %vm2377, %v3080, 0.0
    %v3519 = vadd.f32 %v3517, %v3518
    %v3520 = vsel %vm2377, %v3081, 0.0
    %v3521 = vadd.f32 %v3519, %v3520
    %v3522 = vsel %vm2377, %v3082, 0.0
    %v3523 = vadd.f32 %v3521, %v3522
    %v3524 = vsel %vm2377, %v3083, 0.0
    %v3525 = vadd.f32 %v3523, %v3524
    %v3526 = vsel %vm2377, %v3084, 0.0
    %v3527 = vadd.f32 %v3525, %v3526
    %v3528 = vsel %vm2377, %v3085, 0.0
    %v3529 = vadd.f32 %v3527, %v3528
    %v3530 = vsel %vm2377, %v3086, 0.0
    %v3531 = vadd.f32 %v3529, %v3530
    %v3532 = vsel %vm2377, %v3087, 0.0
    %v3533 = vadd.f32 %v3531, %v3532
    %v3534 = vsel %vm2377, %v3088, 0.0
    %v3535 = vadd.f32 %v3533, %v3534
    %v3536 = vsel %vm2377, %v3089, 0.0
    %v3537 = vadd.f32 %v3535, %v3536
    %v3538 = vsel %vm2377, %v3090, 0.0
    %v3539 = vadd.f32 %v3537, %v3538
    %v3540 = vsel %vm2377, %v3091, 0.0
    %v3541 = vadd.f32 %v3539, %v3540
    %v3542 = vsel %vm2377, %v3092, 0.0
    %v3543 = vadd.f32 %v3541, %v3542
    %v3544 = vsel %vm2377, %v3093, 0.0
    %v3545 = vadd.f32 %v3543, %v3544
    %v3546 = vsel %vm2377, %v3094, 0.0
    %v3547 = vadd.f32 %v3545, %v3546
    %v3548 = vsel %vm2377, %v3095, 0.0
    %v3549 = vadd.f32 %v3547, %v3548
    %v3550 = vsel %vm2377, %v3096, 0.0
    %v3551 = vadd.f32 %v3549, %v3550
    %v3552 = vsel %vm2377, %v3097, 0.0
    %v3553 = vadd.f32 %v3551, %v3552
    %v3554 = vsel %vm2377, %v3098, 0.0
    %v3555 = vadd.f32 %v3553, %v3554
    %v3556 = vsel %vm2377, %v3099, 0.0
    %v3557 = vadd.f32 %v3555, %v3556
    %v3558 = vsel %vm2377, %v3100, 0.0
    %v3559 = vadd.f32 %v3557, %v3558
    %v3560 = vsel %vm2377, %v3101, 0.0
    %v3561 = vadd.f32 %v3559, %v3560
    %v3562 = vsel %vm2377, %v3102, 0.0
    %v3563 = vadd.f32 %v3561, %v3562
    %v3564 = vsel %vm2377, %v3103, 0.0
    %v3565 = vadd.f32 %v3563, %v3564
    %v3566 = vsel %vm2377, %v3104, 0.0
    %v3567 = vadd.f32 %v3565, %v3566
    %v3568 = vsel %vm2377, %v3105, 0.0
    %v3569 = vadd.f32 %v3567, %v3568
    %v3570 = vsel %vm2377, %v3106, 0.0
    %v3571 = vadd.f32 %v3569, %v3570
    %v3572 = vsel %vm2377, %v3107, 0.0
    %v3573 = vadd.f32 %v3571, %v3572
    %v3574 = vsel %vm2377, %v3108, 0.0
    %v3575 = vadd.f32 %v3573, %v3574
    %v3576 = vsel %vm2377, %v3109, 0.0
    %v3577 = vadd.f32 %v3575, %v3576
    %v3578 = vsel %vm2377, %v3110, 0.0
    %v3579 = vadd.f32 %v3577, %v3578
    %v3580 = vsel %vm2377, %v3111, 0.0
    %v3581 = vadd.f32 %v3579, %v3580
    %v3582 = vsel %vm2377, %v3112, 0.0
    %v3583 = vadd.f32 %v3581, %v3582
    %v3584 = vsel %vm2377, %v3113, 0.0
    %v3585 = vadd.f32 %v3583, %v3584
    %v3586 = vsel %vm2377, %v3114, 0.0
    %v3587 = vadd.f32 %v3585, %v3586
    %v3588 = vsel %vm2377, %v3115, 0.0
    %v3589 = vadd.f32 %v3587, %v3588
    %v3590 = vsel %vm2377, %v3116, 0.0
    %v3591 = vadd.f32 %v3589, %v3590
    %v3592 = vsel %vm2377, %v3117, 0.0
    %v3593 = vadd.f32 %v3591, %v3592
    %v3594 = vsel %vm2377, %v3118, 0.0
    %v3595 = vadd.f32 %v3593, %v3594
    %v3596 = vsel %vm2377, %v3119, 0.0
    %v3597 = vadd.f32 %v3595, %v3596
    %v3598 = vsel %vm2377, %v3120, 0.0
    %v3599 = vadd.f32 %v3597, %v3598
    %v3600 = vsel %vm2377, %v3121, 0.0
    %v3601 = vadd.f32 %v3599, %v3600
    %v3602 = vsel %vm2377, %v3122, 0.0
    %v3603 = vadd.f32 %v3601, %v3602
    %v3604 = vsel %vm2377, %v3123, 0.0
    %v3605 = vadd.f32 %v3603, %v3604
    %v3606 = vsel %vm2377, %v3124, 0.0
    %v3607 = vadd.f32 %v3605, %v3606
    %v3608 = vsel %vm2377, %v3125, 0.0
    %v3609 = vadd.f32 %v3607, %v3608
    %v3610 = vsel %vm2377, %v3126, 0.0
    %v3611 = vadd.f32 %v3609, %v3610
    %v3612 = vsel %vm2377, %v3127, 0.0
    %v3613 = vadd.f32 %v3611, %v3612
    %v3614 = vsel %vm2377, %v3128, 0.0
    %v3615 = vadd.f32 %v3613, %v3614
    %v3616 = vsel %vm2377, %v3129, 0.0
    %v3617 = vadd.f32 %v3615, %v3616
    %v3618 = vsel %vm2377, %v3130, 0.0
    %v3619 = vadd.f32 %v3617, %v3618
    %v3620 = vsel %vm2377, %v3131, 0.0
    %v3621 = vadd.f32 %v3619, %v3620
    %v3622 = vsel %vm2377, %v3132, 0.0
    %v3623 = vadd.f32 %v3621, %v3622
    %v3624 = vsel %vm2377, %v3133, 0.0
    %v3625 = vadd.f32 %v3623, %v3624
    %v3626 = vsel %vm2377, %v3134, 0.0
    %v3627 = vadd.f32 %v3625, %v3626
    %v3628 = vsel %vm2377, %v3135, 0.0
    %v3629 = vadd.f32 %v3627, %v3628
    %v3630 = vsel %vm2377, %v3136, 0.0
    %v3631 = vadd.f32 %v3629, %v3630
    %v3632 = vsel %vm2377, %v3137, 0.0
    %v3633 = vadd.f32 %v3631, %v3632
    %v3634 = vsel %vm2377, %v3138, 0.0
    %v3635 = vadd.f32 %v3633, %v3634
    %v3636 = vsel %vm2377, %v3139, 0.0
    %v3637 = vadd.f32 %v3635, %v3636
    %v3638 = vsel %vm2377, %v3140, 0.0
    %v3639 = vadd.f32 %v3637, %v3638
    %v3640 = vsel %vm2377, %v3141, 0.0
    %v3641 = vadd.f32 %v3639, %v3640
    %v3642 = vsel %vm2377, %v3142, 0.0
    %v3643 = vadd.f32 %v3641, %v3642
    %v3644 = vsel %vm2377, %v3143, 0.0
    %v3645 = vadd.f32 %v3643, %v3644
    %v3646 = vsel %vm2377, %v3144, 0.0
    %v3647 = vadd.f32 %v3645, %v3646
    %v3648 = vsel %vm2377, %v3145, 0.0
    %v3649 = vadd.f32 %v3647, %v3648
    %v3650 = vsel %vm2377, %v3146, 0.0
    %v3651 = vadd.f32 %v3649, %v3650
    %v3652 = vsel %vm2377, %v3147, 0.0
    %v3653 = vadd.f32 %v3651, %v3652
    %v3654 = vsel %vm2377, %v3148, 0.0
    %v3655 = vadd.f32 %v3653, %v3654
    %v3656 = vsel %vm2377, %v3149, 0.0
    %v3657 = vadd.f32 %v3655, %v3656
    %v3658 = vsel %vm2377, %v3150, 0.0
    %v3659 = vadd.f32 %v3657, %v3658
    %v3660 = vsel %vm2377, %v3151, 0.0
    %v3661 = vadd.f32 %v3659, %v3660
    %v3662 = vsel %vm2377, %v3152, 0.0
    %v3663 = vadd.f32 %v3661, %v3662
    %v3664 = vrot.slane %v3663, 4
    %v3665 = vadd.f32 %v3663, %v3664
    %v3666 = vrot.slane %v3665, 2
    %v3667 = vadd.f32 %v3665, %v3666
    %v3668 = vrot.slane %v3667, 1
    %v3669 = vadd.f32 %v3667, %v3668
    %3670 = vst.msk [vmem:[#allocation4] sm:$0x1] %vm2895, %v3669
    %v3671 = vpack.c.bf16 %v1358, %v1355
    %v3672 = vpack.c.bf16 %v1366, %v1363
    %v3673 = vpack.c.bf16 %v1374, %v1371
    %v3674 = vpack.c.bf16 %v1382, %v1379
    %v3675 = vpack.c.bf16 %v1390, %v1387
    %v3676 = vpack.c.bf16 %v1398, %v1395
    %v3677 = vpack.c.bf16 %v1406, %v1403
    %v3678 = vpack.c.bf16 %v1414, %v1411
    %v3679 = vpack.c.bf16 %v1422, %v1419
    %v3680 = vpack.c.bf16 %v1430, %v1427
    %v3681 = vpack.c.bf16 %v1438, %v1435
    %v3682 = vpack.c.bf16 %v1446, %v1443
    %v3683 = vpack.c.bf16 %v1454, %v1451
    %v3684 = vpack.c.bf16 %v1462, %v1459
    %v3685 = vpack.c.bf16 %v1470, %v1467
    %v3686 = vpack.c.bf16 %v1478, %v1475
    %v3687 = vpack.c.bf16 %v1486, %v1483
    %v3688 = vpack.c.bf16 %v1494, %v1491
    %v3689 = vpack.c.bf16 %v1502, %v1499
    %v3690 = vpack.c.bf16 %v1510, %v1507
    %v3691 = vpack.c.bf16 %v1518, %v1515
    %v3692 = vpack.c.bf16 %v1526, %v1523
    %v3693 = vpack.c.bf16 %v1534, %v1531
    %v3694 = vpack.c.bf16 %v1542, %v1539
    %v3695 = vpack.c.bf16 %v1550, %v1547
    %v3696 = vpack.c.bf16 %v1558, %v1555
    %v3697 = vpack.c.bf16 %v1566, %v1563
    %v3698 = vpack.c.bf16 %v1574, %v1571
    %v3699 = vpack.c.bf16 %v1582, %v1579
    %v3700 = vpack.c.bf16 %v1590, %v1587
    %v3701 = vpack.c.bf16 %v1598, %v1595
    %v3702 = vpack.c.bf16 %v1606, %v1603
    %v3703 = vpack.c.bf16 %v1614, %v1611
    %v3704 = vpack.c.bf16 %v1622, %v1619
    %v3705 = vpack.c.bf16 %v1630, %v1627
    %v3706 = vpack.c.bf16 %v1638, %v1635
    %v3707 = vpack.c.bf16 %v1646, %v1643
    %v3708 = vpack.c.bf16 %v1654, %v1651
    %v3709 = vpack.c.bf16 %v1662, %v1659
    %v3710 = vpack.c.bf16 %v1670, %v1667
    %v3711 = vpack.c.bf16 %v1678, %v1675
    %v3712 = vpack.c.bf16 %v1686, %v1683
    %v3713 = vpack.c.bf16 %v1694, %v1691
    %v3714 = vpack.c.bf16 %v1702, %v1699
    %v3715 = vpack.c.bf16 %v1710, %v1707
    %v3716 = vpack.c.bf16 %v1718, %v1715
    %v3717 = vpack.c.bf16 %v1726, %v1723
    %v3718 = vpack.c.bf16 %v1734, %v1731
    %v3719 = vpack.c.bf16 %v1742, %v1739
    %v3720 = vpack.c.bf16 %v1750, %v1747
    %v3721 = vpack.c.bf16 %v1758, %v1755
    %v3722 = vpack.c.bf16 %v1766, %v1763
    %v3723 = vpack.c.bf16 %v1774, %v1771
    %v3724 = vpack.c.bf16 %v1782, %v1779
    %v3725 = vpack.c.bf16 %v1790, %v1787
    %v3726 = vpack.c.bf16 %v1798, %v1795
    %v3727 = vpack.c.bf16 %v1806, %v1803
    %v3728 = vpack.c.bf16 %v1814, %v1811
    %v3729 = vpack.c.bf16 %v1822, %v1819
    %v3730 = vpack.c.bf16 %v1830, %v1827
    %v3731 = vpack.c.bf16 %v1838, %v1835
    %v3732 = vpack.c.bf16 %v1846, %v1843
    %v3733 = vpack.c.bf16 %v1854, %v1851
    %v3734 = vpack.c.bf16 %v1862, %v1859
    %v3735 = vpack.c.bf16 %v1870, %v1867
    %v3736 = vpack.c.bf16 %v1878, %v1875
    %v3737 = vpack.c.bf16 %v1886, %v1883
    %v3738 = vpack.c.bf16 %v1894, %v1891
    %v3739 = vpack.c.bf16 %v1902, %v1899
    %v3740 = vpack.c.bf16 %v1910, %v1907
    %v3741 = vpack.c.bf16 %v1918, %v1915
    %v3742 = vpack.c.bf16 %v1926, %v1923
    %v3743 = vpack.c.bf16 %v1934, %v1931
    %v3744 = vpack.c.bf16 %v1942, %v1939
    %v3745 = vpack.c.bf16 %v1950, %v1947
    %v3746 = vpack.c.bf16 %v1958, %v1955
    %v3747 = vpack.c.bf16 %v1966, %v1963
    %v3748 = vpack.c.bf16 %v1974, %v1971
    %v3749 = vpack.c.bf16 %v1982, %v1979
    %v3750 = vpack.c.bf16 %v1990, %v1987
    %v3751 = vpack.c.bf16 %v1998, %v1995
    %v3752 = vpack.c.bf16 %v2006, %v2003
    %v3753 = vpack.c.bf16 %v2014, %v2011
    %v3754 = vpack.c.bf16 %v2022, %v2019
    %v3755 = vpack.c.bf16 %v2030, %v2027
    %v3756 = vpack.c.bf16 %v2038, %v2035
    %v3757 = vpack.c.bf16 %v2046, %v2043
    %v3758 = vpack.c.bf16 %v2054, %v2051
    %v3759 = vpack.c.bf16 %v2062, %v2059
    %v3760 = vpack.c.bf16 %v2070, %v2067
    %v3761 = vpack.c.bf16 %v2078, %v2075
    %v3762 = vpack.c.bf16 %v2086, %v2083
    %v3763 = vpack.c.bf16 %v2094, %v2091
    %v3764 = vpack.c.bf16 %v2102, %v2099
    %v3765 = vpack.c.bf16 %v2110, %v2107
    %v3766 = vpack.c.bf16 %v2118, %v2115
    %v3767 = vpack.c.bf16 %v2126, %v2123
    %v3768 = vpack.c.bf16 %v2134, %v2131
    %v3769 = vpack.c.bf16 %v2142, %v2139
    %v3770 = vpack.c.bf16 %v2150, %v2147
    %v3771 = vpack.c.bf16 %v2158, %v2155
    %v3772 = vpack.c.bf16 %v2166, %v2163
    %v3773 = vpack.c.bf16 %v2174, %v2171
    %v3774 = vpack.c.bf16 %v2182, %v2179
    %v3775 = vpack.c.bf16 %v2190, %v2187
    %v3776 = vpack.c.bf16 %v2198, %v2195
    %v3777 = vpack.c.bf16 %v2206, %v2203
    %v3778 = vpack.c.bf16 %v2214, %v2211
    %v3779 = vpack.c.bf16 %v2222, %v2219
    %v3780 = vpack.c.bf16 %v2230, %v2227
    %v3781 = vpack.c.bf16 %v2238, %v2235
    %v3782 = vpack.c.bf16 %v2246, %v2243
    %v3783 = vpack.c.bf16 %v2254, %v2251
    %v3784 = vpack.c.bf16 %v2262, %v2259
    %v3785 = vpack.c.bf16 %v2270, %v2267
    %v3786 = vpack.c.bf16 %v2278, %v2275
    %v3787 = vpack.c.bf16 %v2286, %v2283
    %v3788 = vpack.c.bf16 %v2294, %v2291
    %v3789 = vpack.c.bf16 %v2302, %v2299
    %v3790 = vpack.c.bf16 %v2310, %v2307
    %v3791 = vpack.c.bf16 %v2318, %v2315
    %v3792 = vpack.c.bf16 %v2326, %v2323
    %v3793 = vpack.c.bf16 %v2334, %v2331
    %v3794 = vpack.c.bf16 %v2342, %v2339
    %v3795 = vpack.c.bf16 %v2350, %v2347
    %v3796 = vpack.c.bf16 %v2358, %v2355
    %v3797 = vpack.c.bf16 %v2366, %v2363
    %v3798 = vpack.c.bf16 %v2374, %v2371
    %v3927 = vunpack.c.l.b16 %v3671
    %v3928 = vunpack.c.h.b16 %v3671
    %v3929 = vunpack.c.l.b16 %v3672
    %v3930 = vunpack.c.h.b16 %v3672
    %v3931 = vunpack.c.l.b16 %v3673
    %v3932 = vunpack.c.h.b16 %v3673
    %v3933 = vunpack.c.l.b16 %v3674
    %v3934 = vunpack.c.h.b16 %v3674
    %v3935 = vunpack.c.l.b16 %v3675
    %v3936 = vunpack.c.h.b16 %v3675
    %v3937 = vunpack.c.l.b16 %v3676
    %v3938 = vunpack.c.h.b16 %v3676
    %v3939 = vunpack.c.l.b16 %v3677
    %v3940 = vunpack.c.h.b16 %v3677
    %v3941 = vunpack.c.l.b16 %v3678
    %v3942 = vunpack.c.h.b16 %v3678
    %v3943 = vunpack.c.l.b16 %v3679
    %v3944 = vunpack.c.h.b16 %v3679
    %v3945 = vunpack.c.l.b16 %v3680
    %v3946 = vunpack.c.h.b16 %v3680
    %v3947 = vunpack.c.l.b16 %v3681
    %v3948 = vunpack.c.h.b16 %v3681
    %v3949 = vunpack.c.l.b16 %v3682
    %v3950 = vunpack.c.h.b16 %v3682
    %v3951 = vunpack.c.l.b16 %v3683
    %v3952 = vunpack.c.h.b16 %v3683
    %v3953 = vunpack.c.l.b16 %v3684
    %v3954 = vunpack.c.h.b16 %v3684
    %v3955 = vunpack.c.l.b16 %v3685
    %v3956 = vunpack.c.h.b16 %v3685
    %v3957 = vunpack.c.l.b16 %v3686
    %v3958 = vunpack.c.h.b16 %v3686
    %v3959 = vunpack.c.l.b16 %v3687
    %v3960 = vunpack.c.h.b16 %v3687
    %v3961 = vunpack.c.l.b16 %v3688
    %v3962 = vunpack.c.h.b16 %v3688
    %v3963 = vunpack.c.l.b16 %v3689
    %v3964 = vunpack.c.h.b16 %v3689
    %v3965 = vunpack.c.l.b16 %v3690
    %v3966 = vunpack.c.h.b16 %v3690
    %v3967 = vunpack.c.l.b16 %v3691
    %v3968 = vunpack.c.h.b16 %v3691
    %v3969 = vunpack.c.l.b16 %v3692
    %v3970 = vunpack.c.h.b16 %v3692
    %v3971 = vunpack.c.l.b16 %v3693
    %v3972 = vunpack.c.h.b16 %v3693
    %v3973 = vunpack.c.l.b16 %v3694
    %v3974 = vunpack.c.h.b16 %v3694
    %v3975 = vunpack.c.l.b16 %v3695
    %v3976 = vunpack.c.h.b16 %v3695
    %v3977 = vunpack.c.l.b16 %v3696
    %v3978 = vunpack.c.h.b16 %v3696
    %v3979 = vunpack.c.l.b16 %v3697
    %v3980 = vunpack.c.h.b16 %v3697
    %v3981 = vunpack.c.l.b16 %v3698
    %v3982 = vunpack.c.h.b16 %v3698
    %v3983 = vunpack.c.l.b16 %v3699
    %v3984 = vunpack.c.h.b16 %v3699
    %v3985 = vunpack.c.l.b16 %v3700
    %v3986 = vunpack.c.h.b16 %v3700
    %v3987 = vunpack.c.l.b16 %v3701
    %v3988 = vunpack.c.h.b16 %v3701
    %v3989 = vunpack.c.l.b16 %v3702
    %v3990 = vunpack.c.h.b16 %v3702
    %v3991 = vunpack.c.l.b16 %v3703
    %v3992 = vunpack.c.h.b16 %v3703
    %v3993 = vunpack.c.l.b16 %v3704
    %v3994 = vunpack.c.h.b16 %v3704
    %v3995 = vunpack.c.l.b16 %v3705
    %v3996 = vunpack.c.h.b16 %v3705
    %v3997 = vunpack.c.l.b16 %v3706
    %v3998 = vunpack.c.h.b16 %v3706
    %v3999 = vunpack.c.l.b16 %v3707
    %v4000 = vunpack.c.h.b16 %v3707
    %v4001 = vunpack.c.l.b16 %v3708
    %v4002 = vunpack.c.h.b16 %v3708
    %v4003 = vunpack.c.l.b16 %v3709
    %v4004 = vunpack.c.h.b16 %v3709
    %v4005 = vunpack.c.l.b16 %v3710
    %v4006 = vunpack.c.h.b16 %v3710
    %v4007 = vunpack.c.l.b16 %v3711
    %v4008 = vunpack.c.h.b16 %v3711
    %v4009 = vunpack.c.l.b16 %v3712
    %v4010 = vunpack.c.h.b16 %v3712
    %v4011 = vunpack.c.l.b16 %v3713
    %v4012 = vunpack.c.h.b16 %v3713
    %v4013 = vunpack.c.l.b16 %v3714
    %v4014 = vunpack.c.h.b16 %v3714
    %v4015 = vunpack.c.l.b16 %v3715
    %v4016 = vunpack.c.h.b16 %v3715
    %v4017 = vunpack.c.l.b16 %v3716
    %v4018 = vunpack.c.h.b16 %v3716
    %v4019 = vunpack.c.l.b16 %v3717
    %v4020 = vunpack.c.h.b16 %v3717
    %v4021 = vunpack.c.l.b16 %v3718
    %v4022 = vunpack.c.h.b16 %v3718
    %v4023 = vunpack.c.l.b16 %v3719
    %v4024 = vunpack.c.h.b16 %v3719
    %v4025 = vunpack.c.l.b16 %v3720
    %v4026 = vunpack.c.h.b16 %v3720
    %v4027 = vunpack.c.l.b16 %v3721
    %v4028 = vunpack.c.h.b16 %v3721
    %v4029 = vunpack.c.l.b16 %v3722
    %v4030 = vunpack.c.h.b16 %v3722
    %v4031 = vunpack.c.l.b16 %v3723
    %v4032 = vunpack.c.h.b16 %v3723
    %v4033 = vunpack.c.l.b16 %v3724
    %v4034 = vunpack.c.h.b16 %v3724
    %v4035 = vunpack.c.l.b16 %v3725
    %v4036 = vunpack.c.h.b16 %v3725
    %v4037 = vunpack.c.l.b16 %v3726
    %v4038 = vunpack.c.h.b16 %v3726
    %v4039 = vunpack.c.l.b16 %v3727
    %v4040 = vunpack.c.h.b16 %v3727
    %v4041 = vunpack.c.l.b16 %v3728
    %v4042 = vunpack.c.h.b16 %v3728
    %v4043 = vunpack.c.l.b16 %v3729
    %v4044 = vunpack.c.h.b16 %v3729
    %v4045 = vunpack.c.l.b16 %v3730
    %v4046 = vunpack.c.h.b16 %v3730
    %v4047 = vunpack.c.l.b16 %v3731
    %v4048 = vunpack.c.h.b16 %v3731
    %v4049 = vunpack.c.l.b16 %v3732
    %v4050 = vunpack.c.h.b16 %v3732
    %v4051 = vunpack.c.l.b16 %v3733
    %v4052 = vunpack.c.h.b16 %v3733
    %v4053 = vunpack.c.l.b16 %v3734
    %v4054 = vunpack.c.h.b16 %v3734
    %v4055 = vunpack.c.l.b16 %v3735
    %v4056 = vunpack.c.h.b16 %v3735
    %v4057 = vunpack.c.l.b16 %v3736
    %v4058 = vunpack.c.h.b16 %v3736
    %v4059 = vunpack.c.l.b16 %v3737
    %v4060 = vunpack.c.h.b16 %v3737
    %v4061 = vunpack.c.l.b16 %v3738
    %v4062 = vunpack.c.h.b16 %v3738
    %v4063 = vunpack.c.l.b16 %v3739
    %v4064 = vunpack.c.h.b16 %v3739
    %v4065 = vunpack.c.l.b16 %v3740
    %v4066 = vunpack.c.h.b16 %v3740
    %v4067 = vunpack.c.l.b16 %v3741
    %v4068 = vunpack.c.h.b16 %v3741
    %v4069 = vunpack.c.l.b16 %v3742
    %v4070 = vunpack.c.h.b16 %v3742
    %v4071 = vunpack.c.l.b16 %v3743
    %v4072 = vunpack.c.h.b16 %v3743
    %v4073 = vunpack.c.l.b16 %v3744
    %v4074 = vunpack.c.h.b16 %v3744
    %v4075 = vunpack.c.l.b16 %v3745
    %v4076 = vunpack.c.h.b16 %v3745
    %v4077 = vunpack.c.l.b16 %v3746
    %v4078 = vunpack.c.h.b16 %v3746
    %v4079 = vunpack.c.l.b16 %v3747
    %v4080 = vunpack.c.h.b16 %v3747
    %v4081 = vunpack.c.l.b16 %v3748
    %v4082 = vunpack.c.h.b16 %v3748
    %v4083 = vunpack.c.l.b16 %v3749
    %v4084 = vunpack.c.h.b16 %v3749
    %v4085 = vunpack.c.l.b16 %v3750
    %v4086 = vunpack.c.h.b16 %v3750
    %v4087 = vunpack.c.l.b16 %v3751
    %v4088 = vunpack.c.h.b16 %v3751
    %v4089 = vunpack.c.l.b16 %v3752
    %v4090 = vunpack.c.h.b16 %v3752
    %v4091 = vunpack.c.l.b16 %v3753
    %v4092 = vunpack.c.h.b16 %v3753
    %v4093 = vunpack.c.l.b16 %v3754
    %v4094 = vunpack.c.h.b16 %v3754
    %v4095 = vunpack.c.l.b16 %v3755
    %v4096 = vunpack.c.h.b16 %v3755
    %v4097 = vunpack.c.l.b16 %v3756
    %v4098 = vunpack.c.h.b16 %v3756
    %v4099 = vunpack.c.l.b16 %v3757
    %v4100 = vunpack.c.h.b16 %v3757
    %v4101 = vunpack.c.l.b16 %v3758
    %v4102 = vunpack.c.h.b16 %v3758
    %v4103 = vunpack.c.l.b16 %v3759
    %v4104 = vunpack.c.h.b16 %v3759
    %v4105 = vunpack.c.l.b16 %v3760
    %v4106 = vunpack.c.h.b16 %v3760
    %v4107 = vunpack.c.l.b16 %v3761
    %v4108 = vunpack.c.h.b16 %v3761
    %v4109 = vunpack.c.l.b16 %v3762
    %v4110 = vunpack.c.h.b16 %v3762
    %v4111 = vunpack.c.l.b16 %v3763
    %v4112 = vunpack.c.h.b16 %v3763
    %v4113 = vunpack.c.l.b16 %v3764
    %v4114 = vunpack.c.h.b16 %v3764
    %v4115 = vunpack.c.l.b16 %v3765
    %v4116 = vunpack.c.h.b16 %v3765
    %v4117 = vunpack.c.l.b16 %v3766
    %v4118 = vunpack.c.h.b16 %v3766
    %v4119 = vunpack.c.l.b16 %v3767
    %v4120 = vunpack.c.h.b16 %v3767
    %v4121 = vunpack.c.l.b16 %v3768
    %v4122 = vunpack.c.h.b16 %v3768
    %v4123 = vunpack.c.l.b16 %v3769
    %v4124 = vunpack.c.h.b16 %v3769
    %v4125 = vunpack.c.l.b16 %v3770
    %v4126 = vunpack.c.h.b16 %v3770
    %v4127 = vunpack.c.l.b16 %v3771
    %v4128 = vunpack.c.h.b16 %v3771
    %v4129 = vunpack.c.l.b16 %v3772
    %v4130 = vunpack.c.h.b16 %v3772
    %v4131 = vunpack.c.l.b16 %v3773
    %v4132 = vunpack.c.h.b16 %v3773
    %v4133 = vunpack.c.l.b16 %v3774
    %v4134 = vunpack.c.h.b16 %v3774
    %v4135 = vunpack.c.l.b16 %v3775
    %v4136 = vunpack.c.h.b16 %v3775
    %v4137 = vunpack.c.l.b16 %v3776
    %v4138 = vunpack.c.h.b16 %v3776
    %v4139 = vunpack.c.l.b16 %v3777
    %v4140 = vunpack.c.h.b16 %v3777
    %v4141 = vunpack.c.l.b16 %v3778
    %v4142 = vunpack.c.h.b16 %v3778
    %v4143 = vunpack.c.l.b16 %v3779
    %v4144 = vunpack.c.h.b16 %v3779
    %v4145 = vunpack.c.l.b16 %v3780
    %v4146 = vunpack.c.h.b16 %v3780
    %v4147 = vunpack.c.l.b16 %v3781
    %v4148 = vunpack.c.h.b16 %v3781
    %v4149 = vunpack.c.l.b16 %v3782
    %v4150 = vunpack.c.h.b16 %v3782
    %v4151 = vunpack.c.l.b16 %v3783
    %v4152 = vunpack.c.h.b16 %v3783
    %v4153 = vunpack.c.l.b16 %v3784
    %v4154 = vunpack.c.h.b16 %v3784
    %v4155 = vunpack.c.l.b16 %v3785
    %v4156 = vunpack.c.h.b16 %v3785
    %v4157 = vunpack.c.l.b16 %v3786
    %v4158 = vunpack.c.h.b16 %v3786
    %v4159 = vunpack.c.l.b16 %v3787
    %v4160 = vunpack.c.h.b16 %v3787
    %v4161 = vunpack.c.l.b16 %v3788
    %v4162 = vunpack.c.h.b16 %v3788
    %v4163 = vunpack.c.l.b16 %v3789
    %v4164 = vunpack.c.h.b16 %v3789
    %v4165 = vunpack.c.l.b16 %v3790
    %v4166 = vunpack.c.h.b16 %v3790
    %v4167 = vunpack.c.l.b16 %v3791
    %v4168 = vunpack.c.h.b16 %v3791
    %v4169 = vunpack.c.l.b16 %v3792
    %v4170 = vunpack.c.h.b16 %v3792
    %v4171 = vunpack.c.l.b16 %v3793
    %v4172 = vunpack.c.h.b16 %v3793
    %v4173 = vunpack.c.l.b16 %v3794
    %v4174 = vunpack.c.h.b16 %v3794
    %v4175 = vunpack.c.l.b16 %v3795
    %v4176 = vunpack.c.h.b16 %v3795
    %v4177 = vunpack.c.l.b16 %v3796
    %v4178 = vunpack.c.h.b16 %v3796
    %v4179 = vunpack.c.l.b16 %v3797
    %v4180 = vunpack.c.h.b16 %v3797
    %v4181 = vunpack.c.l.b16 %v3798
    %v4182 = vunpack.c.h.b16 %v3798
    %v4183 = vpack.c.b16 %v3927, %v3927
    %v4184 = vpack.c.b16 %v3928, %v3928
    %v4185 = vpack.c.b16 %v3929, %v3929
    %v4186 = vpack.c.b16 %v3930, %v3930
    %v4187 = vpack.c.b16 %v3931, %v3931
    %v4188 = vpack.c.b16 %v3932, %v3932
    %v4189 = vpack.c.b16 %v3933, %v3933
    %v4190 = vpack.c.b16 %v3934, %v3934
    %v4191 = vpack.c.b16 %v3935, %v3935
    %v4192 = vpack.c.b16 %v3936, %v3936
    %v4193 = vpack.c.b16 %v3937, %v3937
    %v4194 = vpack.c.b16 %v3938, %v3938
    %v4195 = vpack.c.b16 %v3939, %v3939
    %v4196 = vpack.c.b16 %v3940, %v3940
    %v4197 = vpack.c.b16 %v3941, %v3941
    %v4198 = vpack.c.b16 %v3942, %v3942
    %v4199 = vpack.c.b16 %v3943, %v3943
    %v4200 = vpack.c.b16 %v3944, %v3944
    %v4201 = vpack.c.b16 %v3945, %v3945
    %v4202 = vpack.c.b16 %v3946, %v3946
    %v4203 = vpack.c.b16 %v3947, %v3947
    %v4204 = vpack.c.b16 %v3948, %v3948
    %v4205 = vpack.c.b16 %v3949, %v3949
    %v4206 = vpack.c.b16 %v3950, %v3950
    %v4207 = vpack.c.b16 %v3951, %v3951
    %v4208 = vpack.c.b16 %v3952, %v3952
    %v4209 = vpack.c.b16 %v3953, %v3953
    %v4210 = vpack.c.b16 %v3954, %v3954
    %v4211 = vpack.c.b16 %v3955, %v3955
    %v4212 = vpack.c.b16 %v3956, %v3956
    %v4213 = vpack.c.b16 %v3957, %v3957
    %v4214 = vpack.c.b16 %v3958, %v3958
    %v4215 = vpack.c.b16 %v3959, %v3959
    %v4216 = vpack.c.b16 %v3960, %v3960
    %v4217 = vpack.c.b16 %v3961, %v3961
    %v4218 = vpack.c.b16 %v3962, %v3962
    %v4219 = vpack.c.b16 %v3963, %v3963
    %v4220 = vpack.c.b16 %v3964, %v3964
    %v4221 = vpack.c.b16 %v3965, %v3965
    %v4222 = vpack.c.b16 %v3966, %v3966
    %v4223 = vpack.c.b16 %v3967, %v3967
    %v4224 = vpack.c.b16 %v3968, %v3968
    %v4225 = vpack.c.b16 %v3969, %v3969
    %v4226 = vpack.c.b16 %v3970, %v3970
    %v4227 = vpack.c.b16 %v3971, %v3971
    %v4228 = vpack.c.b16 %v3972, %v3972
    %v4229 = vpack.c.b16 %v3973, %v3973
    %v4230 = vpack.c.b16 %v3974, %v3974
    %v4231 = vpack.c.b16 %v3975, %v3975
    %v4232 = vpack.c.b16 %v3976, %v3976
    %v4233 = vpack.c.b16 %v3977, %v3977
    %v4234 = vpack.c.b16 %v3978, %v3978
    %v4235 = vpack.c.b16 %v3979, %v3979
    %v4236 = vpack.c.b16 %v3980, %v3980
    %v4237 = vpack.c.b16 %v3981, %v3981
    %v4238 = vpack.c.b16 %v3982, %v3982
    %v4239 = vpack.c.b16 %v3983, %v3983
    %v4240 = vpack.c.b16 %v3984, %v3984
    %v4241 = vpack.c.b16 %v3985, %v3985
    %v4242 = vpack.c.b16 %v3986, %v3986
    %v4243 = vpack.c.b16 %v3987, %v3987
    %v4244 = vpack.c.b16 %v3988, %v3988
    %v4245 = vpack.c.b16 %v3989, %v3989
    %v4246 = vpack.c.b16 %v3990, %v3990
    %v4247 = vpack.c.b16 %v3991, %v3991
    %v4248 = vpack.c.b16 %v3992, %v3992
    %v4249 = vpack.c.b16 %v3993, %v3993
    %v4250 = vpack.c.b16 %v3994, %v3994
    %v4251 = vpack.c.b16 %v3995, %v3995
    %v4252 = vpack.c.b16 %v3996, %v3996
    %v4253 = vpack.c.b16 %v3997, %v3997
    %v4254 = vpack.c.b16 %v3998, %v3998
    %v4255 = vpack.c.b16 %v3999, %v3999
    %v4256 = vpack.c.b16 %v4000, %v4000
    %v4257 = vpack.c.b16 %v4001, %v4001
    %v4258 = vpack.c.b16 %v4002, %v4002
    %v4259 = vpack.c.b16 %v4003, %v4003
    %v4260 = vpack.c.b16 %v4004, %v4004
    %v4261 = vpack.c.b16 %v4005, %v4005
    %v4262 = vpack.c.b16 %v4006, %v4006
    %v4263 = vpack.c.b16 %v4007, %v4007
    %v4264 = vpack.c.b16 %v4008, %v4008
    %v4265 = vpack.c.b16 %v4009, %v4009
    %v4266 = vpack.c.b16 %v4010, %v4010
    %v4267 = vpack.c.b16 %v4011, %v4011
    %v4268 = vpack.c.b16 %v4012, %v4012
    %v4269 = vpack.c.b16 %v4013, %v4013
    %v4270 = vpack.c.b16 %v4014, %v4014
    %v4271 = vpack.c.b16 %v4015, %v4015
    %v4272 = vpack.c.b16 %v4016, %v4016
    %v4273 = vpack.c.b16 %v4017, %v4017
    %v4274 = vpack.c.b16 %v4018, %v4018
    %v4275 = vpack.c.b16 %v4019, %v4019
    %v4276 = vpack.c.b16 %v4020, %v4020
    %v4277 = vpack.c.b16 %v4021, %v4021
    %v4278 = vpack.c.b16 %v4022, %v4022
    %v4279 = vpack.c.b16 %v4023, %v4023
    %v4280 = vpack.c.b16 %v4024, %v4024
    %v4281 = vpack.c.b16 %v4025, %v4025
    %v4282 = vpack.c.b16 %v4026, %v4026
    %v4283 = vpack.c.b16 %v4027, %v4027
    %v4284 = vpack.c.b16 %v4028, %v4028
    %v4285 = vpack.c.b16 %v4029, %v4029
    %v4286 = vpack.c.b16 %v4030, %v4030
    %v4287 = vpack.c.b16 %v4031, %v4031
    %v4288 = vpack.c.b16 %v4032, %v4032
    %v4289 = vpack.c.b16 %v4033, %v4033
    %v4290 = vpack.c.b16 %v4034, %v4034
    %v4291 = vpack.c.b16 %v4035, %v4035
    %v4292 = vpack.c.b16 %v4036, %v4036
    %v4293 = vpack.c.b16 %v4037, %v4037
    %v4294 = vpack.c.b16 %v4038, %v4038
    %v4295 = vpack.c.b16 %v4039, %v4039
    %v4296 = vpack.c.b16 %v4040, %v4040
    %v4297 = vpack.c.b16 %v4041, %v4041
    %v4298 = vpack.c.b16 %v4042, %v4042
    %v4299 = vpack.c.b16 %v4043, %v4043
    %v4300 = vpack.c.b16 %v4044, %v4044
    %v4301 = vpack.c.b16 %v4045, %v4045
    %v4302 = vpack.c.b16 %v4046, %v4046
    %v4303 = vpack.c.b16 %v4047, %v4047
    %v4304 = vpack.c.b16 %v4048, %v4048
    %v4305 = vpack.c.b16 %v4049, %v4049
    %v4306 = vpack.c.b16 %v4050, %v4050
    %v4307 = vpack.c.b16 %v4051, %v4051
    %v4308 = vpack.c.b16 %v4052, %v4052
    %v4309 = vpack.c.b16 %v4053, %v4053
    %v4310 = vpack.c.b16 %v4054, %v4054
    %v4311 = vpack.c.b16 %v4055, %v4055
    %v4312 = vpack.c.b16 %v4056, %v4056
    %v4313 = vpack.c.b16 %v4057, %v4057
    %v4314 = vpack.c.b16 %v4058, %v4058
    %v4315 = vpack.c.b16 %v4059, %v4059
    %v4316 = vpack.c.b16 %v4060, %v4060
    %v4317 = vpack.c.b16 %v4061, %v4061
    %v4318 = vpack.c.b16 %v4062, %v4062
    %v4319 = vpack.c.b16 %v4063, %v4063
    %v4320 = vpack.c.b16 %v4064, %v4064
    %v4321 = vpack.c.b16 %v4065, %v4065
    %v4322 = vpack.c.b16 %v4066, %v4066
    %v4323 = vpack.c.b16 %v4067, %v4067
    %v4324 = vpack.c.b16 %v4068, %v4068
    %v4325 = vpack.c.b16 %v4069, %v4069
    %v4326 = vpack.c.b16 %v4070, %v4070
    %v4327 = vpack.c.b16 %v4071, %v4071
    %v4328 = vpack.c.b16 %v4072, %v4072
    %v4329 = vpack.c.b16 %v4073, %v4073
    %v4330 = vpack.c.b16 %v4074, %v4074
    %v4331 = vpack.c.b16 %v4075, %v4075
    %v4332 = vpack.c.b16 %v4076, %v4076
    %v4333 = vpack.c.b16 %v4077, %v4077
    %v4334 = vpack.c.b16 %v4078, %v4078
    %v4335 = vpack.c.b16 %v4079, %v4079
    %v4336 = vpack.c.b16 %v4080, %v4080
    %v4337 = vpack.c.b16 %v4081, %v4081
    %v4338 = vpack.c.b16 %v4082, %v4082
    %v4339 = vpack.c.b16 %v4083, %v4083
    %v4340 = vpack.c.b16 %v4084, %v4084
    %v4341 = vpack.c.b16 %v4085, %v4085
    %v4342 = vpack.c.b16 %v4086, %v4086
    %v4343 = vpack.c.b16 %v4087, %v4087
    %v4344 = vpack.c.b16 %v4088, %v4088
    %v4345 = vpack.c.b16 %v4089, %v4089
    %v4346 = vpack.c.b16 %v4090, %v4090
    %v4347 = vpack.c.b16 %v4091, %v4091
    %v4348 = vpack.c.b16 %v4092, %v4092
    %v4349 = vpack.c.b16 %v4093, %v4093
    %v4350 = vpack.c.b16 %v4094, %v4094
    %v4351 = vpack.c.b16 %v4095, %v4095
    %v4352 = vpack.c.b16 %v4096, %v4096
    %v4353 = vpack.c.b16 %v4097, %v4097
    %v4354 = vpack.c.b16 %v4098, %v4098
    %v4355 = vpack.c.b16 %v4099, %v4099
    %v4356 = vpack.c.b16 %v4100, %v4100
    %v4357 = vpack.c.b16 %v4101, %v4101
    %v4358 = vpack.c.b16 %v4102, %v4102
    %v4359 = vpack.c.b16 %v4103, %v4103
    %v4360 = vpack.c.b16 %v4104, %v4104
    %v4361 = vpack.c.b16 %v4105, %v4105
    %v4362 = vpack.c.b16 %v4106, %v4106
    %v4363 = vpack.c.b16 %v4107, %v4107
    %v4364 = vpack.c.b16 %v4108, %v4108
    %v4365 = vpack.c.b16 %v4109, %v4109
    %v4366 = vpack.c.b16 %v4110, %v4110
    %v4367 = vpack.c.b16 %v4111, %v4111
    %v4368 = vpack.c.b16 %v4112, %v4112
    %v4369 = vpack.c.b16 %v4113, %v4113
    %v4370 = vpack.c.b16 %v4114, %v4114
    %v4371 = vpack.c.b16 %v4115, %v4115
    %v4372 = vpack.c.b16 %v4116, %v4116
    %v4373 = vpack.c.b16 %v4117, %v4117
    %v4374 = vpack.c.b16 %v4118, %v4118
    %v4375 = vpack.c.b16 %v4119, %v4119
    %v4376 = vpack.c.b16 %v4120, %v4120
    %v4377 = vpack.c.b16 %v4121, %v4121
    %v4378 = vpack.c.b16 %v4122, %v4122
    %v4379 = vpack.c.b16 %v4123, %v4123
    %v4380 = vpack.c.b16 %v4124, %v4124
    %v4381 = vpack.c.b16 %v4125, %v4125
    %v4382 = vpack.c.b16 %v4126, %v4126
    %v4383 = vpack.c.b16 %v4127, %v4127
    %v4384 = vpack.c.b16 %v4128, %v4128
    %v4385 = vpack.c.b16 %v4129, %v4129
    %v4386 = vpack.c.b16 %v4130, %v4130
    %v4387 = vpack.c.b16 %v4131, %v4131
    %v4388 = vpack.c.b16 %v4132, %v4132
    %v4389 = vpack.c.b16 %v4133, %v4133
    %v4390 = vpack.c.b16 %v4134, %v4134
    %v4391 = vpack.c.b16 %v4135, %v4135
    %v4392 = vpack.c.b16 %v4136, %v4136
    %v4393 = vpack.c.b16 %v4137, %v4137
    %v4394 = vpack.c.b16 %v4138, %v4138
    %v4395 = vpack.c.b16 %v4139, %v4139
    %v4396 = vpack.c.b16 %v4140, %v4140
    %v4397 = vpack.c.b16 %v4141, %v4141
    %v4398 = vpack.c.b16 %v4142, %v4142
    %v4399 = vpack.c.b16 %v4143, %v4143
    %v4400 = vpack.c.b16 %v4144, %v4144
    %v4401 = vpack.c.b16 %v4145, %v4145
    %v4402 = vpack.c.b16 %v4146, %v4146
    %v4403 = vpack.c.b16 %v4147, %v4147
    %v4404 = vpack.c.b16 %v4148, %v4148
    %v4405 = vpack.c.b16 %v4149, %v4149
    %v4406 = vpack.c.b16 %v4150, %v4150
    %v4407 = vpack.c.b16 %v4151, %v4151
    %v4408 = vpack.c.b16 %v4152, %v4152
    %v4409 = vpack.c.b16 %v4153, %v4153
    %v4410 = vpack.c.b16 %v4154, %v4154
    %v4411 = vpack.c.b16 %v4155, %v4155
    %v4412 = vpack.c.b16 %v4156, %v4156
    %v4413 = vpack.c.b16 %v4157, %v4157
    %v4414 = vpack.c.b16 %v4158, %v4158
    %v4415 = vpack.c.b16 %v4159, %v4159
    %v4416 = vpack.c.b16 %v4160, %v4160
    %v4417 = vpack.c.b16 %v4161, %v4161
    %v4418 = vpack.c.b16 %v4162, %v4162
    %v4419 = vpack.c.b16 %v4163, %v4163
    %v4420 = vpack.c.b16 %v4164, %v4164
    %v4421 = vpack.c.b16 %v4165, %v4165
    %v4422 = vpack.c.b16 %v4166, %v4166
    %v4423 = vpack.c.b16 %v4167, %v4167
    %v4424 = vpack.c.b16 %v4168, %v4168
    %v4425 = vpack.c.b16 %v4169, %v4169
    %v4426 = vpack.c.b16 %v4170, %v4170
    %v4427 = vpack.c.b16 %v4171, %v4171
    %v4428 = vpack.c.b16 %v4172, %v4172
    %v4429 = vpack.c.b16 %v4173, %v4173
    %v4430 = vpack.c.b16 %v4174, %v4174
    %v4431 = vpack.c.b16 %v4175, %v4175
    %v4432 = vpack.c.b16 %v4176, %v4176
    %v4433 = vpack.c.b16 %v4177, %v4177
    %v4434 = vpack.c.b16 %v4178, %v4178
    %v4435 = vpack.c.b16 %v4179, %v4179
    %v4436 = vpack.c.b16 %v4180, %v4180
    %v4437 = vpack.c.b16 %v4181, %v4181
    %v4438 = vpack.c.b16 %v4182, %v4182
    %vm4695 = vcmask 125952
    %4696 = vst.msk [vmem:[%s2] sm:$0xf] %vm4695, %v4183
    %4697 = vst.msk [vmem:[%s2 + $0x4] sm:$0xf] %vm4695, %v4184
    %4698 = vst.msk [vmem:[%s2 + $0x8] sm:$0xf] %vm4695, %v4185
    %4699 = vst.msk [vmem:[%s2 + $0xc] sm:$0xf] %vm4695, %v4186
    %4700 = vst.msk [vmem:[%s2 + $0x10] sm:$0xf] %vm4695, %v4187
    %4701 = vst.msk [vmem:[%s2 + $0x14] sm:$0xf] %vm4695, %v4188
    %4702 = vst.msk [vmem:[%s2 + $0x18] sm:$0xf] %vm4695, %v4189
    %4703 = vst.msk [vmem:[%s2 + $0x1c] sm:$0xf] %vm4695, %v4190
    %4704 = vst.msk [vmem:[%s2 + $0x20] sm:$0xf] %vm4695, %v4191
    %4705 = vst.msk [vmem:[%s2 + $0x24] sm:$0xf] %vm4695, %v4192
    %4706 = vst.msk [vmem:[%s2 + $0x28] sm:$0xf] %vm4695, %v4193
    %4707 = vst.msk [vmem:[%s2 + $0x2c] sm:$0xf] %vm4695, %v4194
    %4708 = vst.msk [vmem:[%s2 + $0x30] sm:$0xf] %vm4695, %v4195
    %4709 = vst.msk [vmem:[%s2 + $0x34] sm:$0xf] %vm4695, %v4196
    %4710 = vst.msk [vmem:[%s2 + $0x38] sm:$0xf] %vm4695, %v4197
    %4711 = vst.msk [vmem:[%s2 + $0x3c] sm:$0xf] %vm4695, %v4198
    %4712 = vst.msk [vmem:[%s2 + $0x40] sm:$0xf] %vm4695, %v4199
    %4713 = vst.msk [vmem:[%s2 + $0x44] sm:$0xf] %vm4695, %v4200
    %4714 = vst.msk [vmem:[%s2 + $0x48] sm:$0xf] %vm4695, %v4201
    %4715 = vst.msk [vmem:[%s2 + $0x4c] sm:$0xf] %vm4695, %v4202
    %4716 = vst.msk [vmem:[%s2 + $0x50] sm:$0xf] %vm4695, %v4203
    %4717 = vst.msk [vmem:[%s2 + $0x54] sm:$0xf] %vm4695, %v4204
    %4718 = vst.msk [vmem:[%s2 + $0x58] sm:$0xf] %vm4695, %v4205
    %4719 = vst.msk [vmem:[%s2 + $0x5c] sm:$0xf] %vm4695, %v4206
    %4720 = vst.msk [vmem:[%s2 + $0x60] sm:$0xf] %vm4695, %v4207
    %4721 = vst.msk [vmem:[%s2 + $0x64] sm:$0xf] %vm4695, %v4208
    %4722 = vst.msk [vmem:[%s2 + $0x68] sm:$0xf] %vm4695, %v4209
    %4723 = vst.msk [vmem:[%s2 + $0x6c] sm:$0xf] %vm4695, %v4210
    %4724 = vst.msk [vmem:[%s2 + $0x70] sm:$0xf] %vm4695, %v4211
    %4725 = vst.msk [vmem:[%s2 + $0x74] sm:$0xf] %vm4695, %v4212
    %4726 = vst.msk [vmem:[%s2 + $0x78] sm:$0xf] %vm4695, %v4213
    %4727 = vst.msk [vmem:[%s2 + $0x7c] sm:$0xf] %vm4695, %v4214
    %4728 = vst.msk [vmem:[%s2 + $0x80] sm:$0xf] %vm4695, %v4215
    %4729 = vst.msk [vmem:[%s2 + $0x84] sm:$0xf] %vm4695, %v4216
    %4730 = vst.msk [vmem:[%s2 + $0x88] sm:$0xf] %vm4695, %v4217
    %4731 = vst.msk [vmem:[%s2 + $0x8c] sm:$0xf] %vm4695, %v4218
    %4732 = vst.msk [vmem:[%s2 + $0x90] sm:$0xf] %vm4695, %v4219
    %4733 = vst.msk [vmem:[%s2 + $0x94] sm:$0xf] %vm4695, %v4220
    %4734 = vst.msk [vmem:[%s2 + $0x98] sm:$0xf] %vm4695, %v4221
    %4735 = vst.msk [vmem:[%s2 + $0x9c] sm:$0xf] %vm4695, %v4222
    %4736 = vst.msk [vmem:[%s2 + $0xa0] sm:$0xf] %vm4695, %v4223
    %4737 = vst.msk [vmem:[%s2 + $0xa4] sm:$0xf] %vm4695, %v4224
    %4738 = vst.msk [vmem:[%s2 + $0xa8] sm:$0xf] %vm4695, %v4225
    %4739 = vst.msk [vmem:[%s2 + $0xac] sm:$0xf] %vm4695, %v4226
    %4740 = vst.msk [vmem:[%s2 + $0xb0] sm:$0xf] %vm4695, %v4227
    %4741 = vst.msk [vmem:[%s2 + $0xb4] sm:$0xf] %vm4695, %v4228
    %4742 = vst.msk [vmem:[%s2 + $0xb8] sm:$0xf] %vm4695, %v4229
    %4743 = vst.msk [vmem:[%s2 + $0xbc] sm:$0xf] %vm4695, %v4230
    %4744 = vst.msk [vmem:[%s2 + $0xc0] sm:$0xf] %vm4695, %v4231
    %4745 = vst.msk [vmem:[%s2 + $0xc4] sm:$0xf] %vm4695, %v4232
    %4746 = vst.msk [vmem:[%s2 + $0xc8] sm:$0xf] %vm4695, %v4233
    %4747 = vst.msk [vmem:[%s2 + $0xcc] sm:$0xf] %vm4695, %v4234
    %4748 = vst.msk [vmem:[%s2 + $0xd0] sm:$0xf] %vm4695, %v4235
    %4749 = vst.msk [vmem:[%s2 + $0xd4] sm:$0xf] %vm4695, %v4236
    %4750 = vst.msk [vmem:[%s2 + $0xd8] sm:$0xf] %vm4695, %v4237
    %4751 = vst.msk [vmem:[%s2 + $0xdc] sm:$0xf] %vm4695, %v4238
    %4752 = vst.msk [vmem:[%s2 + $0xe0] sm:$0xf] %vm4695, %v4239
    %4753 = vst.msk [vmem:[%s2 + $0xe4] sm:$0xf] %vm4695, %v4240
    %4754 = vst.msk [vmem:[%s2 + $0xe8] sm:$0xf] %vm4695, %v4241
    %4755 = vst.msk [vmem:[%s2 + $0xec] sm:$0xf] %vm4695, %v4242
    %4756 = vst.msk [vmem:[%s2 + $0xf0] sm:$0xf] %vm4695, %v4243
    %4757 = vst.msk [vmem:[%s2 + $0xf4] sm:$0xf] %vm4695, %v4244
    %4758 = vst.msk [vmem:[%s2 + $0xf8] sm:$0xf] %vm4695, %v4245
    %4759 = vst.msk [vmem:[%s2 + $0xfc] sm:$0xf] %vm4695, %v4246
    %4760 = vst.msk [vmem:[%s2 + $0x100] sm:$0xf] %vm4695, %v4247
    %4761 = vst.msk [vmem:[%s2 + $0x104] sm:$0xf] %vm4695, %v4248
    %4762 = vst.msk [vmem:[%s2 + $0x108] sm:$0xf] %vm4695, %v4249
    %4763 = vst.msk [vmem:[%s2 + $0x10c] sm:$0xf] %vm4695, %v4250
    %4764 = vst.msk [vmem:[%s2 + $0x110] sm:$0xf] %vm4695, %v4251
    %4765 = vst.msk [vmem:[%s2 + $0x114] sm:$0xf] %vm4695, %v4252
    %4766 = vst.msk [vmem:[%s2 + $0x118] sm:$0xf] %vm4695, %v4253
    %4767 = vst.msk [vmem:[%s2 + $0x11c] sm:$0xf] %vm4695, %v4254
    %4768 = vst.msk [vmem:[%s2 + $0x120] sm:$0xf] %vm4695, %v4255
    %4769 = vst.msk [vmem:[%s2 + $0x124] sm:$0xf] %vm4695, %v4256
    %4770 = vst.msk [vmem:[%s2 + $0x128] sm:$0xf] %vm4695, %v4257
    %4771 = vst.msk [vmem:[%s2 + $0x12c] sm:$0xf] %vm4695, %v4258
    %4772 = vst.msk [vmem:[%s2 + $0x130] sm:$0xf] %vm4695, %v4259
    %4773 = vst.msk [vmem:[%s2 + $0x134] sm:$0xf] %vm4695, %v4260
    %4774 = vst.msk [vmem:[%s2 + $0x138] sm:$0xf] %vm4695, %v4261
    %4775 = vst.msk [vmem:[%s2 + $0x13c] sm:$0xf] %vm4695, %v4262
    %4776 = vst.msk [vmem:[%s2 + $0x140] sm:$0xf] %vm4695, %v4263
    %4777 = vst.msk [vmem:[%s2 + $0x144] sm:$0xf] %vm4695, %v4264
    %4778 = vst.msk [vmem:[%s2 + $0x148] sm:$0xf] %vm4695, %v4265
    %4779 = vst.msk [vmem:[%s2 + $0x14c] sm:$0xf] %vm4695, %v4266
    %4780 = vst.msk [vmem:[%s2 + $0x150] sm:$0xf] %vm4695, %v4267
    %4781 = vst.msk [vmem:[%s2 + $0x154] sm:$0xf] %vm4695, %v4268
    %4782 = vst.msk [vmem:[%s2 + $0x158] sm:$0xf] %vm4695, %v4269
    %4783 = vst.msk [vmem:[%s2 + $0x15c] sm:$0xf] %vm4695, %v4270
    %4784 = vst.msk [vmem:[%s2 + $0x160] sm:$0xf] %vm4695, %v4271
    %4785 = vst.msk [vmem:[%s2 + $0x164] sm:$0xf] %vm4695, %v4272
    %4786 = vst.msk [vmem:[%s2 + $0x168] sm:$0xf] %vm4695, %v4273
    %4787 = vst.msk [vmem:[%s2 + $0x16c] sm:$0xf] %vm4695, %v4274
    %4788 = vst.msk [vmem:[%s2 + $0x170] sm:$0xf] %vm4695, %v4275
    %4789 = vst.msk [vmem:[%s2 + $0x174] sm:$0xf] %vm4695, %v4276
    %4790 = vst.msk [vmem:[%s2 + $0x178] sm:$0xf] %vm4695, %v4277
    %4791 = vst.msk [vmem:[%s2 + $0x17c] sm:$0xf] %vm4695, %v4278
    %4792 = vst.msk [vmem:[%s2 + $0x180] sm:$0xf] %vm4695, %v4279
    %4793 = vst.msk [vmem:[%s2 + $0x184] sm:$0xf] %vm4695, %v4280
    %4794 = vst.msk [vmem:[%s2 + $0x188] sm:$0xf] %vm4695, %v4281
    %4795 = vst.msk [vmem:[%s2 + $0x18c] sm:$0xf] %vm4695, %v4282
    %4796 = vst.msk [vmem:[%s2 + $0x190] sm:$0xf] %vm4695, %v4283
    %4797 = vst.msk [vmem:[%s2 + $0x194] sm:$0xf] %vm4695, %v4284
    %4798 = vst.msk [vmem:[%s2 + $0x198] sm:$0xf] %vm4695, %v4285
    %4799 = vst.msk [vmem:[%s2 + $0x19c] sm:$0xf] %vm4695, %v4286
    %4800 = vst.msk [vmem:[%s2 + $0x1a0] sm:$0xf] %vm4695, %v4287
    %4801 = vst.msk [vmem:[%s2 + $0x1a4] sm:$0xf] %vm4695, %v4288
    %4802 = vst.msk [vmem:[%s2 + $0x1a8] sm:$0xf] %vm4695, %v4289
    %4803 = vst.msk [vmem:[%s2 + $0x1ac] sm:$0xf] %vm4695, %v4290
    %4804 = vst.msk [vmem:[%s2 + $0x1b0] sm:$0xf] %vm4695, %v4291
    %4805 = vst.msk [vmem:[%s2 + $0x1b4] sm:$0xf] %vm4695, %v4292
    %4806 = vst.msk [vmem:[%s2 + $0x1b8] sm:$0xf] %vm4695, %v4293
    %4807 = vst.msk [vmem:[%s2 + $0x1bc] sm:$0xf] %vm4695, %v4294
    %4808 = vst.msk [vmem:[%s2 + $0x1c0] sm:$0xf] %vm4695, %v4295
    %4809 = vst.msk [vmem:[%s2 + $0x1c4] sm:$0xf] %vm4695, %v4296
    %4810 = vst.msk [vmem:[%s2 + $0x1c8] sm:$0xf] %vm4695, %v4297
    %4811 = vst.msk [vmem:[%s2 + $0x1cc] sm:$0xf] %vm4695, %v4298
    %4812 = vst.msk [vmem:[%s2 + $0x1d0] sm:$0xf] %vm4695, %v4299
    %4813 = vst.msk [vmem:[%s2 + $0x1d4] sm:$0xf] %vm4695, %v4300
    %4814 = vst.msk [vmem:[%s2 + $0x1d8] sm:$0xf] %vm4695, %v4301
    %4815 = vst.msk [vmem:[%s2 + $0x1dc] sm:$0xf] %vm4695, %v4302
    %4816 = vst.msk [vmem:[%s2 + $0x1e0] sm:$0xf] %vm4695, %v4303
    %4817 = vst.msk [vmem:[%s2 + $0x1e4] sm:$0xf] %vm4695, %v4304
    %4818 = vst.msk [vmem:[%s2 + $0x1e8] sm:$0xf] %vm4695, %v4305
    %4819 = vst.msk [vmem:[%s2 + $0x1ec] sm:$0xf] %vm4695, %v4306
    %4820 = vst.msk [vmem:[%s2 + $0x1f0] sm:$0xf] %vm4695, %v4307
    %4821 = vst.msk [vmem:[%s2 + $0x1f4] sm:$0xf] %vm4695, %v4308
    %4822 = vst.msk [vmem:[%s2 + $0x1f8] sm:$0xf] %vm4695, %v4309
    %4823 = vst.msk [vmem:[%s2 + $0x1fc] sm:$0xf] %vm4695, %v4310
    %4824 = vst.msk [vmem:[%s2 + $0x200] sm:$0xf] %vm4695, %v4311
    %4825 = vst.msk [vmem:[%s2 + $0x204] sm:$0xf] %vm4695, %v4312
    %4826 = vst.msk [vmem:[%s2 + $0x208] sm:$0xf] %vm4695, %v4313
    %4827 = vst.msk [vmem:[%s2 + $0x20c] sm:$0xf] %vm4695, %v4314
    %4828 = vst.msk [vmem:[%s2 + $0x210] sm:$0xf] %vm4695, %v4315
    %4829 = vst.msk [vmem:[%s2 + $0x214] sm:$0xf] %vm4695, %v4316
    %4830 = vst.msk [vmem:[%s2 + $0x218] sm:$0xf] %vm4695, %v4317
    %4831 = vst.msk [vmem:[%s2 + $0x21c] sm:$0xf] %vm4695, %v4318
    %4832 = vst.msk [vmem:[%s2 + $0x220] sm:$0xf] %vm4695, %v4319
    %4833 = vst.msk [vmem:[%s2 + $0x224] sm:$0xf] %vm4695, %v4320
    %4834 = vst.msk [vmem:[%s2 + $0x228] sm:$0xf] %vm4695, %v4321
    %4835 = vst.msk [vmem:[%s2 + $0x22c] sm:$0xf] %vm4695, %v4322
    %4836 = vst.msk [vmem:[%s2 + $0x230] sm:$0xf] %vm4695, %v4323
    %4837 = vst.msk [vmem:[%s2 + $0x234] sm:$0xf] %vm4695, %v4324
    %4838 = vst.msk [vmem:[%s2 + $0x238] sm:$0xf] %vm4695, %v4325
    %4839 = vst.msk [vmem:[%s2 + $0x23c] sm:$0xf] %vm4695, %v4326
    %4840 = vst.msk [vmem:[%s2 + $0x240] sm:$0xf] %vm4695, %v4327
    %4841 = vst.msk [vmem:[%s2 + $0x244] sm:$0xf] %vm4695, %v4328
    %4842 = vst.msk [vmem:[%s2 + $0x248] sm:$0xf] %vm4695, %v4329
    %4843 = vst.msk [vmem:[%s2 + $0x24c] sm:$0xf] %vm4695, %v4330
    %4844 = vst.msk [vmem:[%s2 + $0x250] sm:$0xf] %vm4695, %v4331
    %4845 = vst.msk [vmem:[%s2 + $0x254] sm:$0xf] %vm4695, %v4332
    %4846 = vst.msk [vmem:[%s2 + $0x258] sm:$0xf] %vm4695, %v4333
    %4847 = vst.msk [vmem:[%s2 + $0x25c] sm:$0xf] %vm4695, %v4334
    %4848 = vst.msk [vmem:[%s2 + $0x260] sm:$0xf] %vm4695, %v4335
    %4849 = vst.msk [vmem:[%s2 + $0x264] sm:$0xf] %vm4695, %v4336
    %4850 = vst.msk [vmem:[%s2 + $0x268] sm:$0xf] %vm4695, %v4337
    %4851 = vst.msk [vmem:[%s2 + $0x26c] sm:$0xf] %vm4695, %v4338
    %4852 = vst.msk [vmem:[%s2 + $0x270] sm:$0xf] %vm4695, %v4339
    %4853 = vst.msk [vmem:[%s2 + $0x274] sm:$0xf] %vm4695, %v4340
    %4854 = vst.msk [vmem:[%s2 + $0x278] sm:$0xf] %vm4695, %v4341
    %4855 = vst.msk [vmem:[%s2 + $0x27c] sm:$0xf] %vm4695, %v4342
    %4856 = vst.msk [vmem:[%s2 + $0x280] sm:$0xf] %vm4695, %v4343
    %4857 = vst.msk [vmem:[%s2 + $0x284] sm:$0xf] %vm4695, %v4344
    %4858 = vst.msk [vmem:[%s2 + $0x288] sm:$0xf] %vm4695, %v4345
    %4859 = vst.msk [vmem:[%s2 + $0x28c] sm:$0xf] %vm4695, %v4346
    %4860 = vst.msk [vmem:[%s2 + $0x290] sm:$0xf] %vm4695, %v4347
    %4861 = vst.msk [vmem:[%s2 + $0x294] sm:$0xf] %vm4695, %v4348
    %4862 = vst.msk [vmem:[%s2 + $0x298] sm:$0xf] %vm4695, %v4349
    %4863 = vst.msk [vmem:[%s2 + $0x29c] sm:$0xf] %vm4695, %v4350
    %4864 = vst.msk [vmem:[%s2 + $0x2a0] sm:$0xf] %vm4695, %v4351
    %4865 = vst.msk [vmem:[%s2 + $0x2a4] sm:$0xf] %vm4695, %v4352
    %4866 = vst.msk [vmem:[%s2 + $0x2a8] sm:$0xf] %vm4695, %v4353
    %4867 = vst.msk [vmem:[%s2 + $0x2ac] sm:$0xf] %vm4695, %v4354
    %4868 = vst.msk [vmem:[%s2 + $0x2b0] sm:$0xf] %vm4695, %v4355
    %4869 = vst.msk [vmem:[%s2 + $0x2b4] sm:$0xf] %vm4695, %v4356
    %4870 = vst.msk [vmem:[%s2 + $0x2b8] sm:$0xf] %vm4695, %v4357
    %4871 = vst.msk [vmem:[%s2 + $0x2bc] sm:$0xf] %vm4695, %v4358
    %4872 = vst.msk [vmem:[%s2 + $0x2c0] sm:$0xf] %vm4695, %v4359
    %4873 = vst.msk [vmem:[%s2 + $0x2c4] sm:$0xf] %vm4695, %v4360
    %4874 = vst.msk [vmem:[%s2 + $0x2c8] sm:$0xf] %vm4695, %v4361
    %4875 = vst.msk [vmem:[%s2 + $0x2cc] sm:$0xf] %vm4695, %v4362
    %4876 = vst.msk [vmem:[%s2 + $0x2d0] sm:$0xf] %vm4695, %v4363
    %4877 = vst.msk [vmem:[%s2 + $0x2d4] sm:$0xf] %vm4695, %v4364
    %4878 = vst.msk [vmem:[%s2 + $0x2d8] sm:$0xf] %vm4695, %v4365
    %4879 = vst.msk [vmem:[%s2 + $0x2dc] sm:$0xf] %vm4695, %v4366
    %4880 = vst.msk [vmem:[%s2 + $0x2e0] sm:$0xf] %vm4695, %v4367
    %4881 = vst.msk [vmem:[%s2 + $0x2e4] sm:$0xf] %vm4695, %v4368
    %4882 = vst.msk [vmem:[%s2 + $0x2e8] sm:$0xf] %vm4695, %v4369
    %4883 = vst.msk [vmem:[%s2 + $0x2ec] sm:$0xf] %vm4695, %v4370
    %4884 = vst.msk [vmem:[%s2 + $0x2f0] sm:$0xf] %vm4695, %v4371
    %4885 = vst.msk [vmem:[%s2 + $0x2f4] sm:$0xf] %vm4695, %v4372
    %4886 = vst.msk [vmem:[%s2 + $0x2f8] sm:$0xf] %vm4695, %v4373
    %4887 = vst.msk [vmem:[%s2 + $0x2fc] sm:$0xf] %vm4695, %v4374
    %4888 = vst.msk [vmem:[%s2 + $0x300] sm:$0xf] %vm4695, %v4375
    %4889 = vst.msk [vmem:[%s2 + $0x304] sm:$0xf] %vm4695, %v4376
    %4890 = vst.msk [vmem:[%s2 + $0x308] sm:$0xf] %vm4695, %v4377
    %4891 = vst.msk [vmem:[%s2 + $0x30c] sm:$0xf] %vm4695, %v4378
    %4892 = vst.msk [vmem:[%s2 + $0x310] sm:$0xf] %vm4695, %v4379
    %4893 = vst.msk [vmem:[%s2 + $0x314] sm:$0xf] %vm4695, %v4380
    %4894 = vst.msk [vmem:[%s2 + $0x318] sm:$0xf] %vm4695, %v4381
    %4895 = vst.msk [vmem:[%s2 + $0x31c] sm:$0xf] %vm4695, %v4382
    %4896 = vst.msk [vmem:[%s2 + $0x320] sm:$0xf] %vm4695, %v4383
    %4897 = vst.msk [vmem:[%s2 + $0x324] sm:$0xf] %vm4695, %v4384
    %4898 = vst.msk [vmem:[%s2 + $0x328] sm:$0xf] %vm4695, %v4385
    %4899 = vst.msk [vmem:[%s2 + $0x32c] sm:$0xf] %vm4695, %v4386
    %4900 = vst.msk [vmem:[%s2 + $0x330] sm:$0xf] %vm4695, %v4387
    %4901 = vst.msk [vmem:[%s2 + $0x334] sm:$0xf] %vm4695, %v4388
    %4902 = vst.msk [vmem:[%s2 + $0x338] sm:$0xf] %vm4695, %v4389
    %4903 = vst.msk [vmem:[%s2 + $0x33c] sm:$0xf] %vm4695, %v4390
    %4904 = vst.msk [vmem:[%s2 + $0x340] sm:$0xf] %vm4695, %v4391
    %4905 = vst.msk [vmem:[%s2 + $0x344] sm:$0xf] %vm4695, %v4392
    %4906 = vst.msk [vmem:[%s2 + $0x348] sm:$0xf] %vm4695, %v4393
    %4907 = vst.msk [vmem:[%s2 + $0x34c] sm:$0xf] %vm4695, %v4394
    %4908 = vst.msk [vmem:[%s2 + $0x350] sm:$0xf] %vm4695, %v4395
    %4909 = vst.msk [vmem:[%s2 + $0x354] sm:$0xf] %vm4695, %v4396
    %4910 = vst.msk [vmem:[%s2 + $0x358] sm:$0xf] %vm4695, %v4397
    %4911 = vst.msk [vmem:[%s2 + $0x35c] sm:$0xf] %vm4695, %v4398
    %4912 = vst.msk [vmem:[%s2 + $0x360] sm:$0xf] %vm4695, %v4399
    %4913 = vst.msk [vmem:[%s2 + $0x364] sm:$0xf] %vm4695, %v4400
    %4914 = vst.msk [vmem:[%s2 + $0x368] sm:$0xf] %vm4695, %v4401
    %4915 = vst.msk [vmem:[%s2 + $0x36c] sm:$0xf] %vm4695, %v4402
    %4916 = vst.msk [vmem:[%s2 + $0x370] sm:$0xf] %vm4695, %v4403
    %4917 = vst.msk [vmem:[%s2 + $0x374] sm:$0xf] %vm4695, %v4404
    %4918 = vst.msk [vmem:[%s2 + $0x378] sm:$0xf] %vm4695, %v4405
    %4919 = vst.msk [vmem:[%s2 + $0x37c] sm:$0xf] %vm4695, %v4406
    %4920 = vst.msk [vmem:[%s2 + $0x380] sm:$0xf] %vm4695, %v4407
    %4921 = vst.msk [vmem:[%s2 + $0x384] sm:$0xf] %vm4695, %v4408
    %4922 = vst.msk [vmem:[%s2 + $0x388] sm:$0xf] %vm4695, %v4409
    %4923 = vst.msk [vmem:[%s2 + $0x38c] sm:$0xf] %vm4695, %v4410
    %4924 = vst.msk [vmem:[%s2 + $0x390] sm:$0xf] %vm4695, %v4411
    %4925 = vst.msk [vmem:[%s2 + $0x394] sm:$0xf] %vm4695, %v4412
    %4926 = vst.msk [vmem:[%s2 + $0x398] sm:$0xf] %vm4695, %v4413
    %4927 = vst.msk [vmem:[%s2 + $0x39c] sm:$0xf] %vm4695, %v4414
    %4928 = vst.msk [vmem:[%s2 + $0x3a0] sm:$0xf] %vm4695, %v4415
    %4929 = vst.msk [vmem:[%s2 + $0x3a4] sm:$0xf] %vm4695, %v4416
    %4930 = vst.msk [vmem:[%s2 + $0x3a8] sm:$0xf] %vm4695, %v4417
    %4931 = vst.msk [vmem:[%s2 + $0x3ac] sm:$0xf] %vm4695, %v4418
    %4932 = vst.msk [vmem:[%s2 + $0x3b0] sm:$0xf] %vm4695, %v4419
    %4933 = vst.msk [vmem:[%s2 + $0x3b4] sm:$0xf] %vm4695, %v4420
    %4934 = vst.msk [vmem:[%s2 + $0x3b8] sm:$0xf] %vm4695, %v4421
    %4935 = vst.msk [vmem:[%s2 + $0x3bc] sm:$0xf] %vm4695, %v4422
    %4936 = vst.msk [vmem:[%s2 + $0x3c0] sm:$0xf] %vm4695, %v4423
    %4937 = vst.msk [vmem:[%s2 + $0x3c4] sm:$0xf] %vm4695, %v4424
    %4938 = vst.msk [vmem:[%s2 + $0x3c8] sm:$0xf] %vm4695, %v4425
    %4939 = vst.msk [vmem:[%s2 + $0x3cc] sm:$0xf] %vm4695, %v4426
    %4940 = vst.msk [vmem:[%s2 + $0x3d0] sm:$0xf] %vm4695, %v4427
    %4941 = vst.msk [vmem:[%s2 + $0x3d4] sm:$0xf] %vm4695, %v4428
    %4942 = vst.msk [vmem:[%s2 + $0x3d8] sm:$0xf] %vm4695, %v4429
    %4943 = vst.msk [vmem:[%s2 + $0x3dc] sm:$0xf] %vm4695, %v4430
    %4944 = vst.msk [vmem:[%s2 + $0x3e0] sm:$0xf] %vm4695, %v4431
    %4945 = vst.msk [vmem:[%s2 + $0x3e4] sm:$0xf] %vm4695, %v4432
    %4946 = vst.msk [vmem:[%s2 + $0x3e8] sm:$0xf] %vm4695, %v4433
    %4947 = vst.msk [vmem:[%s2 + $0x3ec] sm:$0xf] %vm4695, %v4434
    %4948 = vst.msk [vmem:[%s2 + $0x3f0] sm:$0xf] %vm4695, %v4435
    %4949 = vst.msk [vmem:[%s2 + $0x3f4] sm:$0xf] %vm4695, %v4436
    %4950 = vst.msk [vmem:[%s2 + $0x3f8] sm:$0xf] %vm4695, %v4437
    %4951 = vst.msk [vmem:[%s2 + $0x3fc] sm:$0xf] %vm4695, %v4438
    // Predicated region
    $region10: #{tpu_custom_call.1} parent=1 // pred_check
      _
    $region11: #{tpu_custom_call.1} parent=1 // pred_check_branch
      %4953 = sbr.rel (0) target = $region13
    $region12: #{tpu_custom_call.1} parent=1 // pred_region
      _
    $region13: #{tpu_custom_call.1} parent=1 // pred_fallthru
      _
    // Predicated region
    $region14: #{tpu_custom_call.1} parent=1 // pred_check
      _
    $region15: #{tpu_custom_call.1} parent=1 // pred_check_branch
      %4955 = sbr.rel (0) target = $region17
    $region16: #{tpu_custom_call.1} parent=1 // pred_region
      %s4957 = ssub.s32 16, 16
      %4958 = vsyncadd [#allocation3], %s4957
      %s4960 = sshll.u32 [#allocation2], 4
      %s4961 = int_to_ptr.vmem [resolvable:$true] %s4960
      %4963 = dma.vmem_to_hbm [thread:$0]  %s4961, 16, %s3, [#allocation3]
    $region17: #{tpu_custom_call.1} parent=1 // pred_fallthru
      _
    // Predicated region
    $region18: #{tpu_custom_call.1} parent=1 // pred_check
      _
    $region19: #{tpu_custom_call.1} parent=1 // pred_check_branch
      %4965 = sbr.rel (0) target = $region21
    $region20: #{tpu_custom_call.1} parent=1 // pred_region
      %s4967 = ssub.s32 16, 16
      %4968 = vsyncadd [#allocation5], %s4967
      %s4970 = sshll.u32 [#allocation4], 4
      %s4971 = int_to_ptr.vmem [resolvable:$true] %s4970
      %4973 = dma.vmem_to_hbm [thread:$0]  %s4971, 16, %s4, [#allocation5]
    $region21: #{tpu_custom_call.1} parent=1 // pred_fallthru
      _
    // Predicated region
    $region22: #{tpu_custom_call.1} parent=1 // pred_check
      _
    $region23: #{tpu_custom_call.1} parent=1 // pred_check_branch
      %4975 = sbr.rel (0) target = $region25
    $region24: #{tpu_custom_call.1} parent=1 // pred_region
      _
    $region25: #{tpu_custom_call.1} parent=1 // pred_fallthru
      _
    // Predicated region
    $region26: #{tpu_custom_call.1} parent=1 // pred_check
      _
    $region27: #{tpu_custom_call.1} parent=1 // pred_check_branch
      %4977 = sbr.rel (0) target = $region29
    $region28: #{tpu_custom_call.1} parent=1 // pred_region
      %4978 = dma.done [#allocation3], 16
    $region29: #{tpu_custom_call.1} parent=1 // pred_fallthru
      _
    // Predicated region
    $region30: #{tpu_custom_call.1} parent=1 // pred_check
      _
    $region31: #{tpu_custom_call.1} parent=1 // pred_check_branch
      %4980 = sbr.rel (0) target = $region33
    $region32: #{tpu_custom_call.1} parent=1 // pred_region
      %4981 = dma.done [#allocation5], 16
    $region33: #{tpu_custom_call.1} parent=1 // pred_fallthru
      _
    %4982 = vsyncpa [#allocation3], 1
    %4983 = vsyncpa [#allocation5], 1

</llo_original>
